<compile_context>
chip_gen: v6e
topology: v6e:2x2x1
jax: 0.10.0
libtpu: 0.0.40
codegen_flags: <defaults>
</compile_context>

<pallas_src>
import functools
import math

import jax
import jax.numpy as jnp
import numpy as np
from jax.experimental import pallas as pl
from jax.experimental.pallas import tpu as pltpu


# ------------------------------ Pallas kernel -------------------------------

def _feature_fuse_kernel(x_ref, s_ref, wq_ref, wkv_ref, wm_ref, w1_ref, w2_ref,
                         b_ref, out_ref, *, num_heads, eps, matmul_dtype,
                         residual):
    B, N, F = x_ref.shape
    M = s_ref.shape[1]
    H = num_heads
    D = F // H
    md = matmul_dtype
    f32 = jnp.float32

    # Batch folded into the rows: every dense matmul runs on (B*N, .) / (B*M, .).
    x = x_ref[...].reshape(B * N, F)                       # (BN, F) f32
    s = s_ref[...].reshape(B * M, F)                       # (BM, F) f32
    xm = x.astype(md)
    sm = s.astype(md)

    b_all = b_ref[...]                                     # (8, 2F) f32
    bq, bm, b2 = b_all[0:1, :F], b_all[1:2, :F], b_all[2:3, :F]
    b1, bkv = b_all[3:4, :], b_all[4:5, :]

    # Projections: weight-stationary matmuls, weights pre-transposed to (in, out).
    # 1/sqrt(D) is folded into wq/bq; K and V are fused into one 2F-wide output
    # (fills the 256-wide v6e/v7x MXU) and split at the free 128-lane boundary.
    q = jnp.dot(xm, wq_ref[...], preferred_element_type=f32) + bq      # (BN, F)
    kv = jnp.dot(sm, wkv_ref[...], preferred_element_type=f32) + bkv   # (BM, 2F)
    k, v = kv[:, :F], kv[:, F:]

    # Head split: one reshape + swapaxes per tensor (head-major lanes -> B*H batch).
    def heads(t, L):
        t = t.reshape(B, L, H, D)
        return jnp.swapaxes(t, 1, 2).reshape(B * H, L, D).astype(md)

    qh, kh, vh = heads(q, N), heads(k, M), heads(v, M)

    # All heads / batches in one batched MXU contraction; softmax stays in f32.
    # TODO(synk): (B*H, N, M) scores are lane-sparse at tiny M and become the VMEM
    # hazard at production N*M (v7x has only 64 MiB) — tile over M with an online
    # softmax accumulator before scaling sequence lengths.
    sc = jnp.einsum('gnd,gmd->gnm', qh, kh, preferred_element_type=f32)
    sc = sc - jnp.max(sc, axis=-1, keepdims=True)
    p = jnp.exp(sc)
    denom = jnp.sum(p, axis=-1, keepdims=True)
    if matmul_dtype == jnp.float32:
        p = p / denom                                   # parity path: exact
    else:
        p = p * pl.reciprocal(denom, approx=True)       # perf path: EUP slot, ~free
    o = jnp.einsum('gnm,gmd->gnd', p.astype(md), vh,
                   preferred_element_type=f32)                          # (BH, N, D)

    # Back to row-major (BN, F) with head-major lanes -> merge conv is a single
    # full-contraction-depth (F) matmul; no per-head concat.
    o = jnp.swapaxes(o.reshape(B, H, N, D), 1, 2).reshape(B * N, F)
    msg = jnp.dot(o.astype(md), wm_ref[...], preferred_element_type=f32) + bm

    # MLP layer 1: lane-concat [x, msg] at the 128 boundary -> one K=2F matmul
    # (256-deep MXU pass on v6e/v7x; on v5e's 128-deep MXU the compiler splits it
    # into two passes — same total work as a split-W1 formulation).
    cat = jnp.concatenate([x, msg], axis=-1).astype(md)                 # (BN, 2F)
    h1 = jnp.dot(cat, w1_ref[...], preferred_element_type=f32) + b1     # (BN, 2F)

    # InstanceNorm1d over the length axis per batch instance (biased variance,
    # eps, no affine — torch defaults), then ReLU.
    h1 = h1.reshape(B, N, 2 * F)
    mean = jnp.mean(h1, axis=1, keepdims=True)
    var = jnp.mean((h1 - mean) * (h1 - mean), axis=1, keepdims=True)
    h1 = (h1 - mean) * jax.lax.rsqrt(var + eps)
    h1 = jnp.maximum(h1, 0.0).reshape(B * N, 2 * F)

    out = jnp.dot(h1.astype(md), w2_ref[...], preferred_element_type=f32) + b2
    if residual:
        out = out + x                                   # FeatureFuse skip connection
    out_ref[...] = out.reshape(B, N, F).astype(out_ref.dtype)


# ----------------------------- param preparation -----------------------------

def prepare_params(params, *, num_heads, matmul_dtype=jnp.bfloat16):
    """One-time weight prep (outside the per-call path):
       - all weights transposed to (in, out) so every 1x1 conv is x @ W on the MXU
       - head-major permutation of q/k/v output channels and merge input channels
       - 1/sqrt(head_dim) folded into wq / bq
       - K and V projection weights fused into one (F, 2F) matrix
       - the five bias vectors packed into a single (8, 2F) f32 tile
       - matmul operands cast to `matmul_dtype` (biases stay f32; matmuls
         accumulate in f32 and biases are added afterwards)."""
    F = params['wq'].shape[0]
    assert F % num_heads == 0
    D = F // num_heads
    # head-major position p = h*D + d  <-  torch channel c = d*num_heads + h
    perm = np.array([(p % D) * num_heads + p // D for p in range(F)],
                    dtype=np.int32)
    scale = 1.0 / math.sqrt(D)
    md = matmul_dtype

    wq = (params['wq'][perm, :] * scale).T                 # (F, F)
    wk = params['wk'][perm, :].T                           # (F, F)
    wv = params['wv'][perm, :].T                           # (F, F)
    wkv = jnp.concatenate([wk, wv], axis=1)                # (F, 2F) fused K|V
    wm = params['wm'][:, perm].T                           # (F, F), head-major rows
    w1 = params['w1'].T                                    # (2F, 2F)
    w2 = params['w2'].T                                    # (2F, F)

    zero_f = jnp.zeros((F,), jnp.float32)
    zero_2f = jnp.zeros((2 * F,), jnp.float32)
    biases = jnp.stack([
        jnp.concatenate([params['bq'][perm] * scale, zero_f]),       # row 0: bq
        jnp.concatenate([params['bm'], zero_f]),                     # row 1: bm
        jnp.concatenate([params['b2'], zero_f]),                     # row 2: b2
        params['b1'],                                                # row 3: b1
        jnp.concatenate([params['bk'][perm], params['bv'][perm]]),   # row 4: bk|bv
        zero_2f, zero_2f, zero_2f,                                   # pad to 8 rows
    ]).astype(jnp.float32)                                           # (8, 2F)

    return {'wq': wq.astype(md), 'wkv': wkv.astype(md), 'wm': wm.astype(md),
            'w1': w1.astype(md), 'w2': w2.astype(md), 'biases': biases}


_WEIGHT_ORDER = ('wq', 'wkv', 'wm', 'w1', 'w2', 'biases')


# --------------------------------- wrappers ----------------------------------

def attentional_propagation_nlc(x_nlc, src_nlc, kp, *, num_heads, residual=True):
    """x_nlc: (B, N, F), src_nlc: (B, M, F). Returns (B, N, F) float32.
    residual=True gives FeatureFuse.forward (x + AttentionalPropagation(x, src))."""
    B, N, F = x_nlc.shape
    weights = [kp[k] for k in _WEIGHT_ORDER]
    matmul_dtype = kp['wq'].dtype

    kernel = functools.partial(
        _feature_fuse_kernel, num_heads=num_heads, eps=1e-5,
        matmul_dtype=matmul_dtype, residual=residual)

    # Batch is folded into the block (grid=()): one grid step, full MXU row
    # occupancy on single-TC v5e/v6e.  For v7x (2 TensorCores) re-introduce a
    # leading batch grid axis marked "parallel" to shard B across cores.
    vmem = pl.BlockSpec(memory_space=pltpu.MemorySpace.VMEM)
    return pl.pallas_call(
        kernel,
        out_shape=jax.ShapeDtypeStruct((B, N, F), jnp.float32),
        in_specs=[vmem] * (2 + len(weights)),
        out_specs=vmem,
        # Everything here is ~1 MiB; keep headroom for v7x's 64 MiB physical VMEM.
        compiler_params=pltpu.CompilerParams(vmem_limit_bytes=32 * 1024 * 1024),
    )(x_nlc.astype(jnp.float32), src_nlc.astype(jnp.float32), *weights)


def feature_fuse_ncl(x_ncl, src_ncl, kp, *, num_heads):
    """Drop-in FeatureFuse.forward in PyTorch's NCL layout.
    TODO(synk): these NCL<->NLC transposes are HBM round trips; the raw OverlapHead
    features are already (points, channels), so production code should stay NLC and
    call attentional_propagation_nlc directly (as the demo below does)."""
    x = jnp.transpose(x_ncl, (0, 2, 1))
    s = jnp.transpose(src_ncl, (0, 2, 1))
    out = attentional_propagation_nlc(x, s, kp, num_heads=num_heads, residual=True)
    return jnp.transpose(out, (0, 2, 1))


# ----------------------------- pure-JAX reference ----------------------------

def reference_feature_fuse(x_ncl, src_ncl, p, *, num_heads):
    """Pure-JAX (Precision.HIGHEST) replica of FeatureFuse.forward (NCL layout)."""
    B, F, N = x_ncl.shape
    head_dim = F // num_heads
    hp = jax.lax.Precision.HIGHEST

    def conv1d(x, W, b):
        return jnp.einsum('oc,bcl->bol', W, x, precision=hp) + b[None, :, None]

    q = conv1d(x_ncl, p['wq'], p['bq']).reshape(B, head_dim, num_heads, -1)
    k = conv1d(src_ncl, p['wk'], p['bk']).reshape(B, head_dim, num_heads, -1)
    v = conv1d(src_ncl, p['wv'], p['bv']).reshape(B, head_dim, num_heads, -1)
    scores = jnp.einsum('bdhn,bdhm->bhnm', q, k, precision=hp) / (head_dim ** 0.5)
    prob = jax.nn.softmax(scores, axis=-1)
    msg = jnp.einsum('bhnm,bdhm->bdhn', prob, v, precision=hp).reshape(B, F, -1)
    msg = conv1d(msg, p['wm'], p['bm'])
    cat = jnp.concatenate([x_ncl, msg], axis=1)
    h1 = conv1d(cat, p['w1'], p['b1'])
    mean = jnp.mean(h1, axis=2, keepdims=True)
    var = jnp.mean((h1 - mean) ** 2, axis=2, keepdims=True)
    h1 = jnp.maximum((h1 - mean) / jnp.sqrt(var + 1e-5), 0.0)
    return x_ncl + conv1d(h1, p['w2'], p['b2'])


# ------------------------------------ main -----------------------------------

if __name__ == "__main__":
    B, F, H = 2, 128, 4          # feature_dim = 128 (full lane width), 4 heads
    N, M = 16, 8                 # x length / source length

    key = jax.random.PRNGKey(0)
    keys = jax.random.split(key, 16)

    params = {
        'wq': 0.1 * jax.random.normal(keys[0], (F, F), jnp.float32),
        'bq': 0.1 * jax.random.normal(keys[1], (F,), jnp.float32),
        'wk': 0.1 * jax.random.normal(keys[2], (F, F), jnp.float32),
        'bk': 0.1 * jax.random.normal(keys[3], (F,), jnp.float32),
        'wv': 0.1 * jax.random.normal(keys[4], (F, F), jnp.float32),
        'bv': 0.1 * jax.random.normal(keys[5], (F,), jnp.float32),
        'wm': 0.1 * jax.random.normal(keys[6], (F, F), jnp.float32),
        'bm': 0.1 * jax.random.normal(keys[7], (F,), jnp.float32),
        'w1': 0.1 * jax.random.normal(keys[8], (2 * F, 2 * F), jnp.float32),
        'b1': 0.1 * jax.random.normal(keys[9], (2 * F,), jnp.float32),
        'w2': 0.1 * jax.random.normal(keys[10], (F, 2 * F), jnp.float32),
        'b2': jnp.zeros((F,), jnp.float32),  # torch.nn.init.constant_(mlp[-1].bias, 0)
    }

    # Natural data layout (points, channels) == NLC: the kernel path needs no
    # transposes at all; the NCL reference mirrors the torch module literally.
    x_nlc = jax.random.normal(keys[11], (B, N, F), jnp.float32)
    src_nlc = jax.random.normal(keys[12], (B, M, F), jnp.float32)
    x_ncl = jnp.transpose(x_nlc, (0, 2, 1))
    src_ncl = jnp.transpose(src_nlc, (0, 2, 1))

    ref = jnp.transpose(
        reference_feature_fuse(x_ncl, src_ncl, params, num_heads=H), (0, 2, 1))

    def rel_l2(a, b):
        return float(jnp.sqrt(jnp.sum((a - b) ** 2)) / jnp.sqrt(jnp.sum(b ** 2)))

    # Perf path: bf16 MXU operands / f32 accumulation, approximate EUP reciprocal.
    kp_bf16 = prepare_params(params, num_heads=H, matmul_dtype=jnp.bfloat16)
    out_bf16 = jax.block_until_ready(
        attentional_propagation_nlc(x_nlc, src_nlc, kp_bf16, num_heads=H))
    assert out_bf16.shape == (B, N, F)
    err_bf16 = rel_l2(out_bf16, ref)
    assert err_bf16 < 3e-2, f"bf16 relative L2 error = {err_bf16}"

    # Parity path: f32 MXU operands, exact softmax division (no approx reciprocal).
    kp_f32 = prepare_params(params, num_heads=H, matmul_dtype=jnp.float32)
    out_f32 = jax.block_until_ready(
        attentional_propagation_nlc(x_nlc, src_nlc, kp_f32, num_heads=H))
    err_f32 = rel_l2(out_f32, ref)
    assert err_f32 < 1e-2, f"f32 relative L2 error = {err_f32}"

    print("KERNEL_OK")
</pallas_src>

<mosaic_0001>
module attributes {stable_mosaic.version = 11 : i64} {
  func.func @_feature_fuse_kernel(%arg0: memref<2x16x128xf32, #tpu.memory_space<vmem>>, %arg1: memref<2x8x128xf32, #tpu.memory_space<vmem>>, %arg2: memref<128x128xbf16, #tpu.memory_space<vmem>>, %arg3: memref<128x256xbf16, #tpu.memory_space<vmem>>, %arg4: memref<128x128xbf16, #tpu.memory_space<vmem>>, %arg5: memref<256x256xbf16, #tpu.memory_space<vmem>>, %arg6: memref<256x128xbf16, #tpu.memory_space<vmem>>, %arg7: memref<8x256xf32, #tpu.memory_space<vmem>>, %arg8: memref<2x16x128xf32, #tpu.memory_space<vmem>>) attributes {dimension_semantics = [], scalar_prefetch = 0 : i64, scratch_operands = 0 : i64, tpu.core_type = #tpu.core_type<tc>} {
    %c0 = arith.constant 0 : index
    %c0_0 = arith.constant 0 : index
    %c0_1 = arith.constant 0 : index
    %0 = vector.load %arg0[%c0, %c0_0, %c0_1] : memref<2x16x128xf32, #tpu.memory_space<vmem>>, vector<2x16x128xf32>
    %1 = vector.shape_cast %0 : vector<2x16x128xf32> to vector<32x128xf32>
    %c0_2 = arith.constant 0 : index
    %c0_3 = arith.constant 0 : index
    %c0_4 = arith.constant 0 : index
    %2 = vector.load %arg1[%c0_2, %c0_3, %c0_4] : memref<2x8x128xf32, #tpu.memory_space<vmem>>, vector<2x8x128xf32>
    %3 = vector.shape_cast %2 : vector<2x8x128xf32> to vector<16x128xf32>
    %4 = arith.truncf %1 : vector<32x128xf32> to vector<32x128xbf16>
    %5 = arith.truncf %3 : vector<16x128xf32> to vector<16x128xbf16>
    %c0_5 = arith.constant 0 : index
    %c0_6 = arith.constant 0 : index
    %6 = vector.load %arg7[%c0_5, %c0_6] : memref<8x256xf32, #tpu.memory_space<vmem>>, vector<8x256xf32>
    %7 = vector.extract_strided_slice %6 {offsets = [0, 0], sizes = [1, 128], strides = [1, 1]} : vector<8x256xf32> to vector<1x128xf32>
    %8 = vector.extract_strided_slice %6 {offsets = [1, 0], sizes = [1, 128], strides = [1, 1]} : vector<8x256xf32> to vector<1x128xf32>
    %9 = vector.extract_strided_slice %6 {offsets = [2, 0], sizes = [1, 128], strides = [1, 1]} : vector<8x256xf32> to vector<1x128xf32>
    %10 = vector.extract_strided_slice %6 {offsets = [3, 0], sizes = [1, 256], strides = [1, 1]} : vector<8x256xf32> to vector<1x256xf32>
    %11 = vector.extract_strided_slice %6 {offsets = [4, 0], sizes = [1, 256], strides = [1, 1]} : vector<8x256xf32> to vector<1x256xf32>
    %c0_7 = arith.constant 0 : index
    %c0_8 = arith.constant 0 : index
    %12 = vector.load %arg2[%c0_7, %c0_8] : memref<128x128xbf16, #tpu.memory_space<vmem>>, vector<128x128xbf16>
    %cst = arith.constant dense<0.000000e+00> : vector<32x128xf32>
    %13 = tpu.matmul %4, %12, %cst {dimension_numbers = #tpu.dot_dimension_numbers<[1], [0], [0], [1], [0, 0, 1, 1], [], []>} : vector<32x128xbf16>, vector<128x128xbf16>, vector<32x128xf32> -> vector<32x128xf32>
    %14 = vector.broadcast %7 : vector<1x128xf32> to vector<32x128xf32>
    %15 = arith.addf %13, %14 : vector<32x128xf32>
    %c0_9 = arith.constant 0 : index
    %c0_10 = arith.constant 0 : index
    %16 = vector.load %arg3[%c0_9, %c0_10] : memref<128x256xbf16, #tpu.memory_space<vmem>>, vector<128x256xbf16>
    %cst_11 = arith.constant dense<0.000000e+00> : vector<16x256xf32>
    %17 = tpu.matmul %5, %16, %cst_11 {dimension_numbers = #tpu.dot_dimension_numbers<[1], [0], [0], [1], [0, 0, 1, 1], [], []>} : vector<16x128xbf16>, vector<128x256xbf16>, vector<16x256xf32> -> vector<16x256xf32>
    %18 = vector.broadcast %11 : vector<1x256xf32> to vector<16x256xf32>
    %19 = arith.addf %17, %18 : vector<16x256xf32>
    %20 = vector.extract_strided_slice %19 {offsets = [0, 0], sizes = [16, 128], strides = [1, 1]} : vector<16x256xf32> to vector<16x128xf32>
    %21 = vector.extract_strided_slice %19 {offsets = [0, 128], sizes = [16, 128], strides = [1, 1]} : vector<16x256xf32> to vector<16x128xf32>
    %22 = vector.shape_cast %15 : vector<32x128xf32> to vector<2x16x4x32xf32>
    %23 = tpu.transpose %22, [0, 2, 1, 3] : vector<2x16x4x32xf32> -> vector<2x4x16x32xf32>
    %24 = vector.shape_cast %23 : vector<2x4x16x32xf32> to vector<8x16x32xf32>
    %25 = arith.truncf %24 : vector<8x16x32xf32> to vector<8x16x32xbf16>
    %26 = vector.shape_cast %20 : vector<16x128xf32> to vector<2x8x4x32xf32>
    %27 = tpu.transpose %26, [0, 2, 1, 3] : vector<2x8x4x32xf32> -> vector<2x4x8x32xf32>
    %28 = vector.shape_cast %27 : vector<2x4x8x32xf32> to vector<8x8x32xf32>
    %29 = arith.truncf %28 : vector<8x8x32xf32> to vector<8x8x32xbf16>
    %30 = vector.shape_cast %21 : vector<16x128xf32> to vector<2x8x4x32xf32>
    %31 = tpu.transpose %30, [0, 2, 1, 3] : vector<2x8x4x32xf32> -> vector<2x4x8x32xf32>
    %32 = vector.shape_cast %31 : vector<2x4x8x32xf32> to vector<8x8x32xf32>
    %33 = arith.truncf %32 : vector<8x8x32xf32> to vector<8x8x32xbf16>
    "tpu.trace_start"() <{level = 10 : i32, message = "gnd,gmd->gnm"}> : () -> ()
    %cst_12 = arith.constant dense<0.000000e+00> : vector<8x16x8xf32>
    %34 = tpu.matmul %25, %29, %cst_12 {dimension_numbers = #tpu.dot_dimension_numbers<[2], [2], [1], [1], [0, 0, 0, 1, 1, 1], [0], [0]>} : vector<8x16x32xbf16>, vector<8x8x32xbf16>, vector<8x16x8xf32> -> vector<8x16x8xf32>
    "tpu.trace_stop"() : () -> ()
    %cst_13 = arith.constant dense<0xFF800000> : vector<8x16xf32>
    %35 = vector.multi_reduction <maximumf>, %34, %cst_13 [2] : vector<8x16x8xf32> to vector<8x16xf32>
    %36 = vector.shape_cast %35 : vector<8x16xf32> to vector<8x16x1xf32>
    %37 = vector.broadcast %36 : vector<8x16x1xf32> to vector<8x16x8xf32>
    %38 = arith.subf %34, %37 : vector<8x16x8xf32>
    %39 = math.exp %38 : vector<8x16x8xf32>
    %cst_14 = arith.constant dense<0.000000e+00> : vector<8x16xf32>
    %40 = vector.multi_reduction <add>, %39, %cst_14 [2] : vector<8x16x8xf32> to vector<8x16xf32>
    %41 = vector.shape_cast %40 : vector<8x16xf32> to vector<8x16x1xf32>
    %42 = tpu.reciprocal %41 {approx = true} : vector<8x16x1xf32> -> vector<8x16x1xf32>
    %43 = vector.broadcast %42 : vector<8x16x1xf32> to vector<8x16x8xf32>
    %44 = arith.mulf %39, %43 : vector<8x16x8xf32>
    %45 = arith.truncf %44 : vector<8x16x8xf32> to vector<8x16x8xbf16>
    "tpu.trace_start"() <{level = 10 : i32, message = "gnm,gmd->gnd"}> : () -> ()
    %cst_15 = arith.constant dense<0.000000e+00> : vector<8x16x32xf32>
    %46 = tpu.matmul %45, %33, %cst_15 {dimension_numbers = #tpu.dot_dimension_numbers<[2], [1], [1], [2], [0, 0, 0, 1, 1, 2], [0], [0]>} : vector<8x16x8xbf16>, vector<8x8x32xbf16>, vector<8x16x32xf32> -> vector<8x16x32xf32>
    "tpu.trace_stop"() : () -> ()
    %47 = vector.shape_cast %46 : vector<8x16x32xf32> to vector<2x4x16x32xf32>
    %48 = tpu.transpose %47, [0, 2, 1, 3] : vector<2x4x16x32xf32> -> vector<2x16x4x32xf32>
    %49 = vector.shape_cast %48 : vector<2x16x4x32xf32> to vector<32x128xf32>
    %50 = arith.truncf %49 : vector<32x128xf32> to vector<32x128xbf16>
    %c0_16 = arith.constant 0 : index
    %c0_17 = arith.constant 0 : index
    %51 = vector.load %arg4[%c0_16, %c0_17] : memref<128x128xbf16, #tpu.memory_space<vmem>>, vector<128x128xbf16>
    %cst_18 = arith.constant dense<0.000000e+00> : vector<32x128xf32>
    %52 = tpu.matmul %50, %51, %cst_18 {dimension_numbers = #tpu.dot_dimension_numbers<[1], [0], [0], [1], [0, 0, 1, 1], [], []>} : vector<32x128xbf16>, vector<128x128xbf16>, vector<32x128xf32> -> vector<32x128xf32>
    %53 = vector.broadcast %8 : vector<1x128xf32> to vector<32x128xf32>
    %54 = arith.addf %52, %53 : vector<32x128xf32>
    %55 = tpu.concatenate %1, %54 in 1 : vector<32x128xf32>, vector<32x128xf32> -> vector<32x256xf32>
    %56 = arith.truncf %55 : vector<32x256xf32> to vector<32x256xbf16>
    %c0_19 = arith.constant 0 : index
    %c0_20 = arith.constant 0 : index
    %57 = vector.load %arg5[%c0_19, %c0_20] : memref<256x256xbf16, #tpu.memory_space<vmem>>, vector<256x256xbf16>
    %cst_21 = arith.constant dense<0.000000e+00> : vector<32x256xf32>
    %58 = tpu.matmul %56, %57, %cst_21 {dimension_numbers = #tpu.dot_dimension_numbers<[1], [0], [0], [1], [0, 0, 1, 1], [], []>} : vector<32x256xbf16>, vector<256x256xbf16>, vector<32x256xf32> -> vector<32x256xf32>
    %59 = vector.broadcast %10 : vector<1x256xf32> to vector<32x256xf32>
    %60 = arith.addf %58, %59 : vector<32x256xf32>
    %61 = vector.shape_cast %60 : vector<32x256xf32> to vector<2x16x256xf32>
    %cst_22 = arith.constant dense<0.000000e+00> : vector<2x256xf32>
    %62 = vector.multi_reduction <add>, %61, %cst_22 [1] : vector<2x16x256xf32> to vector<2x256xf32>
    %63 = vector.shape_cast %62 : vector<2x256xf32> to vector<2x1x256xf32>
    %cst_23 = arith.constant 1.600000e+01 : f32
    %64 = vector.broadcast %cst_23 : f32 to vector<2x1x256xf32>
    %65 = arith.divf %63, %64 : vector<2x1x256xf32>
    %66 = vector.broadcast %65 : vector<2x1x256xf32> to vector<2x16x256xf32>
    %67 = arith.subf %61, %66 : vector<2x16x256xf32>
    %68 = vector.broadcast %65 : vector<2x1x256xf32> to vector<2x16x256xf32>
    %69 = arith.subf %61, %68 : vector<2x16x256xf32>
    %70 = arith.mulf %67, %69 : vector<2x16x256xf32>
    %cst_24 = arith.constant dense<0.000000e+00> : vector<2x256xf32>
    %71 = vector.multi_reduction <add>, %70, %cst_24 [1] : vector<2x16x256xf32> to vector<2x256xf32>
    %72 = vector.shape_cast %71 : vector<2x256xf32> to vector<2x1x256xf32>
    %cst_25 = arith.constant 1.600000e+01 : f32
    %73 = vector.broadcast %cst_25 : f32 to vector<2x1x256xf32>
    %74 = arith.divf %72, %73 : vector<2x1x256xf32>
    %75 = vector.broadcast %65 : vector<2x1x256xf32> to vector<2x16x256xf32>
    %76 = arith.subf %61, %75 : vector<2x16x256xf32>
    %cst_26 = arith.constant 9.99999974E-6 : f32
    %77 = vector.broadcast %cst_26 : f32 to vector<2x1x256xf32>
    %78 = arith.addf %74, %77 : vector<2x1x256xf32>
    %79 = math.rsqrt %78 : vector<2x1x256xf32>
    %80 = vector.broadcast %79 : vector<2x1x256xf32> to vector<2x16x256xf32>
    %81 = arith.mulf %76, %80 : vector<2x16x256xf32>
    %cst_27 = arith.constant 0.000000e+00 : f32
    %82 = vector.broadcast %cst_27 : f32 to vector<2x16x256xf32>
    %83 = arith.maximumf %81, %82 : vector<2x16x256xf32>
    %84 = vector.shape_cast %83 : vector<2x16x256xf32> to vector<32x256xf32>
    %85 = arith.truncf %84 : vector<32x256xf32> to vector<32x256xbf16>
    %c0_28 = arith.constant 0 : index
    %c0_29 = arith.constant 0 : index
    %86 = vector.load %arg6[%c0_28, %c0_29] : memref<256x128xbf16, #tpu.memory_space<vmem>>, vector<256x128xbf16>
    %cst_30 = arith.constant dense<0.000000e+00> : vector<32x128xf32>
    %87 = tpu.matmul %85, %86, %cst_30 {dimension_numbers = #tpu.dot_dimension_numbers<[1], [0], [0], [1], [0, 0, 1, 1], [], []>} : vector<32x256xbf16>, vector<256x128xbf16>, vector<32x128xf32> -> vector<32x128xf32>
    %88 = vector.broadcast %9 : vector<1x128xf32> to vector<32x128xf32>
    %89 = arith.addf %87, %88 : vector<32x128xf32>
    %90 = arith.addf %89, %1 : vector<32x128xf32>
    %91 = vector.shape_cast %90 : vector<32x128xf32> to vector<2x16x128xf32>
    %c0_31 = arith.constant 0 : index
    %c0_32 = arith.constant 0 : index
    %c0_33 = arith.constant 0 : index
    %92 = vector.load %arg8[%c0_31, %c0_32, %c0_33] : memref<2x16x128xf32, #tpu.memory_space<vmem>>, vector<2x16x128xf32>
    tpu.vector_store %arg8[%c0_31, %c0_32, %c0_33], %91 {strides = array<i32>} : memref<2x16x128xf32, #tpu.memory_space<vmem>>, vector<2x16x128xf32>,
    return
  }
}

</mosaic_0001>

<llo_original>
// kernel: tpu_custom_call.1
$region0: #{tpu_custom_call.1}
  #allocation0 [shape = 'u32[]', space=smem, size = 0x4, offset = 0x4, fixed_abs, tag = 'smem constant byte address 0x4 - core index']
  #allocation1 [shape = 'u32[144,128]{1,0:T(1,128)}', space=vmem, size = 0x12000, scoped, tag = 'internal scratch']
  %s0 = inlined_call_operand.hbm [shape: f32[2,16,128], index: 0, kind: input, shape index: {}]
  %s1 = inlined_call_operand.hbm [shape: f32[2,8,128], index: 1, kind: input, shape index: {}]
  %s2 = inlined_call_operand.hbm [shape: bf16[128,128], index: 2, kind: input, shape index: {}]
  %s3 = inlined_call_operand.hbm [shape: bf16[128,256], index: 3, kind: input, shape index: {}]
  %s4 = inlined_call_operand.hbm [shape: bf16[128,128], index: 4, kind: input, shape index: {}]
  %s5 = inlined_call_operand.hbm [shape: bf16[256,256], index: 5, kind: input, shape index: {}]
  %s6 = inlined_call_operand.hbm [shape: bf16[256,128], index: 6, kind: input, shape index: {}]
  %s7 = inlined_call_operand.hbm [shape: f32[8,256], index: 7, kind: input, shape index: {}]
  %s8 = inlined_call_operand.hbm [shape: f32[2,16,128], index: 8, kind: output, shape index: {}]
  %s9 = sld [smem:[#allocation0]]
  $region74: #{tpu_custom_call.1} parent=0
    _
  %s11 = ssub.s32 1, %s9
  %s12 = scalar_select 0, %s11, %s9
  $region1: #{tpu_custom_call.1} parent=0
    #allocation2 [shape = 'u8[16384]{0}', space=vmem, size = 0x4000, scoped, tag = 'input window, operand 0, single buffered']
    #allocation3 [shape = 's32[1]{0}', space=sflag, size = 0x4, scoped, tag = 'scoped memory for tpu_custom_call.1']
    #allocation4 [shape = 's32[1]{0}', space=sflag, size = 0x4, scoped, tag = 'scoped memory for tpu_custom_call.1']
    #allocation5 [shape = 'u8[8192]{0}', space=vmem, size = 0x2000, scoped, tag = 'input window, operand 1, single buffered']
    #allocation6 [shape = 's32[1]{0}', space=sflag, size = 0x4, scoped, tag = 'scoped memory for tpu_custom_call.1']
    #allocation7 [shape = 'u8[32768]{0}', space=vmem, size = 0x8000, scoped, tag = 'input window, operand 2, single buffered']
    #allocation8 [shape = 'u8[65536]{0}', space=vmem, size = 0x10000, scoped, tag = 'input window, operand 3, single buffered']
    #allocation9 [shape = 's32[1]{0}', space=sflag, size = 0x4, scoped, tag = 'scoped memory for tpu_custom_call.1']
    #allocation10 [shape = 'u8[32768]{0}', space=vmem, size = 0x8000, scoped, tag = 'input window, operand 4, single buffered']
    #allocation11 [shape = 'u8[131072]{0}', space=vmem, size = 0x20000, scoped, tag = 'input window, operand 5, single buffered']
    #allocation12 [shape = 's32[1]{0}', space=sflag, size = 0x4, scoped, tag = 'scoped memory for tpu_custom_call.1']
    #allocation13 [shape = 'u8[65536]{0}', space=vmem, size = 0x10000, scoped, tag = 'input window, operand 6, single buffered']
    #allocation14 [shape = 'u8[8192]{0}', space=vmem, size = 0x2000, scoped, tag = 'input window, operand 7, single buffered']
    #allocation15 [shape = 's32[1]{0}', space=sflag, size = 0x4, scoped, tag = 'scoped memory for tpu_custom_call.1']
    #allocation16 [shape = 'u8[16384]{0}', space=vmem, size = 0x4000, scoped, tag = 'output window, operand 0, single buffered']
    %13 = vsyncpa [#allocation3], 0
    %14 = vsyncpa [#allocation6], 0
    %15 = vsyncpa [#allocation9], 0
    %16 = vsyncpa [#allocation12], 0
    %17 = vsyncpa [#allocation15], 0
    %18 = vsyncpa [#allocation4], 0
    // Predicated region
    $region2: #{tpu_custom_call.1} parent=1 // pred_check
      _
    $region3: #{tpu_custom_call.1} parent=1 // pred_check_branch
      %20 = sbr.rel (0) target = $region5
    $region4: #{tpu_custom_call.1} parent=1 // pred_region
      %s22 = ssub.s32 512, 512
      %23 = vsyncadd [#allocation3], %s22
      %s24 = sshll.u32 [#allocation2], 4
      %s25 = int_to_ptr.vmem [resolvable:$true] %s24
      %30 = dma.hbm_to_vmem [thread:$0]  %s0, 512, %s25, [#allocation3], 128, 128, 8
    $region5: #{tpu_custom_call.1} parent=1 // pred_fallthru
      _
    // Predicated region
    $region6: #{tpu_custom_call.1} parent=1 // pred_check
      _
    $region7: #{tpu_custom_call.1} parent=1 // pred_check_branch
      %32 = sbr.rel (0) target = $region9
    $region8: #{tpu_custom_call.1} parent=1 // pred_region
      %s34 = ssub.s32 256, 256
      %35 = vsyncadd [#allocation6], %s34
      %s36 = sshll.u32 [#allocation5], 4
      %s37 = int_to_ptr.vmem [resolvable:$true] %s36
      %42 = dma.hbm_to_vmem [thread:$0]  %s1, 256, %s37, [#allocation6], 128, 128, 8
    $region9: #{tpu_custom_call.1} parent=1 // pred_fallthru
      _
    // Predicated region
    $region10: #{tpu_custom_call.1} parent=1 // pred_check
      _
    $region11: #{tpu_custom_call.1} parent=1 // pred_check_branch
      %44 = sbr.rel (0) target = $region13
    $region12: #{tpu_custom_call.1} parent=1 // pred_region
      %s46 = ssub.s32 1024, 1024
      %47 = vsyncadd [#allocation6], %s46
      %s48 = sshll.u32 [#allocation7], 4
      %s49 = int_to_ptr.vmem [resolvable:$true] %s48
      %54 = dma.hbm_to_vmem [thread:$0]  %s2, 1024, %s49, [#allocation6], 64, 64, 4
    $region13: #{tpu_custom_call.1} parent=1 // pred_fallthru
      _
    // Predicated region
    $region14: #{tpu_custom_call.1} parent=1 // pred_check
      _
    $region15: #{tpu_custom_call.1} parent=1 // pred_check_branch
      %56 = sbr.rel (0) target = $region17
    $region16: #{tpu_custom_call.1} parent=1 // pred_region
      %s58 = ssub.s32 2048, 2048
      %59 = vsyncadd [#allocation9], %s58
      %s60 = sshll.u32 [#allocation8], 4
      %s61 = int_to_ptr.vmem [resolvable:$true] %s60
      %66 = dma.hbm_to_vmem [thread:$0]  %s3, 2048, %s61, [#allocation9], 128, 128, 8
    $region17: #{tpu_custom_call.1} parent=1 // pred_fallthru
      _
    // Predicated region
    $region18: #{tpu_custom_call.1} parent=1 // pred_check
      _
    $region19: #{tpu_custom_call.1} parent=1 // pred_check_branch
      %68 = sbr.rel (0) target = $region21
    $region20: #{tpu_custom_call.1} parent=1 // pred_region
      %s70 = ssub.s32 1024, 1024
      %71 = vsyncadd [#allocation9], %s70
      %s72 = sshll.u32 [#allocation10], 4
      %s73 = int_to_ptr.vmem [resolvable:$true] %s72
      %78 = dma.hbm_to_vmem [thread:$0]  %s4, 1024, %s73, [#allocation9], 64, 64, 4
    $region21: #{tpu_custom_call.1} parent=1 // pred_fallthru
      _
    // Predicated region
    $region22: #{tpu_custom_call.1} parent=1 // pred_check
      _
    $region23: #{tpu_custom_call.1} parent=1 // pred_check_branch
      %80 = sbr.rel (0) target = $region25
    $region24: #{tpu_custom_call.1} parent=1 // pred_region
      %s82 = ssub.s32 4096, 4096
      %83 = vsyncadd [#allocation12], %s82
      %s84 = sshll.u32 [#allocation11], 4
      %s85 = int_to_ptr.vmem [resolvable:$true] %s84
      %90 = dma.hbm_to_vmem [thread:$0]  %s5, 4096, %s85, [#allocation12], 128, 128, 8
    $region25: #{tpu_custom_call.1} parent=1 // pred_fallthru
      _
    // Predicated region
    $region26: #{tpu_custom_call.1} parent=1 // pred_check
      _
    $region27: #{tpu_custom_call.1} parent=1 // pred_check_branch
      %92 = sbr.rel (0) target = $region29
    $region28: #{tpu_custom_call.1} parent=1 // pred_region
      %s94 = ssub.s32 2048, 2048
      %95 = vsyncadd [#allocation12], %s94
      %s96 = sshll.u32 [#allocation13], 4
      %s97 = int_to_ptr.vmem [resolvable:$true] %s96
      %102 = dma.hbm_to_vmem [thread:$0]  %s6, 2048, %s97, [#allocation12], 64, 64, 4
    $region29: #{tpu_custom_call.1} parent=1 // pred_fallthru
      _
    // Predicated region
    $region30: #{tpu_custom_call.1} parent=1 // pred_check
      _
    $region31: #{tpu_custom_call.1} parent=1 // pred_check_branch
      %104 = sbr.rel (0) target = $region33
    $region32: #{tpu_custom_call.1} parent=1 // pred_region
      %s106 = ssub.s32 256, 256
      %107 = vsyncadd [#allocation15], %s106
      %s109 = sshll.u32 [#allocation14], 4
      %s110 = int_to_ptr.vmem [resolvable:$true] %s109
      %112 = dma.hbm_to_vmem [thread:$0]  %s7, 256, %s110, [#allocation15]
    $region33: #{tpu_custom_call.1} parent=1 // pred_fallthru
      _
    // Predicated region
    $region34: #{tpu_custom_call.1} parent=1 // pred_check
      _
    $region35: #{tpu_custom_call.1} parent=1 // pred_check_branch
      %114 = sbr.rel (0) target = $region37
    $region36: #{tpu_custom_call.1} parent=1 // pred_region
      %115 = dma.done [#allocation3], 512
    $region37: #{tpu_custom_call.1} parent=1 // pred_fallthru
      _
    // Predicated region
    $region38: #{tpu_custom_call.1} parent=1 // pred_check
      _
    $region39: #{tpu_custom_call.1} parent=1 // pred_check_branch
      %117 = sbr.rel (0) target = $region41
    $region40: #{tpu_custom_call.1} parent=1 // pred_region
      %118 = dma.done [#allocation6], 256
    $region41: #{tpu_custom_call.1} parent=1 // pred_fallthru
      _
    // Predicated region
    $region42: #{tpu_custom_call.1} parent=1 // pred_check
      _
    $region43: #{tpu_custom_call.1} parent=1 // pred_check_branch
      %120 = sbr.rel (0) target = $region45
    $region44: #{tpu_custom_call.1} parent=1 // pred_region
      %121 = dma.done [#allocation6], 1024
    $region45: #{tpu_custom_call.1} parent=1 // pred_fallthru
      _
    // Predicated region
    $region46: #{tpu_custom_call.1} parent=1 // pred_check
      _
    $region47: #{tpu_custom_call.1} parent=1 // pred_check_branch
      %123 = sbr.rel (0) target = $region49
    $region48: #{tpu_custom_call.1} parent=1 // pred_region
      %124 = dma.done [#allocation9], 2048
    $region49: #{tpu_custom_call.1} parent=1 // pred_fallthru
      _
    // Predicated region
    $region50: #{tpu_custom_call.1} parent=1 // pred_check
      _
    $region51: #{tpu_custom_call.1} parent=1 // pred_check_branch
      %126 = sbr.rel (0) target = $region53
    $region52: #{tpu_custom_call.1} parent=1 // pred_region
      %127 = dma.done [#allocation9], 1024
    $region53: #{tpu_custom_call.1} parent=1 // pred_fallthru
      _
    // Predicated region
    $region54: #{tpu_custom_call.1} parent=1 // pred_check
      _
    $region55: #{tpu_custom_call.1} parent=1 // pred_check_branch
      %129 = sbr.rel (0) target = $region57
    $region56: #{tpu_custom_call.1} parent=1 // pred_region
      %130 = dma.done [#allocation12], 4096
    $region57: #{tpu_custom_call.1} parent=1 // pred_fallthru
      _
    // Predicated region
    $region58: #{tpu_custom_call.1} parent=1 // pred_check
      _
    $region59: #{tpu_custom_call.1} parent=1 // pred_check_branch
      %132 = sbr.rel (0) target = $region61
    $region60: #{tpu_custom_call.1} parent=1 // pred_region
      %133 = dma.done [#allocation12], 2048
    $region61: #{tpu_custom_call.1} parent=1 // pred_fallthru
      _
    // Predicated region
    $region62: #{tpu_custom_call.1} parent=1 // pred_check
      _
    $region63: #{tpu_custom_call.1} parent=1 // pred_check_branch
      %135 = sbr.rel (0) target = $region65
    $region64: #{tpu_custom_call.1} parent=1 // pred_region
      %136 = dma.done [#allocation15], 256
    $region65: #{tpu_custom_call.1} parent=1 // pred_fallthru
      _
    %v138 = vld [vmem:[#allocation2] sm:$0xff]
    %v139 = vld [vmem:[#allocation2 + $0x8] sm:$0xff]
    %v140 = vld [vmem:[#allocation2 + $0x10] sm:$0xff]
    %v141 = vld [vmem:[#allocation2 + $0x18] sm:$0xff]
    %v142 = vld [vmem:[#allocation5] sm:$0xff]
    %v143 = vld [vmem:[#allocation5 + $0x8] sm:$0xff]
    %v144 = vpack.c.bf16 %v139, %v138
    %v145 = vpack.c.bf16 %v141, %v140
    %v146 = vpack.c.bf16 %v143, %v142
    %v147 = vld [vmem:[#allocation14] sm:$0xff]
    %v148 = vld [vmem:[#allocation14 + $0x8] sm:$0xff]
    %v149 = vld [vmem:[#allocation7] sm:$0xf]
    %v150 = vld [vmem:[#allocation7 + $0x4] sm:$0xf]
    %v151 = vld [vmem:[#allocation7 + $0x8] sm:$0xf]
    %v152 = vld [vmem:[#allocation7 + $0xc] sm:$0xf]
    %v153 = vld [vmem:[#allocation7 + $0x10] sm:$0xf]
    %v154 = vld [vmem:[#allocation7 + $0x14] sm:$0xf]
    %v155 = vld [vmem:[#allocation7 + $0x18] sm:$0xf]
    %v156 = vld [vmem:[#allocation7 + $0x1c] sm:$0xf]
    %v157 = vld [vmem:[#allocation7 + $0x20] sm:$0xf]
    %v158 = vld [vmem:[#allocation7 + $0x24] sm:$0xf]
    %v159 = vld [vmem:[#allocation7 + $0x28] sm:$0xf]
    %v160 = vld [vmem:[#allocation7 + $0x2c] sm:$0xf]
    %v161 = vld [vmem:[#allocation7 + $0x30] sm:$0xf]
    %v162 = vld [vmem:[#allocation7 + $0x34] sm:$0xf]
    %v163 = vld [vmem:[#allocation7 + $0x38] sm:$0xf]
    %v164 = vld [vmem:[#allocation7 + $0x3c] sm:$0xf]
    %v165 = vlaneseq
    %v166 = vshrl.u32 %v165, 7
    %v167 = vsub.s32 0, %v166
    %v168 = vrot.slane %v147, %v167
    %v185 = vunpack.c.l.b16 %v149
    %v186 = vunpack.c.l.b16 %v150
    %v187 = vunpack.c.l.b16 %v151
    %v188 = vunpack.c.l.b16 %v152
    %v189 = vunpack.c.l.b16 %v153
    %v190 = vunpack.c.l.b16 %v154
    %v191 = vunpack.c.l.b16 %v155
    %v192 = vunpack.c.l.b16 %v156
    %v193 = vunpack.c.l.b16 %v157
    %v194 = vunpack.c.l.b16 %v158
    %v195 = vunpack.c.l.b16 %v159
    %v196 = vunpack.c.l.b16 %v160
    %v197 = vunpack.c.l.b16 %v161
    %v198 = vunpack.c.l.b16 %v162
    %v199 = vunpack.c.l.b16 %v163
    %v200 = vunpack.c.l.b16 %v164
    %v201 = vpack.c.b16 %v186, %v185
    %v202 = vpack.c.b16 %v188, %v187
    %v203 = vpack.c.b16 %v190, %v189
    %v204 = vpack.c.b16 %v192, %v191
    %v205 = vpack.c.b16 %v194, %v193
    %v206 = vpack.c.b16 %v196, %v195
    %v207 = vpack.c.b16 %v198, %v197
    %v208 = vpack.c.b16 %v200, %v199
    %217 = vmatprep.subr.bf16.mxu0 0
    %218 = vmatpush1.bf16.msra.mxu0 %v208
    %219 = vmatprep.subr.bf16.mxu0 0
    %220 = vmatpush1.bf16.msra.mxu0 %v207
    %221 = vmatprep.subr.bf16.mxu0 0
    %222 = vmatpush1.bf16.msra.mxu0 %v206
    %223 = vmatprep.subr.bf16.mxu0 0
    %224 = vmatpush1.bf16.msra.mxu0 %v205
    %225 = vmatprep.subr.bf16.mxu0 0
    %226 = vmatpush1.bf16.msra.mxu0 %v204
    %227 = vmatprep.subr.bf16.mxu0 0
    %228 = vmatpush1.bf16.msra.mxu0 %v203
    %229 = vmatprep.subr.bf16.mxu0 0
    %230 = vmatpush1.bf16.msra.mxu0 %v202
    %231 = vmatprep.subr.bf16.mxu0 0
    %232 = vmatpush1.bf16.msra.mxu0 %v201
    %233 = vmatprep.subr.bf16.mxu0 0
    %234 = vmatpush2.bf16.msra.mxu0 0
    %235 = vmatprep.subr.bf16.mxu0 0
    %236 = vmatpush2.bf16.msra.mxu0 0
    %237 = vmatprep.subr.bf16.mxu0 0
    %238 = vmatpush2.bf16.msra.mxu0 0
    %239 = vmatprep.subr.bf16.mxu0 0
    %240 = vmatpush2.bf16.msra.mxu0 0
    %241 = vmatprep.subr.bf16.mxu0 0
    %242 = vmatpush2.bf16.msra.mxu0 0
    %243 = vmatprep.subr.bf16.mxu0 0
    %244 = vmatpush2.bf16.msra.mxu0 0
    %245 = vmatprep.subr.bf16.mxu0 0
    %246 = vmatpush2.bf16.msra.mxu0 0
    %247 = vmatprep.subr.bf16.mxu0 0
    %248 = vmatpush2.bf16.msra.mxu0 0
    %249 = vmatprep.mubr.bf16.mxu0 0
    %250 = vmatmul.mubr.bf16.gmra.mxu0 %v144
    %v251 = vpop.f32.mrf.mxu0
    %v252 = vadd.f32 %v168, %v251
    %v253 = vpop.f32.mrf.mxu0
    %v254 = vpop.f32.mrf.mxu0
    %v255 = vadd.f32 %v168, %v254
    %v256 = vpop.f32.mrf.mxu0
    %257 = vmatprep.mubr.bf16.mxu0 0
    %258 = vmatmul.mubr.bf16.gmra.mxu0 %v145
    %v259 = vpop.f32.mrf.mxu0
    %v260 = vadd.f32 %v168, %v259
    %v261 = vpop.f32.mrf.mxu0
    %v262 = vpop.f32.mrf.mxu0
    %v263 = vadd.f32 %v168, %v262
    %v264 = vpop.f32.mrf.mxu0
    %265 = vdwg.mxu0
    %v266 = vld [vmem:[#allocation8] sm:$0xff]
    %v267 = vld [vmem:[#allocation8 + $0x8] sm:$0xff]
    %v268 = vld [vmem:[#allocation8 + $0x10] sm:$0xff]
    %v269 = vld [vmem:[#allocation8 + $0x18] sm:$0xff]
    %v270 = vld [vmem:[#allocation8 + $0x20] sm:$0xff]
    %v271 = vld [vmem:[#allocation8 + $0x28] sm:$0xff]
    %v272 = vld [vmem:[#allocation8 + $0x30] sm:$0xff]
    %v273 = vld [vmem:[#allocation8 + $0x38] sm:$0xff]
    %v274 = vld [vmem:[#allocation8 + $0x40] sm:$0xff]
    %v275 = vld [vmem:[#allocation8 + $0x48] sm:$0xff]
    %v276 = vld [vmem:[#allocation8 + $0x50] sm:$0xff]
    %v277 = vld [vmem:[#allocation8 + $0x58] sm:$0xff]
    %v278 = vld [vmem:[#allocation8 + $0x60] sm:$0xff]
    %v279 = vld [vmem:[#allocation8 + $0x68] sm:$0xff]
    %v280 = vld [vmem:[#allocation8 + $0x70] sm:$0xff]
    %v281 = vld [vmem:[#allocation8 + $0x78] sm:$0xff]
    %v282 = vlaneseq
    %v283 = vshrl.u32 %v282, 7
    %v284 = vsub.s32 4, %v283
    %v285 = vrot.slane %v147, %v284
    %v286 = vlaneseq
    %v287 = vshrl.u32 %v286, 7
    %v288 = vsub.s32 4, %v287
    %v289 = vrot.slane %v148, %v288
    %v306 = vunpack.c.l.b16 %v266
    %v307 = vunpack.c.h.b16 %v266
    %v308 = vunpack.c.l.b16 %v267
    %v309 = vunpack.c.h.b16 %v267
    %v310 = vunpack.c.l.b16 %v268
    %v311 = vunpack.c.h.b16 %v268
    %v312 = vunpack.c.l.b16 %v269
    %v313 = vunpack.c.h.b16 %v269
    %v314 = vunpack.c.l.b16 %v270
    %v315 = vunpack.c.h.b16 %v270
    %v316 = vunpack.c.l.b16 %v271
    %v317 = vunpack.c.h.b16 %v271
    %v318 = vunpack.c.l.b16 %v272
    %v319 = vunpack.c.h.b16 %v272
    %v320 = vunpack.c.l.b16 %v273
    %v321 = vunpack.c.h.b16 %v273
    %v322 = vunpack.c.l.b16 %v274
    %v323 = vunpack.c.h.b16 %v274
    %v324 = vunpack.c.l.b16 %v275
    %v325 = vunpack.c.h.b16 %v275
    %v326 = vunpack.c.l.b16 %v276
    %v327 = vunpack.c.h.b16 %v276
    %v328 = vunpack.c.l.b16 %v277
    %v329 = vunpack.c.h.b16 %v277
    %v330 = vunpack.c.l.b16 %v278
    %v331 = vunpack.c.h.b16 %v278
    %v332 = vunpack.c.l.b16 %v279
    %v333 = vunpack.c.h.b16 %v279
    %v334 = vunpack.c.l.b16 %v280
    %v335 = vunpack.c.h.b16 %v280
    %v336 = vunpack.c.l.b16 %v281
    %v337 = vunpack.c.h.b16 %v281
    %v338 = vpack.c.b16 %v308, %v306
    %v339 = vpack.c.b16 %v309, %v307
    %v340 = vpack.c.b16 %v312, %v310
    %v341 = vpack.c.b16 %v313, %v311
    %v342 = vpack.c.b16 %v316, %v314
    %v343 = vpack.c.b16 %v317, %v315
    %v344 = vpack.c.b16 %v320, %v318
    %v345 = vpack.c.b16 %v321, %v319
    %v346 = vpack.c.b16 %v324, %v322
    %v347 = vpack.c.b16 %v325, %v323
    %v348 = vpack.c.b16 %v328, %v326
    %v349 = vpack.c.b16 %v329, %v327
    %v350 = vpack.c.b16 %v332, %v330
    %v351 = vpack.c.b16 %v333, %v331
    %v352 = vpack.c.b16 %v336, %v334
    %v353 = vpack.c.b16 %v337, %v335
    %370 = vmatprep.subr.bf16.mxu0 %v353
    %371 = vmatpush1.bf16.msra.mxu0 %v352
    %372 = vmatprep.subr.bf16.mxu0 %v351
    %373 = vmatpush1.bf16.msra.mxu0 %v350
    %374 = vmatprep.subr.bf16.mxu0 %v349
    %375 = vmatpush1.bf16.msra.mxu0 %v348
    %376 = vmatprep.subr.bf16.mxu0 %v347
    %377 = vmatpush1.bf16.msra.mxu0 %v346
    %378 = vmatprep.subr.bf16.mxu0 %v345
    %379 = vmatpush1.bf16.msra.mxu0 %v344
    %380 = vmatprep.subr.bf16.mxu0 %v343
    %381 = vmatpush1.bf16.msra.mxu0 %v342
    %382 = vmatprep.subr.bf16.mxu0 %v341
    %383 = vmatpush1.bf16.msra.mxu0 %v340
    %384 = vmatprep.subr.bf16.mxu0 %v339
    %385 = vmatpush1.bf16.msra.mxu0 %v338
    %386 = vmatprep.subr.bf16.mxu0 0
    %387 = vmatpush2.bf16.msra.mxu0 0
    %388 = vmatprep.subr.bf16.mxu0 0
    %389 = vmatpush2.bf16.msra.mxu0 0
    %390 = vmatprep.subr.bf16.mxu0 0
    %391 = vmatpush2.bf16.msra.mxu0 0
    %392 = vmatprep.subr.bf16.mxu0 0
    %393 = vmatpush2.bf16.msra.mxu0 0
    %394 = vmatprep.subr.bf16.mxu0 0
    %395 = vmatpush2.bf16.msra.mxu0 0
    %396 = vmatprep.subr.bf16.mxu0 0
    %397 = vmatpush2.bf16.msra.mxu0 0
    %398 = vmatprep.subr.bf16.mxu0 0
    %399 = vmatpush2.bf16.msra.mxu0 0
    %400 = vmatprep.subr.bf16.mxu0 0
    %401 = vmatpush2.bf16.msra.mxu0 0
    %402 = vmatprep.mubr.bf16.mxu0 0
    %403 = vmatmul.mubr.bf16.gmra.mxu0 %v146
    %v404 = vpop.f32.mrf.mxu0
    %v405 = vadd.f32 %v285, %v404
    %v406 = vpop.f32.mrf.mxu0
    %v407 = vadd.f32 %v289, %v406
    %v408 = vpop.f32.mrf.mxu0
    %v409 = vadd.f32 %v285, %v408
    %v410 = vpop.f32.mrf.mxu0
    %v411 = vadd.f32 %v289, %v410
    %412 = vdwg.mxu0
    %417 = vrot.lane.b32.xlu0 %v252, 96
    %v418 = vpop.permute.xlu0 %417
    %419 = vrot.lane.b32.xlu0 %v255, 96
    %v420 = vpop.permute.xlu0 %419
    %421 = vrot.lane.b32.xlu0 %v260, 96
    %v422 = vpop.permute.xlu0 %421
    %423 = vrot.lane.b32.xlu0 %v263, 96
    %v424 = vpop.permute.xlu0 %423
    %429 = vrot.lane.b32.xlu0 %v252, 64
    %v430 = vpop.permute.xlu0 %429
    %431 = vrot.lane.b32.xlu0 %v255, 64
    %v432 = vpop.permute.xlu0 %431
    %433 = vrot.lane.b32.xlu0 %v260, 64
    %v434 = vpop.permute.xlu0 %433
    %435 = vrot.lane.b32.xlu0 %v263, 64
    %v436 = vpop.permute.xlu0 %435
    %441 = vrot.lane.b32.xlu0 %v252, 32
    %v442 = vpop.permute.xlu0 %441
    %443 = vrot.lane.b32.xlu0 %v255, 32
    %v444 = vpop.permute.xlu0 %443
    %445 = vrot.lane.b32.xlu0 %v260, 32
    %v446 = vpop.permute.xlu0 %445
    %447 = vrot.lane.b32.xlu0 %v263, 32
    %v448 = vpop.permute.xlu0 %447
    %v453 = vcombine.low %v252, %v430
    %v454 = vcombine.high %v252, %v430
    %v456 = vunpack.c.l.s4 1983009808
    %v457 = vunpack.c.0.s8 %v456
    %v458 = vlaneseq
    %v459 = vshrl.u32 %v458, 7
    %v460 = vsub.s32 %v457, %v459
    %v461 = vrot.slane %v453, %v460
    %v463 = vunpack.c.l.s4 1983009808
    %v464 = vunpack.c.0.s8 %v463
    %v465 = vlaneseq
    %v466 = vshrl.u32 %v465, 7
    %v467 = vsub.s32 %v464, %v466
    %v468 = vrot.slane %v454, %v467
    %v469 = vcombine.low %v418, %v442
    %v470 = vcombine.high %v418, %v442
    %v472 = vunpack.c.l.s4 1983009808
    %v473 = vunpack.c.0.s8 %v472
    %v474 = vlaneseq
    %v475 = vshrl.u32 %v474, 7
    %v476 = vsub.s32 %v473, %v475
    %v477 = vrot.slane %v469, %v476
    %v479 = vunpack.c.l.s4 1983009808
    %v480 = vunpack.c.0.s8 %v479
    %v481 = vlaneseq
    %v482 = vshrl.u32 %v481, 7
    %v483 = vsub.s32 %v480, %v482
    %v484 = vrot.slane %v470, %v483
    %v485 = vcombine.low %v461, %v477
    %v486 = vcombine.high %v461, %v477
    %v488 = vunpack.c.l.s4 1934713408
    %v489 = vunpack.c.0.s8 %v488
    %v490 = vlaneseq
    %v491 = vshrl.u32 %v490, 7
    %v492 = vsub.s32 %v489, %v491
    %v493 = vrot.slane %v485, %v492
    %v495 = vunpack.c.l.s4 1934713408
    %v496 = vunpack.c.0.s8 %v495
    %v497 = vlaneseq
    %v498 = vshrl.u32 %v497, 7
    %v499 = vsub.s32 %v496, %v498
    %v500 = vrot.slane %v486, %v499
    %v501 = vcombine.low %v468, %v484
    %v502 = vcombine.high %v468, %v484
    %v504 = vunpack.c.l.s4 1934713408
    %v505 = vunpack.c.0.s8 %v504
    %v506 = vlaneseq
    %v507 = vshrl.u32 %v506, 7
    %v508 = vsub.s32 %v505, %v507
    %v509 = vrot.slane %v501, %v508
    %v511 = vunpack.c.l.s4 1934713408
    %v512 = vunpack.c.0.s8 %v511
    %v513 = vlaneseq
    %v514 = vshrl.u32 %v513, 7
    %v515 = vsub.s32 %v512, %v514
    %v516 = vrot.slane %v502, %v515
    %v517 = vcombine.high %v493, 0.0
    %v518 = vcombine.high %v500, 0.0
    %v519 = vcombine.high %v509, 0.0
    %v520 = vcombine.high %v516, 0.0
    %v521 = vcombine.low %v255, %v432
    %v522 = vcombine.high %v255, %v432
    %v524 = vunpack.c.l.s4 1983009808
    %v525 = vunpack.c.0.s8 %v524
    %v526 = vlaneseq
    %v527 = vshrl.u32 %v526, 7
    %v528 = vsub.s32 %v525, %v527
    %v529 = vrot.slane %v521, %v528
    %v531 = vunpack.c.l.s4 1983009808
    %v532 = vunpack.c.0.s8 %v531
    %v533 = vlaneseq
    %v534 = vshrl.u32 %v533, 7
    %v535 = vsub.s32 %v532, %v534
    %v536 = vrot.slane %v522, %v535
    %v537 = vcombine.low %v420, %v444
    %v538 = vcombine.high %v420, %v444
    %v540 = vunpack.c.l.s4 1983009808
    %v541 = vunpack.c.0.s8 %v540
    %v542 = vlaneseq
    %v543 = vshrl.u32 %v542, 7
    %v544 = vsub.s32 %v541, %v543
    %v545 = vrot.slane %v537, %v544
    %v547 = vunpack.c.l.s4 1983009808
    %v548 = vunpack.c.0.s8 %v547
    %v549 = vlaneseq
    %v550 = vshrl.u32 %v549, 7
    %v551 = vsub.s32 %v548, %v550
    %v552 = vrot.slane %v538, %v551
    %v553 = vcombine.low %v529, %v545
    %v554 = vcombine.high %v529, %v545
    %v556 = vunpack.c.l.s4 1934713408
    %v557 = vunpack.c.0.s8 %v556
    %v558 = vlaneseq
    %v559 = vshrl.u32 %v558, 7
    %v560 = vsub.s32 %v557, %v559
    %v561 = vrot.slane %v553, %v560
    %v563 = vunpack.c.l.s4 1934713408
    %v564 = vunpack.c.0.s8 %v563
    %v565 = vlaneseq
    %v566 = vshrl.u32 %v565, 7
    %v567 = vsub.s32 %v564, %v566
    %v568 = vrot.slane %v554, %v567
    %v569 = vcombine.low %v536, %v552
    %v570 = vcombine.high %v536, %v552
    %v572 = vunpack.c.l.s4 1934713408
    %v573 = vunpack.c.0.s8 %v572
    %v574 = vlaneseq
    %v575 = vshrl.u32 %v574, 7
    %v576 = vsub.s32 %v573, %v575
    %v577 = vrot.slane %v569, %v576
    %v579 = vunpack.c.l.s4 1934713408
    %v580 = vunpack.c.0.s8 %v579
    %v581 = vlaneseq
    %v582 = vshrl.u32 %v581, 7
    %v583 = vsub.s32 %v580, %v582
    %v584 = vrot.slane %v570, %v583
    %v585 = vcombine.high %v561, 0.0
    %v586 = vcombine.high %v568, 0.0
    %v587 = vcombine.high %v577, 0.0
    %v588 = vcombine.high %v584, 0.0
    %v589 = vcombine.low %v260, %v434
    %v590 = vcombine.high %v260, %v434
    %v592 = vunpack.c.l.s4 1983009808
    %v593 = vunpack.c.0.s8 %v592
    %v594 = vlaneseq
    %v595 = vshrl.u32 %v594, 7
    %v596 = vsub.s32 %v593, %v595
    %v597 = vrot.slane %v589, %v596
    %v599 = vunpack.c.l.s4 1983009808
    %v600 = vunpack.c.0.s8 %v599
    %v601 = vlaneseq
    %v602 = vshrl.u32 %v601, 7
    %v603 = vsub.s32 %v600, %v602
    %v604 = vrot.slane %v590, %v603
    %v605 = vcombine.low %v422, %v446
    %v606 = vcombine.high %v422, %v446
    %v608 = vunpack.c.l.s4 1983009808
    %v609 = vunpack.c.0.s8 %v608
    %v610 = vlaneseq
    %v611 = vshrl.u32 %v610, 7
    %v612 = vsub.s32 %v609, %v611
    %v613 = vrot.slane %v605, %v612
    %v615 = vunpack.c.l.s4 1983009808
    %v616 = vunpack.c.0.s8 %v615
    %v617 = vlaneseq
    %v618 = vshrl.u32 %v617, 7
    %v619 = vsub.s32 %v616, %v618
    %v620 = vrot.slane %v606, %v619
    %v621 = vcombine.low %v597, %v613
    %v622 = vcombine.high %v597, %v613
    %v624 = vunpack.c.l.s4 1934713408
    %v625 = vunpack.c.0.s8 %v624
    %v626 = vlaneseq
    %v627 = vshrl.u32 %v626, 7
    %v628 = vsub.s32 %v625, %v627
    %v629 = vrot.slane %v621, %v628
    %v631 = vunpack.c.l.s4 1934713408
    %v632 = vunpack.c.0.s8 %v631
    %v633 = vlaneseq
    %v634 = vshrl.u32 %v633, 7
    %v635 = vsub.s32 %v632, %v634
    %v636 = vrot.slane %v622, %v635
    %v637 = vcombine.low %v604, %v620
    %v638 = vcombine.high %v604, %v620
    %v640 = vunpack.c.l.s4 1934713408
    %v641 = vunpack.c.0.s8 %v640
    %v642 = vlaneseq
    %v643 = vshrl.u32 %v642, 7
    %v644 = vsub.s32 %v641, %v643
    %v645 = vrot.slane %v637, %v644
    %v647 = vunpack.c.l.s4 1934713408
    %v648 = vunpack.c.0.s8 %v647
    %v649 = vlaneseq
    %v650 = vshrl.u32 %v649, 7
    %v651 = vsub.s32 %v648, %v650
    %v652 = vrot.slane %v638, %v651
    %v653 = vcombine.high %v629, 0.0
    %v654 = vcombine.high %v636, 0.0
    %v655 = vcombine.high %v645, 0.0
    %v656 = vcombine.high %v652, 0.0
    %v657 = vcombine.low %v263, %v436
    %v658 = vcombine.high %v263, %v436
    %v660 = vunpack.c.l.s4 1983009808
    %v661 = vunpack.c.0.s8 %v660
    %v662 = vlaneseq
    %v663 = vshrl.u32 %v662, 7
    %v664 = vsub.s32 %v661, %v663
    %v665 = vrot.slane %v657, %v664
    %v667 = vunpack.c.l.s4 1983009808
    %v668 = vunpack.c.0.s8 %v667
    %v669 = vlaneseq
    %v670 = vshrl.u32 %v669, 7
    %v671 = vsub.s32 %v668, %v670
    %v672 = vrot.slane %v658, %v671
    %v673 = vcombine.low %v424, %v448
    %v674 = vcombine.high %v424, %v448
    %v676 = vunpack.c.l.s4 1983009808
    %v677 = vunpack.c.0.s8 %v676
    %v678 = vlaneseq
    %v679 = vshrl.u32 %v678, 7
    %v680 = vsub.s32 %v677, %v679
    %v681 = vrot.slane %v673, %v680
    %v683 = vunpack.c.l.s4 1983009808
    %v684 = vunpack.c.0.s8 %v683
    %v685 = vlaneseq
    %v686 = vshrl.u32 %v685, 7
    %v687 = vsub.s32 %v684, %v686
    %v688 = vrot.slane %v674, %v687
    %v689 = vcombine.low %v665, %v681
    %v690 = vcombine.high %v665, %v681
    %v692 = vunpack.c.l.s4 1934713408
    %v693 = vunpack.c.0.s8 %v692
    %v694 = vlaneseq
    %v695 = vshrl.u32 %v694, 7
    %v696 = vsub.s32 %v693, %v695
    %v697 = vrot.slane %v689, %v696
    %v699 = vunpack.c.l.s4 1934713408
    %v700 = vunpack.c.0.s8 %v699
    %v701 = vlaneseq
    %v702 = vshrl.u32 %v701, 7
    %v703 = vsub.s32 %v700, %v702
    %v704 = vrot.slane %v690, %v703
    %v705 = vcombine.low %v672, %v688
    %v706 = vcombine.high %v672, %v688
    %v708 = vunpack.c.l.s4 1934713408
    %v709 = vunpack.c.0.s8 %v708
    %v710 = vlaneseq
    %v711 = vshrl.u32 %v710, 7
    %v712 = vsub.s32 %v709, %v711
    %v713 = vrot.slane %v705, %v712
    %v715 = vunpack.c.l.s4 1934713408
    %v716 = vunpack.c.0.s8 %v715
    %v717 = vlaneseq
    %v718 = vshrl.u32 %v717, 7
    %v719 = vsub.s32 %v716, %v718
    %v720 = vrot.slane %v706, %v719
    %v721 = vcombine.high %v697, 0.0
    %v722 = vcombine.high %v704, 0.0
    %v723 = vcombine.high %v713, 0.0
    %v724 = vcombine.high %v720, 0.0
    %v725 = vcombine.low %v493, %v500
    %v727 = vunpack.c.l.s4 1983009808
    %v728 = vunpack.c.0.s8 %v727
    %v729 = vlaneseq
    %v730 = vshrl.u32 %v729, 7
    %v731 = vsub.s32 %v728, %v730
    %v732 = vrot.slane %v725, %v731
    %v733 = vcombine.low %v517, %v518
    %v735 = vunpack.c.l.s4 1983009808
    %v736 = vunpack.c.0.s8 %v735
    %v737 = vlaneseq
    %v738 = vshrl.u32 %v737, 7
    %v739 = vsub.s32 %v736, %v738
    %v740 = vrot.slane %v733, %v739
    %v741 = vcombine.low %v509, %v516
    %v743 = vunpack.c.l.s4 1983009808
    %v744 = vunpack.c.0.s8 %v743
    %v745 = vlaneseq
    %v746 = vshrl.u32 %v745, 7
    %v747 = vsub.s32 %v744, %v746
    %v748 = vrot.slane %v741, %v747
    %v749 = vcombine.low %v519, %v520
    %v751 = vunpack.c.l.s4 1983009808
    %v752 = vunpack.c.0.s8 %v751
    %v753 = vlaneseq
    %v754 = vshrl.u32 %v753, 7
    %v755 = vsub.s32 %v752, %v754
    %v756 = vrot.slane %v749, %v755
    %v757 = vcombine.low %v732, %v740
    %v758 = vcombine.high %v732, %v740
    %v760 = vunpack.c.l.s4 1934713408
    %v761 = vunpack.c.0.s8 %v760
    %v762 = vlaneseq
    %v763 = vshrl.u32 %v762, 7
    %v764 = vsub.s32 %v761, %v763
    %v765 = vrot.slane %v757, %v764
    %v767 = vunpack.c.l.s4 1934713408
    %v768 = vunpack.c.0.s8 %v767
    %v769 = vlaneseq
    %v770 = vshrl.u32 %v769, 7
    %v771 = vsub.s32 %v768, %v770
    %v772 = vrot.slane %v758, %v771
    %v773 = vcombine.low %v748, %v756
    %v774 = vcombine.high %v748, %v756
    %v776 = vunpack.c.l.s4 1934713408
    %v777 = vunpack.c.0.s8 %v776
    %v778 = vlaneseq
    %v779 = vshrl.u32 %v778, 7
    %v780 = vsub.s32 %v777, %v779
    %v781 = vrot.slane %v773, %v780
    %v783 = vunpack.c.l.s4 1934713408
    %v784 = vunpack.c.0.s8 %v783
    %v785 = vlaneseq
    %v786 = vshrl.u32 %v785, 7
    %v787 = vsub.s32 %v784, %v786
    %v788 = vrot.slane %v774, %v787
    %v789 = vcombine.low %v765, %v781
    %v790 = vcombine.high %v765, %v781
    %v791 = vcombine.low %v772, %v788
    %v792 = vcombine.high %v772, %v788
    %v793 = vcombine.low %v561, %v568
    %v795 = vunpack.c.l.s4 1983009808
    %v796 = vunpack.c.0.s8 %v795
    %v797 = vlaneseq
    %v798 = vshrl.u32 %v797, 7
    %v799 = vsub.s32 %v796, %v798
    %v800 = vrot.slane %v793, %v799
    %v801 = vcombine.low %v585, %v586
    %v803 = vunpack.c.l.s4 1983009808
    %v804 = vunpack.c.0.s8 %v803
    %v805 = vlaneseq
    %v806 = vshrl.u32 %v805, 7
    %v807 = vsub.s32 %v804, %v806
    %v808 = vrot.slane %v801, %v807
    %v809 = vcombine.low %v577, %v584
    %v811 = vunpack.c.l.s4 1983009808
    %v812 = vunpack.c.0.s8 %v811
    %v813 = vlaneseq
    %v814 = vshrl.u32 %v813, 7
    %v815 = vsub.s32 %v812, %v814
    %v816 = vrot.slane %v809, %v815
    %v817 = vcombine.low %v587, %v588
    %v819 = vunpack.c.l.s4 1983009808
    %v820 = vunpack.c.0.s8 %v819
    %v821 = vlaneseq
    %v822 = vshrl.u32 %v821, 7
    %v823 = vsub.s32 %v820, %v822
    %v824 = vrot.slane %v817, %v823
    %v825 = vcombine.low %v800, %v808
    %v826 = vcombine.high %v800, %v808
    %v828 = vunpack.c.l.s4 1934713408
    %v829 = vunpack.c.0.s8 %v828
    %v830 = vlaneseq
    %v831 = vshrl.u32 %v830, 7
    %v832 = vsub.s32 %v829, %v831
    %v833 = vrot.slane %v825, %v832
    %v835 = vunpack.c.l.s4 1934713408
    %v836 = vunpack.c.0.s8 %v835
    %v837 = vlaneseq
    %v838 = vshrl.u32 %v837, 7
    %v839 = vsub.s32 %v836, %v838
    %v840 = vrot.slane %v826, %v839
    %v841 = vcombine.low %v816, %v824
    %v842 = vcombine.high %v816, %v824
    %v844 = vunpack.c.l.s4 1934713408
    %v845 = vunpack.c.0.s8 %v844
    %v846 = vlaneseq
    %v847 = vshrl.u32 %v846, 7
    %v848 = vsub.s32 %v845, %v847
    %v849 = vrot.slane %v841, %v848
    %v851 = vunpack.c.l.s4 1934713408
    %v852 = vunpack.c.0.s8 %v851
    %v853 = vlaneseq
    %v854 = vshrl.u32 %v853, 7
    %v855 = vsub.s32 %v852, %v854
    %v856 = vrot.slane %v842, %v855
    %v857 = vcombine.low %v833, %v849
    %v858 = vcombine.high %v833, %v849
    %v859 = vcombine.low %v840, %v856
    %v860 = vcombine.high %v840, %v856
    %v861 = vcombine.low %v629, %v636
    %v863 = vunpack.c.l.s4 1983009808
    %v864 = vunpack.c.0.s8 %v863
    %v865 = vlaneseq
    %v866 = vshrl.u32 %v865, 7
    %v867 = vsub.s32 %v864, %v866
    %v868 = vrot.slane %v861, %v867
    %v869 = vcombine.low %v653, %v654
    %v871 = vunpack.c.l.s4 1983009808
    %v872 = vunpack.c.0.s8 %v871
    %v873 = vlaneseq
    %v874 = vshrl.u32 %v873, 7
    %v875 = vsub.s32 %v872, %v874
    %v876 = vrot.slane %v869, %v875
    %v877 = vcombine.low %v645, %v652
    %v879 = vunpack.c.l.s4 1983009808
    %v880 = vunpack.c.0.s8 %v879
    %v881 = vlaneseq
    %v882 = vshrl.u32 %v881, 7
    %v883 = vsub.s32 %v880, %v882
    %v884 = vrot.slane %v877, %v883
    %v885 = vcombine.low %v655, %v656
    %v887 = vunpack.c.l.s4 1983009808
    %v888 = vunpack.c.0.s8 %v887
    %v889 = vlaneseq
    %v890 = vshrl.u32 %v889, 7
    %v891 = vsub.s32 %v888, %v890
    %v892 = vrot.slane %v885, %v891
    %v893 = vcombine.low %v868, %v876
    %v894 = vcombine.high %v868, %v876
    %v896 = vunpack.c.l.s4 1934713408
    %v897 = vunpack.c.0.s8 %v896
    %v898 = vlaneseq
    %v899 = vshrl.u32 %v898, 7
    %v900 = vsub.s32 %v897, %v899
    %v901 = vrot.slane %v893, %v900
    %v903 = vunpack.c.l.s4 1934713408
    %v904 = vunpack.c.0.s8 %v903
    %v905 = vlaneseq
    %v906 = vshrl.u32 %v905, 7
    %v907 = vsub.s32 %v904, %v906
    %v908 = vrot.slane %v894, %v907
    %v909 = vcombine.low %v884, %v892
    %v910 = vcombine.high %v884, %v892
    %v912 = vunpack.c.l.s4 1934713408
    %v913 = vunpack.c.0.s8 %v912
    %v914 = vlaneseq
    %v915 = vshrl.u32 %v914, 7
    %v916 = vsub.s32 %v913, %v915
    %v917 = vrot.slane %v909, %v916
    %v919 = vunpack.c.l.s4 1934713408
    %v920 = vunpack.c.0.s8 %v919
    %v921 = vlaneseq
    %v922 = vshrl.u32 %v921, 7
    %v923 = vsub.s32 %v920, %v922
    %v924 = vrot.slane %v910, %v923
    %v925 = vcombine.low %v901, %v917
    %v926 = vcombine.high %v901, %v917
    %v927 = vcombine.low %v908, %v924
    %v928 = vcombine.high %v908, %v924
    %v929 = vcombine.low %v697, %v704
    %v931 = vunpack.c.l.s4 1983009808
    %v932 = vunpack.c.0.s8 %v931
    %v933 = vlaneseq
    %v934 = vshrl.u32 %v933, 7
    %v935 = vsub.s32 %v932, %v934
    %v936 = vrot.slane %v929, %v935
    %v937 = vcombine.low %v721, %v722
    %v939 = vunpack.c.l.s4 1983009808
    %v940 = vunpack.c.0.s8 %v939
    %v941 = vlaneseq
    %v942 = vshrl.u32 %v941, 7
    %v943 = vsub.s32 %v940, %v942
    %v944 = vrot.slane %v937, %v943
    %v945 = vcombine.low %v713, %v720
    %v947 = vunpack.c.l.s4 1983009808
    %v948 = vunpack.c.0.s8 %v947
    %v949 = vlaneseq
    %v950 = vshrl.u32 %v949, 7
    %v951 = vsub.s32 %v948, %v950
    %v952 = vrot.slane %v945, %v951
    %v953 = vcombine.low %v723, %v724
    %v955 = vunpack.c.l.s4 1983009808
    %v956 = vunpack.c.0.s8 %v955
    %v957 = vlaneseq
    %v958 = vshrl.u32 %v957, 7
    %v959 = vsub.s32 %v956, %v958
    %v960 = vrot.slane %v953, %v959
    %v961 = vcombine.low %v936, %v944
    %v962 = vcombine.high %v936, %v944
    %v964 = vunpack.c.l.s4 1934713408
    %v965 = vunpack.c.0.s8 %v964
    %v966 = vlaneseq
    %v967 = vshrl.u32 %v966, 7
    %v968 = vsub.s32 %v965, %v967
    %v969 = vrot.slane %v961, %v968
    %v971 = vunpack.c.l.s4 1934713408
    %v972 = vunpack.c.0.s8 %v971
    %v973 = vlaneseq
    %v974 = vshrl.u32 %v973, 7
    %v975 = vsub.s32 %v972, %v974
    %v976 = vrot.slane %v962, %v975
    %v977 = vcombine.low %v952, %v960
    %v978 = vcombine.high %v952, %v960
    %v980 = vunpack.c.l.s4 1934713408
    %v981 = vunpack.c.0.s8 %v980
    %v982 = vlaneseq
    %v983 = vshrl.u32 %v982, 7
    %v984 = vsub.s32 %v981, %v983
    %v985 = vrot.slane %v977, %v984
    %v987 = vunpack.c.l.s4 1934713408
    %v988 = vunpack.c.0.s8 %v987
    %v989 = vlaneseq
    %v990 = vshrl.u32 %v989, 7
    %v991 = vsub.s32 %v988, %v990
    %v992 = vrot.slane %v978, %v991
    %v993 = vcombine.low %v969, %v985
    %v994 = vcombine.high %v969, %v985
    %v995 = vcombine.low %v976, %v992
    %v996 = vcombine.high %v976, %v992
    %v997 = vpack.c.bf16 %v857, %v789
    %v998 = vpack.c.bf16 %v858, %v790
    %v999 = vpack.c.bf16 %v859, %v791
    %v1000 = vpack.c.bf16 %v860, %v792
    %v1001 = vpack.c.bf16 %v993, %v925
    %v1002 = vpack.c.bf16 %v994, %v926
    %v1003 = vpack.c.bf16 %v995, %v927
    %v1004 = vpack.c.bf16 %v996, %v928
    %1007 = vrot.lane.b32.xlu0 %v405, 96
    %v1008 = vpop.permute.xlu0 %1007
    %1009 = vrot.lane.b32.xlu0 %v409, 96
    %v1010 = vpop.permute.xlu0 %1009
    %1013 = vrot.lane.b32.xlu0 %v405, 64
    %v1014 = vpop.permute.xlu0 %1013
    %1015 = vrot.lane.b32.xlu0 %v409, 64
    %v1016 = vpop.permute.xlu0 %1015
    %1019 = vrot.lane.b32.xlu0 %v405, 32
    %v1020 = vpop.permute.xlu0 %1019
    %1021 = vrot.lane.b32.xlu0 %v409, 32
    %v1022 = vpop.permute.xlu0 %1021
    %v1025 = vcombine.low %v405, %v1014
    %v1026 = vcombine.high %v405, %v1014
    %v1028 = vunpack.c.l.s4 1983009808
    %v1029 = vunpack.c.0.s8 %v1028
    %v1030 = vlaneseq
    %v1031 = vshrl.u32 %v1030, 7
    %v1032 = vsub.s32 %v1029, %v1031
    %v1033 = vrot.slane %v1025, %v1032
    %v1035 = vunpack.c.l.s4 1983009808
    %v1036 = vunpack.c.0.s8 %v1035
    %v1037 = vlaneseq
    %v1038 = vshrl.u32 %v1037, 7
    %v1039 = vsub.s32 %v1036, %v1038
    %v1040 = vrot.slane %v1026, %v1039
    %v1041 = vcombine.low %v1008, %v1020
    %v1042 = vcombine.high %v1008, %v1020
    %v1044 = vunpack.c.l.s4 1983009808
    %v1045 = vunpack.c.0.s8 %v1044
    %v1046 = vlaneseq
    %v1047 = vshrl.u32 %v1046, 7
    %v1048 = vsub.s32 %v1045, %v1047
    %v1049 = vrot.slane %v1041, %v1048
    %v1051 = vunpack.c.l.s4 1983009808
    %v1052 = vunpack.c.0.s8 %v1051
    %v1053 = vlaneseq
    %v1054 = vshrl.u32 %v1053, 7
    %v1055 = vsub.s32 %v1052, %v1054
    %v1056 = vrot.slane %v1042, %v1055
    %v1057 = vcombine.low %v1033, %v1049
    %v1058 = vcombine.high %v1033, %v1049
    %v1060 = vunpack.c.l.s4 1934713408
    %v1061 = vunpack.c.0.s8 %v1060
    %v1062 = vlaneseq
    %v1063 = vshrl.u32 %v1062, 7
    %v1064 = vsub.s32 %v1061, %v1063
    %v1065 = vrot.slane %v1057, %v1064
    %v1067 = vunpack.c.l.s4 1934713408
    %v1068 = vunpack.c.0.s8 %v1067
    %v1069 = vlaneseq
    %v1070 = vshrl.u32 %v1069, 7
    %v1071 = vsub.s32 %v1068, %v1070
    %v1072 = vrot.slane %v1058, %v1071
    %v1073 = vcombine.low %v1040, %v1056
    %v1074 = vcombine.high %v1040, %v1056
    %v1076 = vunpack.c.l.s4 1934713408
    %v1077 = vunpack.c.0.s8 %v1076
    %v1078 = vlaneseq
    %v1079 = vshrl.u32 %v1078, 7
    %v1080 = vsub.s32 %v1077, %v1079
    %v1081 = vrot.slane %v1073, %v1080
    %v1083 = vunpack.c.l.s4 1934713408
    %v1084 = vunpack.c.0.s8 %v1083
    %v1085 = vlaneseq
    %v1086 = vshrl.u32 %v1085, 7
    %v1087 = vsub.s32 %v1084, %v1086
    %v1088 = vrot.slane %v1074, %v1087
    %v1089 = vcombine.high %v1065, 0.0
    %v1090 = vcombine.high %v1072, 0.0
    %v1091 = vcombine.high %v1081, 0.0
    %v1092 = vcombine.high %v1088, 0.0
    %v1093 = vcombine.low %v409, %v1016
    %v1094 = vcombine.high %v409, %v1016
    %v1096 = vunpack.c.l.s4 1983009808
    %v1097 = vunpack.c.0.s8 %v1096
    %v1098 = vlaneseq
    %v1099 = vshrl.u32 %v1098, 7
    %v1100 = vsub.s32 %v1097, %v1099
    %v1101 = vrot.slane %v1093, %v1100
    %v1103 = vunpack.c.l.s4 1983009808
    %v1104 = vunpack.c.0.s8 %v1103
    %v1105 = vlaneseq
    %v1106 = vshrl.u32 %v1105, 7
    %v1107 = vsub.s32 %v1104, %v1106
    %v1108 = vrot.slane %v1094, %v1107
    %v1109 = vcombine.low %v1010, %v1022
    %v1110 = vcombine.high %v1010, %v1022
    %v1112 = vunpack.c.l.s4 1983009808
    %v1113 = vunpack.c.0.s8 %v1112
    %v1114 = vlaneseq
    %v1115 = vshrl.u32 %v1114, 7
    %v1116 = vsub.s32 %v1113, %v1115
    %v1117 = vrot.slane %v1109, %v1116
    %v1119 = vunpack.c.l.s4 1983009808
    %v1120 = vunpack.c.0.s8 %v1119
    %v1121 = vlaneseq
    %v1122 = vshrl.u32 %v1121, 7
    %v1123 = vsub.s32 %v1120, %v1122
    %v1124 = vrot.slane %v1110, %v1123
    %v1125 = vcombine.low %v1101, %v1117
    %v1126 = vcombine.high %v1101, %v1117
    %v1128 = vunpack.c.l.s4 1934713408
    %v1129 = vunpack.c.0.s8 %v1128
    %v1130 = vlaneseq
    %v1131 = vshrl.u32 %v1130, 7
    %v1132 = vsub.s32 %v1129, %v1131
    %v1133 = vrot.slane %v1125, %v1132
    %v1135 = vunpack.c.l.s4 1934713408
    %v1136 = vunpack.c.0.s8 %v1135
    %v1137 = vlaneseq
    %v1138 = vshrl.u32 %v1137, 7
    %v1139 = vsub.s32 %v1136, %v1138
    %v1140 = vrot.slane %v1126, %v1139
    %v1141 = vcombine.low %v1108, %v1124
    %v1142 = vcombine.high %v1108, %v1124
    %v1144 = vunpack.c.l.s4 1934713408
    %v1145 = vunpack.c.0.s8 %v1144
    %v1146 = vlaneseq
    %v1147 = vshrl.u32 %v1146, 7
    %v1148 = vsub.s32 %v1145, %v1147
    %v1149 = vrot.slane %v1141, %v1148
    %v1151 = vunpack.c.l.s4 1934713408
    %v1152 = vunpack.c.0.s8 %v1151
    %v1153 = vlaneseq
    %v1154 = vshrl.u32 %v1153, 7
    %v1155 = vsub.s32 %v1152, %v1154
    %v1156 = vrot.slane %v1142, %v1155
    %v1157 = vcombine.high %v1133, 0.0
    %v1158 = vcombine.high %v1140, 0.0
    %v1159 = vcombine.high %v1149, 0.0
    %v1160 = vcombine.high %v1156, 0.0
    %v1161 = vcombine.low %v1065, %v1072
    %v1163 = vunpack.c.l.s4 1983009808
    %v1164 = vunpack.c.0.s8 %v1163
    %v1165 = vlaneseq
    %v1166 = vshrl.u32 %v1165, 7
    %v1167 = vsub.s32 %v1164, %v1166
    %v1168 = vrot.slane %v1161, %v1167
    %v1169 = vcombine.low %v1089, %v1090
    %v1171 = vunpack.c.l.s4 1983009808
    %v1172 = vunpack.c.0.s8 %v1171
    %v1173 = vlaneseq
    %v1174 = vshrl.u32 %v1173, 7
    %v1175 = vsub.s32 %v1172, %v1174
    %v1176 = vrot.slane %v1169, %v1175
    %v1177 = vcombine.low %v1081, %v1088
    %v1179 = vunpack.c.l.s4 1983009808
    %v1180 = vunpack.c.0.s8 %v1179
    %v1181 = vlaneseq
    %v1182 = vshrl.u32 %v1181, 7
    %v1183 = vsub.s32 %v1180, %v1182
    %v1184 = vrot.slane %v1177, %v1183
    %v1185 = vcombine.low %v1091, %v1092
    %v1187 = vunpack.c.l.s4 1983009808
    %v1188 = vunpack.c.0.s8 %v1187
    %v1189 = vlaneseq
    %v1190 = vshrl.u32 %v1189, 7
    %v1191 = vsub.s32 %v1188, %v1190
    %v1192 = vrot.slane %v1185, %v1191
    %v1193 = vcombine.low %v1168, %v1176
    %v1194 = vcombine.high %v1168, %v1176
    %v1196 = vunpack.c.l.s4 1934713408
    %v1197 = vunpack.c.0.s8 %v1196
    %v1198 = vlaneseq
    %v1199 = vshrl.u32 %v1198, 7
    %v1200 = vsub.s32 %v1197, %v1199
    %v1201 = vrot.slane %v1193, %v1200
    %v1203 = vunpack.c.l.s4 1934713408
    %v1204 = vunpack.c.0.s8 %v1203
    %v1205 = vlaneseq
    %v1206 = vshrl.u32 %v1205, 7
    %v1207 = vsub.s32 %v1204, %v1206
    %v1208 = vrot.slane %v1194, %v1207
    %v1209 = vcombine.low %v1184, %v1192
    %v1210 = vcombine.high %v1184, %v1192
    %v1212 = vunpack.c.l.s4 1934713408
    %v1213 = vunpack.c.0.s8 %v1212
    %v1214 = vlaneseq
    %v1215 = vshrl.u32 %v1214, 7
    %v1216 = vsub.s32 %v1213, %v1215
    %v1217 = vrot.slane %v1209, %v1216
    %v1219 = vunpack.c.l.s4 1934713408
    %v1220 = vunpack.c.0.s8 %v1219
    %v1221 = vlaneseq
    %v1222 = vshrl.u32 %v1221, 7
    %v1223 = vsub.s32 %v1220, %v1222
    %v1224 = vrot.slane %v1210, %v1223
    %v1225 = vcombine.low %v1201, %v1217
    %v1226 = vcombine.high %v1201, %v1217
    %v1227 = vcombine.low %v1208, %v1224
    %v1228 = vcombine.high %v1208, %v1224
    %v1229 = vcombine.low %v1133, %v1140
    %v1231 = vunpack.c.l.s4 1983009808
    %v1232 = vunpack.c.0.s8 %v1231
    %v1233 = vlaneseq
    %v1234 = vshrl.u32 %v1233, 7
    %v1235 = vsub.s32 %v1232, %v1234
    %v1236 = vrot.slane %v1229, %v1235
    %v1237 = vcombine.low %v1157, %v1158
    %v1239 = vunpack.c.l.s4 1983009808
    %v1240 = vunpack.c.0.s8 %v1239
    %v1241 = vlaneseq
    %v1242 = vshrl.u32 %v1241, 7
    %v1243 = vsub.s32 %v1240, %v1242
    %v1244 = vrot.slane %v1237, %v1243
    %v1245 = vcombine.low %v1149, %v1156
    %v1247 = vunpack.c.l.s4 1983009808
    %v1248 = vunpack.c.0.s8 %v1247
    %v1249 = vlaneseq
    %v1250 = vshrl.u32 %v1249, 7
    %v1251 = vsub.s32 %v1248, %v1250
    %v1252 = vrot.slane %v1245, %v1251
    %v1253 = vcombine.low %v1159, %v1160
    %v1255 = vunpack.c.l.s4 1983009808
    %v1256 = vunpack.c.0.s8 %v1255
    %v1257 = vlaneseq
    %v1258 = vshrl.u32 %v1257, 7
    %v1259 = vsub.s32 %v1256, %v1258
    %v1260 = vrot.slane %v1253, %v1259
    %v1261 = vcombine.low %v1236, %v1244
    %v1262 = vcombine.high %v1236, %v1244
    %v1264 = vunpack.c.l.s4 1934713408
    %v1265 = vunpack.c.0.s8 %v1264
    %v1266 = vlaneseq
    %v1267 = vshrl.u32 %v1266, 7
    %v1268 = vsub.s32 %v1265, %v1267
    %v1269 = vrot.slane %v1261, %v1268
    %v1271 = vunpack.c.l.s4 1934713408
    %v1272 = vunpack.c.0.s8 %v1271
    %v1273 = vlaneseq
    %v1274 = vshrl.u32 %v1273, 7
    %v1275 = vsub.s32 %v1272, %v1274
    %v1276 = vrot.slane %v1262, %v1275
    %v1277 = vcombine.low %v1252, %v1260
    %v1278 = vcombine.high %v1252, %v1260
    %v1280 = vunpack.c.l.s4 1934713408
    %v1281 = vunpack.c.0.s8 %v1280
    %v1282 = vlaneseq
    %v1283 = vshrl.u32 %v1282, 7
    %v1284 = vsub.s32 %v1281, %v1283
    %v1285 = vrot.slane %v1277, %v1284
    %v1287 = vunpack.c.l.s4 1934713408
    %v1288 = vunpack.c.0.s8 %v1287
    %v1289 = vlaneseq
    %v1290 = vshrl.u32 %v1289, 7
    %v1291 = vsub.s32 %v1288, %v1290
    %v1292 = vrot.slane %v1278, %v1291
    %v1293 = vcombine.low %v1269, %v1285
    %v1294 = vcombine.high %v1269, %v1285
    %v1295 = vcombine.low %v1276, %v1292
    %v1296 = vcombine.high %v1276, %v1292
    %v1297 = vpack.c.bf16 %v1225, %v1225
    %v1298 = vpack.c.bf16 %v1226, %v1226
    %v1299 = vpack.c.bf16 %v1227, %v1227
    %v1300 = vpack.c.bf16 %v1228, %v1228
    %v1301 = vpack.c.bf16 %v1293, %v1293
    %v1302 = vpack.c.bf16 %v1294, %v1294
    %v1303 = vpack.c.bf16 %v1295, %v1295
    %v1304 = vpack.c.bf16 %v1296, %v1296
    %1307 = vrot.lane.b32.xlu0 %v407, 96
    %v1308 = vpop.permute.xlu0 %1307
    %1309 = vrot.lane.b32.xlu0 %v411, 96
    %v1310 = vpop.permute.xlu0 %1309
    %1313 = vrot.lane.b32.xlu0 %v407, 64
    %v1314 = vpop.permute.xlu0 %1313
    %1315 = vrot.lane.b32.xlu0 %v411, 64
    %v1316 = vpop.permute.xlu0 %1315
    %1319 = vrot.lane.b32.xlu0 %v407, 32
    %v1320 = vpop.permute.xlu0 %1319
    %1321 = vrot.lane.b32.xlu0 %v411, 32
    %v1322 = vpop.permute.xlu0 %1321
    %v1325 = vcombine.low %v407, %v1314
    %v1326 = vcombine.high %v407, %v1314
    %v1328 = vunpack.c.l.s4 1983009808
    %v1329 = vunpack.c.0.s8 %v1328
    %v1330 = vlaneseq
    %v1331 = vshrl.u32 %v1330, 7
    %v1332 = vsub.s32 %v1329, %v1331
    %v1333 = vrot.slane %v1325, %v1332
    %v1335 = vunpack.c.l.s4 1983009808
    %v1336 = vunpack.c.0.s8 %v1335
    %v1337 = vlaneseq
    %v1338 = vshrl.u32 %v1337, 7
    %v1339 = vsub.s32 %v1336, %v1338
    %v1340 = vrot.slane %v1326, %v1339
    %v1341 = vcombine.low %v1308, %v1320
    %v1342 = vcombine.high %v1308, %v1320
    %v1344 = vunpack.c.l.s4 1983009808
    %v1345 = vunpack.c.0.s8 %v1344
    %v1346 = vlaneseq
    %v1347 = vshrl.u32 %v1346, 7
    %v1348 = vsub.s32 %v1345, %v1347
    %v1349 = vrot.slane %v1341, %v1348
    %v1351 = vunpack.c.l.s4 1983009808
    %v1352 = vunpack.c.0.s8 %v1351
    %v1353 = vlaneseq
    %v1354 = vshrl.u32 %v1353, 7
    %v1355 = vsub.s32 %v1352, %v1354
    %v1356 = vrot.slane %v1342, %v1355
    %v1357 = vcombine.low %v1333, %v1349
    %v1358 = vcombine.high %v1333, %v1349
    %v1360 = vunpack.c.l.s4 1934713408
    %v1361 = vunpack.c.0.s8 %v1360
    %v1362 = vlaneseq
    %v1363 = vshrl.u32 %v1362, 7
    %v1364 = vsub.s32 %v1361, %v1363
    %v1365 = vrot.slane %v1357, %v1364
    %v1367 = vunpack.c.l.s4 1934713408
    %v1368 = vunpack.c.0.s8 %v1367
    %v1369 = vlaneseq
    %v1370 = vshrl.u32 %v1369, 7
    %v1371 = vsub.s32 %v1368, %v1370
    %v1372 = vrot.slane %v1358, %v1371
    %v1373 = vcombine.low %v1340, %v1356
    %v1374 = vcombine.high %v1340, %v1356
    %v1376 = vunpack.c.l.s4 1934713408
    %v1377 = vunpack.c.0.s8 %v1376
    %v1378 = vlaneseq
    %v1379 = vshrl.u32 %v1378, 7
    %v1380 = vsub.s32 %v1377, %v1379
    %v1381 = vrot.slane %v1373, %v1380
    %v1383 = vunpack.c.l.s4 1934713408
    %v1384 = vunpack.c.0.s8 %v1383
    %v1385 = vlaneseq
    %v1386 = vshrl.u32 %v1385, 7
    %v1387 = vsub.s32 %v1384, %v1386
    %v1388 = vrot.slane %v1374, %v1387
    %v1389 = vcombine.high %v1365, 0.0
    %v1390 = vcombine.high %v1372, 0.0
    %v1391 = vcombine.high %v1381, 0.0
    %v1392 = vcombine.high %v1388, 0.0
    %v1393 = vcombine.low %v411, %v1316
    %v1394 = vcombine.high %v411, %v1316
    %v1396 = vunpack.c.l.s4 1983009808
    %v1397 = vunpack.c.0.s8 %v1396
    %v1398 = vlaneseq
    %v1399 = vshrl.u32 %v1398, 7
    %v1400 = vsub.s32 %v1397, %v1399
    %v1401 = vrot.slane %v1393, %v1400
    %v1403 = vunpack.c.l.s4 1983009808
    %v1404 = vunpack.c.0.s8 %v1403
    %v1405 = vlaneseq
    %v1406 = vshrl.u32 %v1405, 7
    %v1407 = vsub.s32 %v1404, %v1406
    %v1408 = vrot.slane %v1394, %v1407
    %v1409 = vcombine.low %v1310, %v1322
    %v1410 = vcombine.high %v1310, %v1322
    %v1412 = vunpack.c.l.s4 1983009808
    %v1413 = vunpack.c.0.s8 %v1412
    %v1414 = vlaneseq
    %v1415 = vshrl.u32 %v1414, 7
    %v1416 = vsub.s32 %v1413, %v1415
    %v1417 = vrot.slane %v1409, %v1416
    %v1419 = vunpack.c.l.s4 1983009808
    %v1420 = vunpack.c.0.s8 %v1419
    %v1421 = vlaneseq
    %v1422 = vshrl.u32 %v1421, 7
    %v1423 = vsub.s32 %v1420, %v1422
    %v1424 = vrot.slane %v1410, %v1423
    %v1425 = vcombine.low %v1401, %v1417
    %v1426 = vcombine.high %v1401, %v1417
    %v1428 = vunpack.c.l.s4 1934713408
    %v1429 = vunpack.c.0.s8 %v1428
    %v1430 = vlaneseq
    %v1431 = vshrl.u32 %v1430, 7
    %v1432 = vsub.s32 %v1429, %v1431
    %v1433 = vrot.slane %v1425, %v1432
    %v1435 = vunpack.c.l.s4 1934713408
    %v1436 = vunpack.c.0.s8 %v1435
    %v1437 = vlaneseq
    %v1438 = vshrl.u32 %v1437, 7
    %v1439 = vsub.s32 %v1436, %v1438
    %v1440 = vrot.slane %v1426, %v1439
    %v1441 = vcombine.low %v1408, %v1424
    %v1442 = vcombine.high %v1408, %v1424
    %v1444 = vunpack.c.l.s4 1934713408
    %v1445 = vunpack.c.0.s8 %v1444
    %v1446 = vlaneseq
    %v1447 = vshrl.u32 %v1446, 7
    %v1448 = vsub.s32 %v1445, %v1447
    %v1449 = vrot.slane %v1441, %v1448
    %v1451 = vunpack.c.l.s4 1934713408
    %v1452 = vunpack.c.0.s8 %v1451
    %v1453 = vlaneseq
    %v1454 = vshrl.u32 %v1453, 7
    %v1455 = vsub.s32 %v1452, %v1454
    %v1456 = vrot.slane %v1442, %v1455
    %v1457 = vcombine.high %v1433, 0.0
    %v1458 = vcombine.high %v1440, 0.0
    %v1459 = vcombine.high %v1449, 0.0
    %v1460 = vcombine.high %v1456, 0.0
    %v1461 = vcombine.low %v1365, %v1372
    %v1463 = vunpack.c.l.s4 1983009808
    %v1464 = vunpack.c.0.s8 %v1463
    %v1465 = vlaneseq
    %v1466 = vshrl.u32 %v1465, 7
    %v1467 = vsub.s32 %v1464, %v1466
    %v1468 = vrot.slane %v1461, %v1467
    %v1469 = vcombine.low %v1389, %v1390
    %v1471 = vunpack.c.l.s4 1983009808
    %v1472 = vunpack.c.0.s8 %v1471
    %v1473 = vlaneseq
    %v1474 = vshrl.u32 %v1473, 7
    %v1475 = vsub.s32 %v1472, %v1474
    %v1476 = vrot.slane %v1469, %v1475
    %v1477 = vcombine.low %v1381, %v1388
    %v1479 = vunpack.c.l.s4 1983009808
    %v1480 = vunpack.c.0.s8 %v1479
    %v1481 = vlaneseq
    %v1482 = vshrl.u32 %v1481, 7
    %v1483 = vsub.s32 %v1480, %v1482
    %v1484 = vrot.slane %v1477, %v1483
    %v1485 = vcombine.low %v1391, %v1392
    %v1487 = vunpack.c.l.s4 1983009808
    %v1488 = vunpack.c.0.s8 %v1487
    %v1489 = vlaneseq
    %v1490 = vshrl.u32 %v1489, 7
    %v1491 = vsub.s32 %v1488, %v1490
    %v1492 = vrot.slane %v1485, %v1491
    %v1493 = vcombine.low %v1468, %v1476
    %v1494 = vcombine.high %v1468, %v1476
    %v1496 = vunpack.c.l.s4 1934713408
    %v1497 = vunpack.c.0.s8 %v1496
    %v1498 = vlaneseq
    %v1499 = vshrl.u32 %v1498, 7
    %v1500 = vsub.s32 %v1497, %v1499
    %v1501 = vrot.slane %v1493, %v1500
    %v1503 = vunpack.c.l.s4 1934713408
    %v1504 = vunpack.c.0.s8 %v1503
    %v1505 = vlaneseq
    %v1506 = vshrl.u32 %v1505, 7
    %v1507 = vsub.s32 %v1504, %v1506
    %v1508 = vrot.slane %v1494, %v1507
    %v1509 = vcombine.low %v1484, %v1492
    %v1510 = vcombine.high %v1484, %v1492
    %v1512 = vunpack.c.l.s4 1934713408
    %v1513 = vunpack.c.0.s8 %v1512
    %v1514 = vlaneseq
    %v1515 = vshrl.u32 %v1514, 7
    %v1516 = vsub.s32 %v1513, %v1515
    %v1517 = vrot.slane %v1509, %v1516
    %v1519 = vunpack.c.l.s4 1934713408
    %v1520 = vunpack.c.0.s8 %v1519
    %v1521 = vlaneseq
    %v1522 = vshrl.u32 %v1521, 7
    %v1523 = vsub.s32 %v1520, %v1522
    %v1524 = vrot.slane %v1510, %v1523
    %v1525 = vcombine.low %v1501, %v1517
    %v1526 = vcombine.high %v1501, %v1517
    %v1527 = vcombine.low %v1508, %v1524
    %v1528 = vcombine.high %v1508, %v1524
    %v1529 = vcombine.low %v1433, %v1440
    %v1531 = vunpack.c.l.s4 1983009808
    %v1532 = vunpack.c.0.s8 %v1531
    %v1533 = vlaneseq
    %v1534 = vshrl.u32 %v1533, 7
    %v1535 = vsub.s32 %v1532, %v1534
    %v1536 = vrot.slane %v1529, %v1535
    %v1537 = vcombine.low %v1457, %v1458
    %v1539 = vunpack.c.l.s4 1983009808
    %v1540 = vunpack.c.0.s8 %v1539
    %v1541 = vlaneseq
    %v1542 = vshrl.u32 %v1541, 7
    %v1543 = vsub.s32 %v1540, %v1542
    %v1544 = vrot.slane %v1537, %v1543
    %v1545 = vcombine.low %v1449, %v1456
    %v1547 = vunpack.c.l.s4 1983009808
    %v1548 = vunpack.c.0.s8 %v1547
    %v1549 = vlaneseq
    %v1550 = vshrl.u32 %v1549, 7
    %v1551 = vsub.s32 %v1548, %v1550
    %v1552 = vrot.slane %v1545, %v1551
    %v1553 = vcombine.low %v1459, %v1460
    %v1555 = vunpack.c.l.s4 1983009808
    %v1556 = vunpack.c.0.s8 %v1555
    %v1557 = vlaneseq
    %v1558 = vshrl.u32 %v1557, 7
    %v1559 = vsub.s32 %v1556, %v1558
    %v1560 = vrot.slane %v1553, %v1559
    %v1561 = vcombine.low %v1536, %v1544
    %v1562 = vcombine.high %v1536, %v1544
    %v1564 = vunpack.c.l.s4 1934713408
    %v1565 = vunpack.c.0.s8 %v1564
    %v1566 = vlaneseq
    %v1567 = vshrl.u32 %v1566, 7
    %v1568 = vsub.s32 %v1565, %v1567
    %v1569 = vrot.slane %v1561, %v1568
    %v1571 = vunpack.c.l.s4 1934713408
    %v1572 = vunpack.c.0.s8 %v1571
    %v1573 = vlaneseq
    %v1574 = vshrl.u32 %v1573, 7
    %v1575 = vsub.s32 %v1572, %v1574
    %v1576 = vrot.slane %v1562, %v1575
    %v1577 = vcombine.low %v1552, %v1560
    %v1578 = vcombine.high %v1552, %v1560
    %v1580 = vunpack.c.l.s4 1934713408
    %v1581 = vunpack.c.0.s8 %v1580
    %v1582 = vlaneseq
    %v1583 = vshrl.u32 %v1582, 7
    %v1584 = vsub.s32 %v1581, %v1583
    %v1585 = vrot.slane %v1577, %v1584
    %v1587 = vunpack.c.l.s4 1934713408
    %v1588 = vunpack.c.0.s8 %v1587
    %v1589 = vlaneseq
    %v1590 = vshrl.u32 %v1589, 7
    %v1591 = vsub.s32 %v1588, %v1590
    %v1592 = vrot.slane %v1578, %v1591
    %v1593 = vcombine.low %v1569, %v1585
    %v1594 = vcombine.high %v1569, %v1585
    %v1595 = vcombine.low %v1576, %v1592
    %v1596 = vcombine.high %v1576, %v1592
    %v1597 = vpack.c.bf16 %v1525, %v1525
    %v1598 = vpack.c.bf16 %v1526, %v1526
    %v1599 = vpack.c.bf16 %v1527, %v1527
    %v1600 = vpack.c.bf16 %v1528, %v1528
    %v1601 = vpack.c.bf16 %v1593, %v1593
    %v1602 = vpack.c.bf16 %v1594, %v1594
    %v1603 = vpack.c.bf16 %v1595, %v1595
    %v1604 = vpack.c.bf16 %v1596, %v1596
    %vm1605 = vcmask 261120
    %v1607 = vsel %vm1605, %v997, 0
    %v1610 = vsel %vm1605, %v1297, 0
    %1612 = vmatprep.subr.bf16.mxu0 0
    %1613 = vmatpush1.bf16.xpose.msra.mxu0 0
    %1614 = vmatprep.subr.bf16.mxu0 0
    %1615 = vmatpush1.bf16.xpose.msra.mxu0 0
    %1616 = vmatprep.subr.bf16.mxu0 0
    %1617 = vmatpush1.bf16.xpose.msra.mxu0 0
    %1618 = vmatprep.subr.bf16.mxu0 0
    %1619 = vmatpush1.bf16.xpose.msra.mxu0 0
    %1620 = vmatprep.subr.bf16.mxu0 0
    %1621 = vmatpush1.bf16.xpose.msra.mxu0 0
    %1622 = vmatprep.subr.bf16.mxu0 0
    %1623 = vmatpush1.bf16.xpose.msra.mxu0 0
    %1624 = vmatprep.subr.bf16.mxu0 0
    %1625 = vmatpush1.bf16.xpose.msra.mxu0 0
    %1626 = vmatprep.subr.bf16.mxu0 0
    %1627 = vmatpush1.bf16.xpose.msra.mxu0 %v1610
    %1628 = vmatprep.subr.bf16.mxu0 0
    %1629 = vmatpush2.bf16.xpose.msra.mxu0 0
    %1630 = vmatprep.subr.bf16.mxu0 0
    %1631 = vmatpush2.bf16.xpose.msra.mxu0 0
    %1632 = vmatprep.subr.bf16.mxu0 0
    %1633 = vmatpush2.bf16.xpose.msra.mxu0 0
    %1634 = vmatprep.subr.bf16.mxu0 0
    %1635 = vmatpush2.bf16.xpose.msra.mxu0 0
    %1636 = vmatprep.subr.bf16.mxu0 0
    %1637 = vmatpush2.bf16.xpose.msra.mxu0 0
    %1638 = vmatprep.subr.bf16.mxu0 0
    %1639 = vmatpush2.bf16.xpose.msra.mxu0 0
    %1640 = vmatprep.subr.bf16.mxu0 0
    %1641 = vmatpush2.bf16.xpose.msra.mxu0 0
    %1642 = vmatprep.subr.bf16.mxu0 0
    %1643 = vmatpush2.bf16.xpose.msra.mxu0 0
    %1644 = vmatprep.mubr.bf16.mxu0 0
    %1645 = vmatmul.mubr.bf16.gmra.mxu0 %v1607
    %v1646 = vpop.f32.mrf.mxu0
    %v1647 = vadd.f32 0.0, %v1646
    %v1648 = vpop.f32.mrf.mxu0
    %v1649 = vpop.f32.mrf.mxu0
    %v1650 = vadd.f32 0.0, %v1649
    %v1651 = vpop.f32.mrf.mxu0
    %1652 = vdwg.mxu0
    %v1654 = vsel %vm1605, %v998, 0
    %v1657 = vsel %vm1605, %v1298, 0
    %1659 = vmatprep.subr.bf16.mxu0 0
    %1660 = vmatpush1.bf16.xpose.msra.mxu0 0
    %1661 = vmatprep.subr.bf16.mxu0 0
    %1662 = vmatpush1.bf16.xpose.msra.mxu0 0
    %1663 = vmatprep.subr.bf16.mxu0 0
    %1664 = vmatpush1.bf16.xpose.msra.mxu0 0
    %1665 = vmatprep.subr.bf16.mxu0 0
    %1666 = vmatpush1.bf16.xpose.msra.mxu0 0
    %1667 = vmatprep.subr.bf16.mxu0 0
    %1668 = vmatpush1.bf16.xpose.msra.mxu0 0
    %1669 = vmatprep.subr.bf16.mxu0 0
    %1670 = vmatpush1.bf16.xpose.msra.mxu0 0
    %1671 = vmatprep.subr.bf16.mxu0 0
    %1672 = vmatpush1.bf16.xpose.msra.mxu0 0
    %1673 = vmatprep.subr.bf16.mxu0 0
    %1674 = vmatpush1.bf16.xpose.msra.mxu0 %v1657
    %1675 = vmatprep.subr.bf16.mxu0 0
    %1676 = vmatpush2.bf16.xpose.msra.mxu0 0
    %1677 = vmatprep.subr.bf16.mxu0 0
    %1678 = vmatpush2.bf16.xpose.msra.mxu0 0
    %1679 = vmatprep.subr.bf16.mxu0 0
    %1680 = vmatpush2.bf16.xpose.msra.mxu0 0
    %1681 = vmatprep.subr.bf16.mxu0 0
    %1682 = vmatpush2.bf16.xpose.msra.mxu0 0
    %1683 = vmatprep.subr.bf16.mxu0 0
    %1684 = vmatpush2.bf16.xpose.msra.mxu0 0
    %1685 = vmatprep.subr.bf16.mxu0 0
    %1686 = vmatpush2.bf16.xpose.msra.mxu0 0
    %1687 = vmatprep.subr.bf16.mxu0 0
    %1688 = vmatpush2.bf16.xpose.msra.mxu0 0
    %1689 = vmatprep.subr.bf16.mxu0 0
    %1690 = vmatpush2.bf16.xpose.msra.mxu0 0
    %1691 = vmatprep.mubr.bf16.mxu0 0
    %1692 = vmatmul.mubr.bf16.gmra.mxu0 %v1654
    %v1693 = vpop.f32.mrf.mxu0
    %v1694 = vadd.f32 0.0, %v1693
    %v1695 = vpop.f32.mrf.mxu0
    %v1696 = vpop.f32.mrf.mxu0
    %v1697 = vadd.f32 0.0, %v1696
    %v1698 = vpop.f32.mrf.mxu0
    %1699 = vdwg.mxu0
    %v1701 = vsel %vm1605, %v999, 0
    %v1704 = vsel %vm1605, %v1299, 0
    %1706 = vmatprep.subr.bf16.mxu0 0
    %1707 = vmatpush1.bf16.xpose.msra.mxu0 0
    %1708 = vmatprep.subr.bf16.mxu0 0
    %1709 = vmatpush1.bf16.xpose.msra.mxu0 0
    %1710 = vmatprep.subr.bf16.mxu0 0
    %1711 = vmatpush1.bf16.xpose.msra.mxu0 0
    %1712 = vmatprep.subr.bf16.mxu0 0
    %1713 = vmatpush1.bf16.xpose.msra.mxu0 0
    %1714 = vmatprep.subr.bf16.mxu0 0
    %1715 = vmatpush1.bf16.xpose.msra.mxu0 0
    %1716 = vmatprep.subr.bf16.mxu0 0
    %1717 = vmatpush1.bf16.xpose.msra.mxu0 0
    %1718 = vmatprep.subr.bf16.mxu0 0
    %1719 = vmatpush1.bf16.xpose.msra.mxu0 0
    %1720 = vmatprep.subr.bf16.mxu0 0
    %1721 = vmatpush1.bf16.xpose.msra.mxu0 %v1704
    %1722 = vmatprep.subr.bf16.mxu0 0
    %1723 = vmatpush2.bf16.xpose.msra.mxu0 0
    %1724 = vmatprep.subr.bf16.mxu0 0
    %1725 = vmatpush2.bf16.xpose.msra.mxu0 0
    %1726 = vmatprep.subr.bf16.mxu0 0
    %1727 = vmatpush2.bf16.xpose.msra.mxu0 0
    %1728 = vmatprep.subr.bf16.mxu0 0
    %1729 = vmatpush2.bf16.xpose.msra.mxu0 0
    %1730 = vmatprep.subr.bf16.mxu0 0
    %1731 = vmatpush2.bf16.xpose.msra.mxu0 0
    %1732 = vmatprep.subr.bf16.mxu0 0
    %1733 = vmatpush2.bf16.xpose.msra.mxu0 0
    %1734 = vmatprep.subr.bf16.mxu0 0
    %1735 = vmatpush2.bf16.xpose.msra.mxu0 0
    %1736 = vmatprep.subr.bf16.mxu0 0
    %1737 = vmatpush2.bf16.xpose.msra.mxu0 0
    %1738 = vmatprep.mubr.bf16.mxu0 0
    %1739 = vmatmul.mubr.bf16.gmra.mxu0 %v1701
    %v1740 = vpop.f32.mrf.mxu0
    %v1741 = vadd.f32 0.0, %v1740
    %v1742 = vpop.f32.mrf.mxu0
    %v1743 = vpop.f32.mrf.mxu0
    %v1744 = vadd.f32 0.0, %v1743
    %v1745 = vpop.f32.mrf.mxu0
    %1746 = vdwg.mxu0
    %v1748 = vsel %vm1605, %v1000, 0
    %v1751 = vsel %vm1605, %v1300, 0
    %1753 = vmatprep.subr.bf16.mxu0 0
    %1754 = vmatpush1.bf16.xpose.msra.mxu0 0
    %1755 = vmatprep.subr.bf16.mxu0 0
    %1756 = vmatpush1.bf16.xpose.msra.mxu0 0
    %1757 = vmatprep.subr.bf16.mxu0 0
    %1758 = vmatpush1.bf16.xpose.msra.mxu0 0
    %1759 = vmatprep.subr.bf16.mxu0 0
    %1760 = vmatpush1.bf16.xpose.msra.mxu0 0
    %1761 = vmatprep.subr.bf16.mxu0 0
    %1762 = vmatpush1.bf16.xpose.msra.mxu0 0
    %1763 = vmatprep.subr.bf16.mxu0 0
    %1764 = vmatpush1.bf16.xpose.msra.mxu0 0
    %1765 = vmatprep.subr.bf16.mxu0 0
    %1766 = vmatpush1.bf16.xpose.msra.mxu0 0
    %1767 = vmatprep.subr.bf16.mxu0 0
    %1768 = vmatpush1.bf16.xpose.msra.mxu0 %v1751
    %1769 = vmatprep.subr.bf16.mxu0 0
    %1770 = vmatpush2.bf16.xpose.msra.mxu0 0
    %1771 = vmatprep.subr.bf16.mxu0 0
    %1772 = vmatpush2.bf16.xpose.msra.mxu0 0
    %1773 = vmatprep.subr.bf16.mxu0 0
    %1774 = vmatpush2.bf16.xpose.msra.mxu0 0
    %1775 = vmatprep.subr.bf16.mxu0 0
    %1776 = vmatpush2.bf16.xpose.msra.mxu0 0
    %1777 = vmatprep.subr.bf16.mxu0 0
    %1778 = vmatpush2.bf16.xpose.msra.mxu0 0
    %1779 = vmatprep.subr.bf16.mxu0 0
    %1780 = vmatpush2.bf16.xpose.msra.mxu0 0
    %1781 = vmatprep.subr.bf16.mxu0 0
    %1782 = vmatpush2.bf16.xpose.msra.mxu0 0
    %1783 = vmatprep.subr.bf16.mxu0 0
    %1784 = vmatpush2.bf16.xpose.msra.mxu0 0
    %1785 = vmatprep.mubr.bf16.mxu0 0
    %1786 = vmatmul.mubr.bf16.gmra.mxu0 %v1748
    %v1787 = vpop.f32.mrf.mxu0
    %v1788 = vadd.f32 0.0, %v1787
    %v1789 = vpop.f32.mrf.mxu0
    %v1790 = vpop.f32.mrf.mxu0
    %v1791 = vadd.f32 0.0, %v1790
    %v1792 = vpop.f32.mrf.mxu0
    %1793 = vdwg.mxu0
    %v1795 = vsel %vm1605, %v1001, 0
    %v1798 = vsel %vm1605, %v1301, 0
    %1800 = vmatprep.subr.bf16.mxu0 0
    %1801 = vmatpush1.bf16.xpose.msra.mxu0 0
    %1802 = vmatprep.subr.bf16.mxu0 0
    %1803 = vmatpush1.bf16.xpose.msra.mxu0 0
    %1804 = vmatprep.subr.bf16.mxu0 0
    %1805 = vmatpush1.bf16.xpose.msra.mxu0 0
    %1806 = vmatprep.subr.bf16.mxu0 0
    %1807 = vmatpush1.bf16.xpose.msra.mxu0 0
    %1808 = vmatprep.subr.bf16.mxu0 0
    %1809 = vmatpush1.bf16.xpose.msra.mxu0 0
    %1810 = vmatprep.subr.bf16.mxu0 0
    %1811 = vmatpush1.bf16.xpose.msra.mxu0 0
    %1812 = vmatprep.subr.bf16.mxu0 0
    %1813 = vmatpush1.bf16.xpose.msra.mxu0 0
    %1814 = vmatprep.subr.bf16.mxu0 0
    %1815 = vmatpush1.bf16.xpose.msra.mxu0 %v1798
    %1816 = vmatprep.subr.bf16.mxu0 0
    %1817 = vmatpush2.bf16.xpose.msra.mxu0 0
    %1818 = vmatprep.subr.bf16.mxu0 0
    %1819 = vmatpush2.bf16.xpose.msra.mxu0 0
    %1820 = vmatprep.subr.bf16.mxu0 0
    %1821 = vmatpush2.bf16.xpose.msra.mxu0 0
    %1822 = vmatprep.subr.bf16.mxu0 0
    %1823 = vmatpush2.bf16.xpose.msra.mxu0 0
    %1824 = vmatprep.subr.bf16.mxu0 0
    %1825 = vmatpush2.bf16.xpose.msra.mxu0 0
    %1826 = vmatprep.subr.bf16.mxu0 0
    %1827 = vmatpush2.bf16.xpose.msra.mxu0 0
    %1828 = vmatprep.subr.bf16.mxu0 0
    %1829 = vmatpush2.bf16.xpose.msra.mxu0 0
    %1830 = vmatprep.subr.bf16.mxu0 0
    %1831 = vmatpush2.bf16.xpose.msra.mxu0 0
    %1832 = vmatprep.mubr.bf16.mxu0 0
    %1833 = vmatmul.mubr.bf16.gmra.mxu0 %v1795
    %v1834 = vpop.f32.mrf.mxu0
    %v1835 = vadd.f32 0.0, %v1834
    %v1836 = vpop.f32.mrf.mxu0
    %v1837 = vpop.f32.mrf.mxu0
    %v1838 = vadd.f32 0.0, %v1837
    %v1839 = vpop.f32.mrf.mxu0
    %1840 = vdwg.mxu0
    %v1842 = vsel %vm1605, %v1002, 0
    %v1845 = vsel %vm1605, %v1302, 0
    %1847 = vmatprep.subr.bf16.mxu0 0
    %1848 = vmatpush1.bf16.xpose.msra.mxu0 0
    %1849 = vmatprep.subr.bf16.mxu0 0
    %1850 = vmatpush1.bf16.xpose.msra.mxu0 0
    %1851 = vmatprep.subr.bf16.mxu0 0
    %1852 = vmatpush1.bf16.xpose.msra.mxu0 0
    %1853 = vmatprep.subr.bf16.mxu0 0
    %1854 = vmatpush1.bf16.xpose.msra.mxu0 0
    %1855 = vmatprep.subr.bf16.mxu0 0
    %1856 = vmatpush1.bf16.xpose.msra.mxu0 0
    %1857 = vmatprep.subr.bf16.mxu0 0
    %1858 = vmatpush1.bf16.xpose.msra.mxu0 0
    %1859 = vmatprep.subr.bf16.mxu0 0
    %1860 = vmatpush1.bf16.xpose.msra.mxu0 0
    %1861 = vmatprep.subr.bf16.mxu0 0
    %1862 = vmatpush1.bf16.xpose.msra.mxu0 %v1845
    %1863 = vmatprep.subr.bf16.mxu0 0
    %1864 = vmatpush2.bf16.xpose.msra.mxu0 0
    %1865 = vmatprep.subr.bf16.mxu0 0
    %1866 = vmatpush2.bf16.xpose.msra.mxu0 0
    %1867 = vmatprep.subr.bf16.mxu0 0
    %1868 = vmatpush2.bf16.xpose.msra.mxu0 0
    %1869 = vmatprep.subr.bf16.mxu0 0
    %1870 = vmatpush2.bf16.xpose.msra.mxu0 0
    %1871 = vmatprep.subr.bf16.mxu0 0
    %1872 = vmatpush2.bf16.xpose.msra.mxu0 0
    %1873 = vmatprep.subr.bf16.mxu0 0
    %1874 = vmatpush2.bf16.xpose.msra.mxu0 0
    %1875 = vmatprep.subr.bf16.mxu0 0
    %1876 = vmatpush2.bf16.xpose.msra.mxu0 0
    %1877 = vmatprep.subr.bf16.mxu0 0
    %1878 = vmatpush2.bf16.xpose.msra.mxu0 0
    %1879 = vmatprep.mubr.bf16.mxu0 0
    %1880 = vmatmul.mubr.bf16.gmra.mxu0 %v1842
    %v1881 = vpop.f32.mrf.mxu0
    %v1882 = vadd.f32 0.0, %v1881
    %v1883 = vpop.f32.mrf.mxu0
    %v1884 = vpop.f32.mrf.mxu0
    %v1885 = vadd.f32 0.0, %v1884
    %v1886 = vpop.f32.mrf.mxu0
    %1887 = vdwg.mxu0
    %v1889 = vsel %vm1605, %v1003, 0
    %v1892 = vsel %vm1605, %v1303, 0
    %1894 = vmatprep.subr.bf16.mxu0 0
    %1895 = vmatpush1.bf16.xpose.msra.mxu0 0
    %1896 = vmatprep.subr.bf16.mxu0 0
    %1897 = vmatpush1.bf16.xpose.msra.mxu0 0
    %1898 = vmatprep.subr.bf16.mxu0 0
    %1899 = vmatpush1.bf16.xpose.msra.mxu0 0
    %1900 = vmatprep.subr.bf16.mxu0 0
    %1901 = vmatpush1.bf16.xpose.msra.mxu0 0
    %1902 = vmatprep.subr.bf16.mxu0 0
    %1903 = vmatpush1.bf16.xpose.msra.mxu0 0
    %1904 = vmatprep.subr.bf16.mxu0 0
    %1905 = vmatpush1.bf16.xpose.msra.mxu0 0
    %1906 = vmatprep.subr.bf16.mxu0 0
    %1907 = vmatpush1.bf16.xpose.msra.mxu0 0
    %1908 = vmatprep.subr.bf16.mxu0 0
    %1909 = vmatpush1.bf16.xpose.msra.mxu0 %v1892
    %1910 = vmatprep.subr.bf16.mxu0 0
    %1911 = vmatpush2.bf16.xpose.msra.mxu0 0
    %1912 = vmatprep.subr.bf16.mxu0 0
    %1913 = vmatpush2.bf16.xpose.msra.mxu0 0
    %1914 = vmatprep.subr.bf16.mxu0 0
    %1915 = vmatpush2.bf16.xpose.msra.mxu0 0
    %1916 = vmatprep.subr.bf16.mxu0 0
    %1917 = vmatpush2.bf16.xpose.msra.mxu0 0
    %1918 = vmatprep.subr.bf16.mxu0 0
    %1919 = vmatpush2.bf16.xpose.msra.mxu0 0
    %1920 = vmatprep.subr.bf16.mxu0 0
    %1921 = vmatpush2.bf16.xpose.msra.mxu0 0
    %1922 = vmatprep.subr.bf16.mxu0 0
    %1923 = vmatpush2.bf16.xpose.msra.mxu0 0
    %1924 = vmatprep.subr.bf16.mxu0 0
    %1925 = vmatpush2.bf16.xpose.msra.mxu0 0
    %1926 = vmatprep.mubr.bf16.mxu0 0
    %1927 = vmatmul.mubr.bf16.gmra.mxu0 %v1889
    %v1928 = vpop.f32.mrf.mxu0
    %v1929 = vadd.f32 0.0, %v1928
    %v1930 = vpop.f32.mrf.mxu0
    %v1931 = vpop.f32.mrf.mxu0
    %v1932 = vadd.f32 0.0, %v1931
    %v1933 = vpop.f32.mrf.mxu0
    %1934 = vdwg.mxu0
    %v1936 = vsel %vm1605, %v1004, 0
    %v1939 = vsel %vm1605, %v1304, 0
    %1941 = vmatprep.subr.bf16.mxu0 0
    %1942 = vmatpush1.bf16.xpose.msra.mxu0 0
    %1943 = vmatprep.subr.bf16.mxu0 0
    %1944 = vmatpush1.bf16.xpose.msra.mxu0 0
    %1945 = vmatprep.subr.bf16.mxu0 0
    %1946 = vmatpush1.bf16.xpose.msra.mxu0 0
    %1947 = vmatprep.subr.bf16.mxu0 0
    %1948 = vmatpush1.bf16.xpose.msra.mxu0 0
    %1949 = vmatprep.subr.bf16.mxu0 0
    %1950 = vmatpush1.bf16.xpose.msra.mxu0 0
    %1951 = vmatprep.subr.bf16.mxu0 0
    %1952 = vmatpush1.bf16.xpose.msra.mxu0 0
    %1953 = vmatprep.subr.bf16.mxu0 0
    %1954 = vmatpush1.bf16.xpose.msra.mxu0 0
    %1955 = vmatprep.subr.bf16.mxu0 0
    %1956 = vmatpush1.bf16.xpose.msra.mxu0 %v1939
    %1957 = vmatprep.subr.bf16.mxu0 0
    %1958 = vmatpush2.bf16.xpose.msra.mxu0 0
    %1959 = vmatprep.subr.bf16.mxu0 0
    %1960 = vmatpush2.bf16.xpose.msra.mxu0 0
    %1961 = vmatprep.subr.bf16.mxu0 0
    %1962 = vmatpush2.bf16.xpose.msra.mxu0 0
    %1963 = vmatprep.subr.bf16.mxu0 0
    %1964 = vmatpush2.bf16.xpose.msra.mxu0 0
    %1965 = vmatprep.subr.bf16.mxu0 0
    %1966 = vmatpush2.bf16.xpose.msra.mxu0 0
    %1967 = vmatprep.subr.bf16.mxu0 0
    %1968 = vmatpush2.bf16.xpose.msra.mxu0 0
    %1969 = vmatprep.subr.bf16.mxu0 0
    %1970 = vmatpush2.bf16.xpose.msra.mxu0 0
    %1971 = vmatprep.subr.bf16.mxu0 0
    %1972 = vmatpush2.bf16.xpose.msra.mxu0 0
    %1973 = vmatprep.mubr.bf16.mxu0 0
    %1974 = vmatmul.mubr.bf16.gmra.mxu0 %v1936
    %v1975 = vpop.f32.mrf.mxu0
    %v1976 = vadd.f32 0.0, %v1975
    %v1977 = vpop.f32.mrf.mxu0
    %v1978 = vpop.f32.mrf.mxu0
    %v1979 = vadd.f32 0.0, %v1978
    %v1980 = vpop.f32.mrf.mxu0
    %1981 = vdwg.mxu0
    %vm1982 = vcmask 64512
    %v1983 = vsel %vm1982, %v1647, -inf
    %1984 = vmax.xlane.f32.xlu0 %v1983
    %v1985 = vpop.xlane.xlu0 %1984
    %v1986 = vsel %vm1982, %v1650, -inf
    %1987 = vmax.xlane.f32.xlu0 %v1986
    %v1988 = vpop.xlane.xlu0 %1987
    %v1989 = vsel %vm1982, %v1694, -inf
    %1990 = vmax.xlane.f32.xlu0 %v1989
    %v1991 = vpop.xlane.xlu0 %1990
    %v1992 = vsel %vm1982, %v1697, -inf
    %1993 = vmax.xlane.f32.xlu0 %v1992
    %v1994 = vpop.xlane.xlu0 %1993
    %v1995 = vsel %vm1982, %v1741, -inf
    %1996 = vmax.xlane.f32.xlu0 %v1995
    %v1997 = vpop.xlane.xlu0 %1996
    %v1998 = vsel %vm1982, %v1744, -inf
    %1999 = vmax.xlane.f32.xlu0 %v1998
    %v2000 = vpop.xlane.xlu0 %1999
    %v2001 = vsel %vm1982, %v1788, -inf
    %2002 = vmax.xlane.f32.xlu0 %v2001
    %v2003 = vpop.xlane.xlu0 %2002
    %v2004 = vsel %vm1982, %v1791, -inf
    %2005 = vmax.xlane.f32.xlu0 %v2004
    %v2006 = vpop.xlane.xlu0 %2005
    %v2007 = vsel %vm1982, %v1835, -inf
    %2008 = vmax.xlane.f32.xlu0 %v2007
    %v2009 = vpop.xlane.xlu0 %2008
    %v2010 = vsel %vm1982, %v1838, -inf
    %2011 = vmax.xlane.f32.xlu0 %v2010
    %v2012 = vpop.xlane.xlu0 %2011
    %v2013 = vsel %vm1982, %v1882, -inf
    %2014 = vmax.xlane.f32.xlu0 %v2013
    %v2015 = vpop.xlane.xlu0 %2014
    %v2016 = vsel %vm1982, %v1885, -inf
    %2017 = vmax.xlane.f32.xlu0 %v2016
    %v2018 = vpop.xlane.xlu0 %2017
    %v2019 = vsel %vm1982, %v1929, -inf
    %2020 = vmax.xlane.f32.xlu0 %v2019
    %v2021 = vpop.xlane.xlu0 %2020
    %v2022 = vsel %vm1982, %v1932, -inf
    %2023 = vmax.xlane.f32.xlu0 %v2022
    %v2024 = vpop.xlane.xlu0 %2023
    %v2025 = vsel %vm1982, %v1976, -inf
    %2026 = vmax.xlane.f32.xlu0 %v2025
    %v2027 = vpop.xlane.xlu0 %2026
    %v2028 = vsel %vm1982, %v1979, -inf
    %2029 = vmax.xlane.f32.xlu0 %v2028
    %v2030 = vpop.xlane.xlu0 %2029
    %v2031 = vsub.f32 %v1647, %v1985
    %v2032 = vsub.f32 %v1650, %v1988
    %v2033 = vsub.f32 %v1694, %v1991
    %v2034 = vsub.f32 %v1697, %v1994
    %v2035 = vsub.f32 %v1741, %v1997
    %v2036 = vsub.f32 %v1744, %v2000
    %v2037 = vsub.f32 %v1788, %v2003
    %v2038 = vsub.f32 %v1791, %v2006
    %v2039 = vsub.f32 %v1835, %v2009
    %v2040 = vsub.f32 %v1838, %v2012
    %v2041 = vsub.f32 %v1882, %v2015
    %v2042 = vsub.f32 %v1885, %v2018
    %v2043 = vsub.f32 %v1929, %v2021
    %v2044 = vsub.f32 %v1932, %v2024
    %v2045 = vsub.f32 %v1976, %v2027
    %v2046 = vsub.f32 %v1979, %v2030
    %v2047 = vmul.f32 %v2031, 1.442695
    %v2048 = vpow.pop %v2047
    %v2049 = vmul.f32 %v2032, 1.442695
    %v2050 = vpow.pop %v2049
    %v2051 = vmul.f32 %v2033, 1.442695
    %v2052 = vpow.pop %v2051
    %v2053 = vmul.f32 %v2034, 1.442695
    %v2054 = vpow.pop %v2053
    %v2055 = vmul.f32 %v2035, 1.442695
    %v2056 = vpow.pop %v2055
    %v2057 = vmul.f32 %v2036, 1.442695
    %v2058 = vpow.pop %v2057
    %v2059 = vmul.f32 %v2037, 1.442695
    %v2060 = vpow.pop %v2059
    %v2061 = vmul.f32 %v2038, 1.442695
    %v2062 = vpow.pop %v2061
    %v2063 = vmul.f32 %v2039, 1.442695
    %v2064 = vpow.pop %v2063
    %v2065 = vmul.f32 %v2040, 1.442695
    %v2066 = vpow.pop %v2065
    %v2067 = vmul.f32 %v2041, 1.442695
    %v2068 = vpow.pop %v2067
    %v2069 = vmul.f32 %v2042, 1.442695
    %v2070 = vpow.pop %v2069
    %v2071 = vmul.f32 %v2043, 1.442695
    %v2072 = vpow.pop %v2071
    %v2073 = vmul.f32 %v2044, 1.442695
    %v2074 = vpow.pop %v2073
    %v2075 = vmul.f32 %v2045, 1.442695
    %v2076 = vpow.pop %v2075
    %v2077 = vmul.f32 %v2046, 1.442695
    %v2078 = vpow.pop %v2077
    %v2079 = vsel %vm1982, %v2048, 0.0
    %2080 = vadd.xlane.f32.xlu0 %v2079
    %v2081 = vpop.xlane.xlu0 %2080
    %v2082 = vsel %vm1982, %v2050, 0.0
    %2083 = vadd.xlane.f32.xlu0 %v2082
    %v2084 = vpop.xlane.xlu0 %2083
    %v2085 = vsel %vm1982, %v2052, 0.0
    %2086 = vadd.xlane.f32.xlu0 %v2085
    %v2087 = vpop.xlane.xlu0 %2086
    %v2088 = vsel %vm1982, %v2054, 0.0
    %2089 = vadd.xlane.f32.xlu0 %v2088
    %v2090 = vpop.xlane.xlu0 %2089
    %v2091 = vsel %vm1982, %v2056, 0.0
    %2092 = vadd.xlane.f32.xlu0 %v2091
    %v2093 = vpop.xlane.xlu0 %2092
    %v2094 = vsel %vm1982, %v2058, 0.0
    %2095 = vadd.xlane.f32.xlu0 %v2094
    %v2096 = vpop.xlane.xlu0 %2095
    %v2097 = vsel %vm1982, %v2060, 0.0
    %2098 = vadd.xlane.f32.xlu0 %v2097
    %v2099 = vpop.xlane.xlu0 %2098
    %v2100 = vsel %vm1982, %v2062, 0.0
    %2101 = vadd.xlane.f32.xlu0 %v2100
    %v2102 = vpop.xlane.xlu0 %2101
    %v2103 = vsel %vm1982, %v2064, 0.0
    %2104 = vadd.xlane.f32.xlu0 %v2103
    %v2105 = vpop.xlane.xlu0 %2104
    %v2106 = vsel %vm1982, %v2066, 0.0
    %2107 = vadd.xlane.f32.xlu0 %v2106
    %v2108 = vpop.xlane.xlu0 %2107
    %v2109 = vsel %vm1982, %v2068, 0.0
    %2110 = vadd.xlane.f32.xlu0 %v2109
    %v2111 = vpop.xlane.xlu0 %2110
    %v2112 = vsel %vm1982, %v2070, 0.0
    %2113 = vadd.xlane.f32.xlu0 %v2112
    %v2114 = vpop.xlane.xlu0 %2113
    %v2115 = vsel %vm1982, %v2072, 0.0
    %2116 = vadd.xlane.f32.xlu0 %v2115
    %v2117 = vpop.xlane.xlu0 %2116
    %v2118 = vsel %vm1982, %v2074, 0.0
    %2119 = vadd.xlane.f32.xlu0 %v2118
    %v2120 = vpop.xlane.xlu0 %2119
    %v2121 = vsel %vm1982, %v2076, 0.0
    %2122 = vadd.xlane.f32.xlu0 %v2121
    %v2123 = vpop.xlane.xlu0 %2122
    %v2124 = vsel %vm1982, %v2078, 0.0
    %2125 = vadd.xlane.f32.xlu0 %v2124
    %v2126 = vpop.xlane.xlu0 %2125
    %v2127 = vrcp.pop %v2081
    %v2128 = vrcp.pop %v2084
    %v2129 = vrcp.pop %v2087
    %v2130 = vrcp.pop %v2090
    %v2131 = vrcp.pop %v2093
    %v2132 = vrcp.pop %v2096
    %v2133 = vrcp.pop %v2099
    %v2134 = vrcp.pop %v2102
    %v2135 = vrcp.pop %v2105
    %v2136 = vrcp.pop %v2108
    %v2137 = vrcp.pop %v2111
    %v2138 = vrcp.pop %v2114
    %v2139 = vrcp.pop %v2117
    %v2140 = vrcp.pop %v2120
    %v2141 = vrcp.pop %v2123
    %v2142 = vrcp.pop %v2126
    %v2143 = vmul.f32 %v2048, %v2127
    %v2144 = vmul.f32 %v2050, %v2128
    %v2145 = vmul.f32 %v2052, %v2129
    %v2146 = vmul.f32 %v2054, %v2130
    %v2147 = vmul.f32 %v2056, %v2131
    %v2148 = vmul.f32 %v2058, %v2132
    %v2149 = vmul.f32 %v2060, %v2133
    %v2150 = vmul.f32 %v2062, %v2134
    %v2151 = vmul.f32 %v2064, %v2135
    %v2152 = vmul.f32 %v2066, %v2136
    %v2153 = vmul.f32 %v2068, %v2137
    %v2154 = vmul.f32 %v2070, %v2138
    %v2155 = vmul.f32 %v2072, %v2139
    %v2156 = vmul.f32 %v2074, %v2140
    %v2157 = vmul.f32 %v2076, %v2141
    %v2158 = vmul.f32 %v2078, %v2142
    %v2159 = vpack.c.bf16 %v2144, %v2143
    %v2160 = vpack.c.bf16 %v2146, %v2145
    %v2161 = vpack.c.bf16 %v2148, %v2147
    %v2162 = vpack.c.bf16 %v2150, %v2149
    %v2163 = vpack.c.bf16 %v2152, %v2151
    %v2164 = vpack.c.bf16 %v2154, %v2153
    %v2165 = vpack.c.bf16 %v2156, %v2155
    %v2166 = vpack.c.bf16 %v2158, %v2157
    %v2168 = vsel %vm1982, %v2159, 0
    %vm2170 = vcmask 1043456
    %v2172 = vsel %vm2170, %v1597, 0
    %2174 = vmatprep.subr.bf16.mxu0 0
    %2175 = vmatpush1.bf16.msra.mxu0 0
    %2176 = vmatprep.subr.bf16.mxu0 0
    %2177 = vmatpush1.bf16.msra.mxu0 0
    %2178 = vmatprep.subr.bf16.mxu0 0
    %2179 = vmatpush1.bf16.msra.mxu0 0
    %2180 = vmatprep.subr.bf16.mxu0 0
    %2181 = vmatpush1.bf16.msra.mxu0 0
    %2182 = vmatprep.subr.bf16.mxu0 0
    %2183 = vmatpush1.bf16.msra.mxu0 0
    %2184 = vmatprep.subr.bf16.mxu0 0
    %2185 = vmatpush1.bf16.msra.mxu0 0
    %2186 = vmatprep.subr.bf16.mxu0 0
    %2187 = vmatpush1.bf16.msra.mxu0 0
    %2188 = vmatprep.subr.bf16.mxu0 0
    %2189 = vmatpush1.bf16.msra.mxu0 %v2172
    %2190 = vmatprep.subr.bf16.mxu0 0
    %2191 = vmatpush2.bf16.msra.mxu0 0
    %2192 = vmatprep.subr.bf16.mxu0 0
    %2193 = vmatpush2.bf16.msra.mxu0 0
    %2194 = vmatprep.subr.bf16.mxu0 0
    %2195 = vmatpush2.bf16.msra.mxu0 0
    %2196 = vmatprep.subr.bf16.mxu0 0
    %2197 = vmatpush2.bf16.msra.mxu0 0
    %2198 = vmatprep.subr.bf16.mxu0 0
    %2199 = vmatpush2.bf16.msra.mxu0 0
    %2200 = vmatprep.subr.bf16.mxu0 0
    %2201 = vmatpush2.bf16.msra.mxu0 0
    %2202 = vmatprep.subr.bf16.mxu0 0
    %2203 = vmatpush2.bf16.msra.mxu0 0
    %2204 = vmatprep.subr.bf16.mxu0 0
    %2205 = vmatpush2.bf16.msra.mxu0 0
    %2206 = vmatprep.mubr.bf16.mxu0 0
    %2207 = vmatmul.mubr.bf16.gmra.mxu0 %v2168
    %v2208 = vpop.f32.mrf.mxu0
    %v2209 = vadd.f32 0.0, %v2208
    %v2210 = vpop.f32.mrf.mxu0
    %v2211 = vpop.f32.mrf.mxu0
    %v2212 = vadd.f32 0.0, %v2211
    %v2213 = vpop.f32.mrf.mxu0
    %2214 = vdwg.mxu0
    %v2216 = vsel %vm1982, %v2160, 0
    %v2219 = vsel %vm2170, %v1598, 0
    %2221 = vmatprep.subr.bf16.mxu0 0
    %2222 = vmatpush1.bf16.msra.mxu0 0
    %2223 = vmatprep.subr.bf16.mxu0 0
    %2224 = vmatpush1.bf16.msra.mxu0 0
    %2225 = vmatprep.subr.bf16.mxu0 0
    %2226 = vmatpush1.bf16.msra.mxu0 0
    %2227 = vmatprep.subr.bf16.mxu0 0
    %2228 = vmatpush1.bf16.msra.mxu0 0
    %2229 = vmatprep.subr.bf16.mxu0 0
    %2230 = vmatpush1.bf16.msra.mxu0 0
    %2231 = vmatprep.subr.bf16.mxu0 0
    %2232 = vmatpush1.bf16.msra.mxu0 0
    %2233 = vmatprep.subr.bf16.mxu0 0
    %2234 = vmatpush1.bf16.msra.mxu0 0
    %2235 = vmatprep.subr.bf16.mxu0 0
    %2236 = vmatpush1.bf16.msra.mxu0 %v2219
    %2237 = vmatprep.subr.bf16.mxu0 0
    %2238 = vmatpush2.bf16.msra.mxu0 0
    %2239 = vmatprep.subr.bf16.mxu0 0
    %2240 = vmatpush2.bf16.msra.mxu0 0
    %2241 = vmatprep.subr.bf16.mxu0 0
    %2242 = vmatpush2.bf16.msra.mxu0 0
    %2243 = vmatprep.subr.bf16.mxu0 0
    %2244 = vmatpush2.bf16.msra.mxu0 0
    %2245 = vmatprep.subr.bf16.mxu0 0
    %2246 = vmatpush2.bf16.msra.mxu0 0
    %2247 = vmatprep.subr.bf16.mxu0 0
    %2248 = vmatpush2.bf16.msra.mxu0 0
    %2249 = vmatprep.subr.bf16.mxu0 0
    %2250 = vmatpush2.bf16.msra.mxu0 0
    %2251 = vmatprep.subr.bf16.mxu0 0
    %2252 = vmatpush2.bf16.msra.mxu0 0
    %2253 = vmatprep.mubr.bf16.mxu0 0
    %2254 = vmatmul.mubr.bf16.gmra.mxu0 %v2216
    %v2255 = vpop.f32.mrf.mxu0
    %v2256 = vadd.f32 0.0, %v2255
    %v2257 = vpop.f32.mrf.mxu0
    %v2258 = vpop.f32.mrf.mxu0
    %v2259 = vadd.f32 0.0, %v2258
    %v2260 = vpop.f32.mrf.mxu0
    %2261 = vdwg.mxu0
    %v2263 = vsel %vm1982, %v2161, 0
    %v2266 = vsel %vm2170, %v1599, 0
    %2268 = vmatprep.subr.bf16.mxu0 0
    %2269 = vmatpush1.bf16.msra.mxu0 0
    %2270 = vmatprep.subr.bf16.mxu0 0
    %2271 = vmatpush1.bf16.msra.mxu0 0
    %2272 = vmatprep.subr.bf16.mxu0 0
    %2273 = vmatpush1.bf16.msra.mxu0 0
    %2274 = vmatprep.subr.bf16.mxu0 0
    %2275 = vmatpush1.bf16.msra.mxu0 0
    %2276 = vmatprep.subr.bf16.mxu0 0
    %2277 = vmatpush1.bf16.msra.mxu0 0
    %2278 = vmatprep.subr.bf16.mxu0 0
    %2279 = vmatpush1.bf16.msra.mxu0 0
    %2280 = vmatprep.subr.bf16.mxu0 0
    %2281 = vmatpush1.bf16.msra.mxu0 0
    %2282 = vmatprep.subr.bf16.mxu0 0
    %2283 = vmatpush1.bf16.msra.mxu0 %v2266
    %2284 = vmatprep.subr.bf16.mxu0 0
    %2285 = vmatpush2.bf16.msra.mxu0 0
    %2286 = vmatprep.subr.bf16.mxu0 0
    %2287 = vmatpush2.bf16.msra.mxu0 0
    %2288 = vmatprep.subr.bf16.mxu0 0
    %2289 = vmatpush2.bf16.msra.mxu0 0
    %2290 = vmatprep.subr.bf16.mxu0 0
    %2291 = vmatpush2.bf16.msra.mxu0 0
    %2292 = vmatprep.subr.bf16.mxu0 0
    %2293 = vmatpush2.bf16.msra.mxu0 0
    %2294 = vmatprep.subr.bf16.mxu0 0
    %2295 = vmatpush2.bf16.msra.mxu0 0
    %2296 = vmatprep.subr.bf16.mxu0 0
    %2297 = vmatpush2.bf16.msra.mxu0 0
    %2298 = vmatprep.subr.bf16.mxu0 0
    %2299 = vmatpush2.bf16.msra.mxu0 0
    %2300 = vmatprep.mubr.bf16.mxu0 0
    %2301 = vmatmul.mubr.bf16.gmra.mxu0 %v2263
    %v2302 = vpop.f32.mrf.mxu0
    %v2303 = vadd.f32 0.0, %v2302
    %v2304 = vpop.f32.mrf.mxu0
    %v2305 = vpop.f32.mrf.mxu0
    %v2306 = vadd.f32 0.0, %v2305
    %v2307 = vpop.f32.mrf.mxu0
    %2308 = vdwg.mxu0
    %v2310 = vsel %vm1982, %v2162, 0
    %v2313 = vsel %vm2170, %v1600, 0
    %2315 = vmatprep.subr.bf16.mxu0 0
    %2316 = vmatpush1.bf16.msra.mxu0 0
    %2317 = vmatprep.subr.bf16.mxu0 0
    %2318 = vmatpush1.bf16.msra.mxu0 0
    %2319 = vmatprep.subr.bf16.mxu0 0
    %2320 = vmatpush1.bf16.msra.mxu0 0
    %2321 = vmatprep.subr.bf16.mxu0 0
    %2322 = vmatpush1.bf16.msra.mxu0 0
    %2323 = vmatprep.subr.bf16.mxu0 0
    %2324 = vmatpush1.bf16.msra.mxu0 0
    %2325 = vmatprep.subr.bf16.mxu0 0
    %2326 = vmatpush1.bf16.msra.mxu0 0
    %2327 = vmatprep.subr.bf16.mxu0 0
    %2328 = vmatpush1.bf16.msra.mxu0 0
    %2329 = vmatprep.subr.bf16.mxu0 0
    %2330 = vmatpush1.bf16.msra.mxu0 %v2313
    %2331 = vmatprep.subr.bf16.mxu0 0
    %2332 = vmatpush2.bf16.msra.mxu0 0
    %2333 = vmatprep.subr.bf16.mxu0 0
    %2334 = vmatpush2.bf16.msra.mxu0 0
    %2335 = vmatprep.subr.bf16.mxu0 0
    %2336 = vmatpush2.bf16.msra.mxu0 0
    %2337 = vmatprep.subr.bf16.mxu0 0
    %2338 = vmatpush2.bf16.msra.mxu0 0
    %2339 = vmatprep.subr.bf16.mxu0 0
    %2340 = vmatpush2.bf16.msra.mxu0 0
    %2341 = vmatprep.subr.bf16.mxu0 0
    %2342 = vmatpush2.bf16.msra.mxu0 0
    %2343 = vmatprep.subr.bf16.mxu0 0
    %2344 = vmatpush2.bf16.msra.mxu0 0
    %2345 = vmatprep.subr.bf16.mxu0 0
    %2346 = vmatpush2.bf16.msra.mxu0 0
    %2347 = vmatprep.mubr.bf16.mxu0 0
    %2348 = vmatmul.mubr.bf16.gmra.mxu0 %v2310
    %v2349 = vpop.f32.mrf.mxu0
    %v2350 = vadd.f32 0.0, %v2349
    %v2351 = vpop.f32.mrf.mxu0
    %v2352 = vpop.f32.mrf.mxu0
    %v2353 = vadd.f32 0.0, %v2352
    %v2354 = vpop.f32.mrf.mxu0
    %2355 = vdwg.mxu0
    %v2357 = vsel %vm1982, %v2163, 0
    %v2360 = vsel %vm2170, %v1601, 0
    %2362 = vmatprep.subr.bf16.mxu0 0
    %2363 = vmatpush1.bf16.msra.mxu0 0
    %2364 = vmatprep.subr.bf16.mxu0 0
    %2365 = vmatpush1.bf16.msra.mxu0 0
    %2366 = vmatprep.subr.bf16.mxu0 0
    %2367 = vmatpush1.bf16.msra.mxu0 0
    %2368 = vmatprep.subr.bf16.mxu0 0
    %2369 = vmatpush1.bf16.msra.mxu0 0
    %2370 = vmatprep.subr.bf16.mxu0 0
    %2371 = vmatpush1.bf16.msra.mxu0 0
    %2372 = vmatprep.subr.bf16.mxu0 0
    %2373 = vmatpush1.bf16.msra.mxu0 0
    %2374 = vmatprep.subr.bf16.mxu0 0
    %2375 = vmatpush1.bf16.msra.mxu0 0
    %2376 = vmatprep.subr.bf16.mxu0 0
    %2377 = vmatpush1.bf16.msra.mxu0 %v2360
    %2378 = vmatprep.subr.bf16.mxu0 0
    %2379 = vmatpush2.bf16.msra.mxu0 0
    %2380 = vmatprep.subr.bf16.mxu0 0
    %2381 = vmatpush2.bf16.msra.mxu0 0
    %2382 = vmatprep.subr.bf16.mxu0 0
    %2383 = vmatpush2.bf16.msra.mxu0 0
    %2384 = vmatprep.subr.bf16.mxu0 0
    %2385 = vmatpush2.bf16.msra.mxu0 0
    %2386 = vmatprep.subr.bf16.mxu0 0
    %2387 = vmatpush2.bf16.msra.mxu0 0
    %2388 = vmatprep.subr.bf16.mxu0 0
    %2389 = vmatpush2.bf16.msra.mxu0 0
    %2390 = vmatprep.subr.bf16.mxu0 0
    %2391 = vmatpush2.bf16.msra.mxu0 0
    %2392 = vmatprep.subr.bf16.mxu0 0
    %2393 = vmatpush2.bf16.msra.mxu0 0
    %2394 = vmatprep.mubr.bf16.mxu0 0
    %2395 = vmatmul.mubr.bf16.gmra.mxu0 %v2357
    %v2396 = vpop.f32.mrf.mxu0
    %v2397 = vadd.f32 0.0, %v2396
    %v2398 = vpop.f32.mrf.mxu0
    %v2399 = vpop.f32.mrf.mxu0
    %v2400 = vadd.f32 0.0, %v2399
    %v2401 = vpop.f32.mrf.mxu0
    %2402 = vdwg.mxu0
    %v2404 = vsel %vm1982, %v2164, 0
    %v2407 = vsel %vm2170, %v1602, 0
    %2409 = vmatprep.subr.bf16.mxu0 0
    %2410 = vmatpush1.bf16.msra.mxu0 0
    %2411 = vmatprep.subr.bf16.mxu0 0
    %2412 = vmatpush1.bf16.msra.mxu0 0
    %2413 = vmatprep.subr.bf16.mxu0 0
    %2414 = vmatpush1.bf16.msra.mxu0 0
    %2415 = vmatprep.subr.bf16.mxu0 0
    %2416 = vmatpush1.bf16.msra.mxu0 0
    %2417 = vmatprep.subr.bf16.mxu0 0
    %2418 = vmatpush1.bf16.msra.mxu0 0
    %2419 = vmatprep.subr.bf16.mxu0 0
    %2420 = vmatpush1.bf16.msra.mxu0 0
    %2421 = vmatprep.subr.bf16.mxu0 0
    %2422 = vmatpush1.bf16.msra.mxu0 0
    %2423 = vmatprep.subr.bf16.mxu0 0
    %2424 = vmatpush1.bf16.msra.mxu0 %v2407
    %2425 = vmatprep.subr.bf16.mxu0 0
    %2426 = vmatpush2.bf16.msra.mxu0 0
    %2427 = vmatprep.subr.bf16.mxu0 0
    %2428 = vmatpush2.bf16.msra.mxu0 0
    %2429 = vmatprep.subr.bf16.mxu0 0
    %2430 = vmatpush2.bf16.msra.mxu0 0
    %2431 = vmatprep.subr.bf16.mxu0 0
    %2432 = vmatpush2.bf16.msra.mxu0 0
    %2433 = vmatprep.subr.bf16.mxu0 0
    %2434 = vmatpush2.bf16.msra.mxu0 0
    %2435 = vmatprep.subr.bf16.mxu0 0
    %2436 = vmatpush2.bf16.msra.mxu0 0
    %2437 = vmatprep.subr.bf16.mxu0 0
    %2438 = vmatpush2.bf16.msra.mxu0 0
    %2439 = vmatprep.subr.bf16.mxu0 0
    %2440 = vmatpush2.bf16.msra.mxu0 0
    %2441 = vmatprep.mubr.bf16.mxu0 0
    %2442 = vmatmul.mubr.bf16.gmra.mxu0 %v2404
    %v2443 = vpop.f32.mrf.mxu0
    %v2444 = vadd.f32 0.0, %v2443
    %v2445 = vpop.f32.mrf.mxu0
    %v2446 = vpop.f32.mrf.mxu0
    %v2447 = vadd.f32 0.0, %v2446
    %v2448 = vpop.f32.mrf.mxu0
    %2449 = vdwg.mxu0
    %v2451 = vsel %vm1982, %v2165, 0
    %v2454 = vsel %vm2170, %v1603, 0
    %2456 = vmatprep.subr.bf16.mxu0 0
    %2457 = vmatpush1.bf16.msra.mxu0 0
    %2458 = vmatprep.subr.bf16.mxu0 0
    %2459 = vmatpush1.bf16.msra.mxu0 0
    %2460 = vmatprep.subr.bf16.mxu0 0
    %2461 = vmatpush1.bf16.msra.mxu0 0
    %2462 = vmatprep.subr.bf16.mxu0 0
    %2463 = vmatpush1.bf16.msra.mxu0 0
    %2464 = vmatprep.subr.bf16.mxu0 0
    %2465 = vmatpush1.bf16.msra.mxu0 0
    %2466 = vmatprep.subr.bf16.mxu0 0
    %2467 = vmatpush1.bf16.msra.mxu0 0
    %2468 = vmatprep.subr.bf16.mxu0 0
    %2469 = vmatpush1.bf16.msra.mxu0 0
    %2470 = vmatprep.subr.bf16.mxu0 0
    %2471 = vmatpush1.bf16.msra.mxu0 %v2454
    %2472 = vmatprep.subr.bf16.mxu0 0
    %2473 = vmatpush2.bf16.msra.mxu0 0
    %2474 = vmatprep.subr.bf16.mxu0 0
    %2475 = vmatpush2.bf16.msra.mxu0 0
    %2476 = vmatprep.subr.bf16.mxu0 0
    %2477 = vmatpush2.bf16.msra.mxu0 0
    %2478 = vmatprep.subr.bf16.mxu0 0
    %2479 = vmatpush2.bf16.msra.mxu0 0
    %2480 = vmatprep.subr.bf16.mxu0 0
    %2481 = vmatpush2.bf16.msra.mxu0 0
    %2482 = vmatprep.subr.bf16.mxu0 0
    %2483 = vmatpush2.bf16.msra.mxu0 0
    %2484 = vmatprep.subr.bf16.mxu0 0
    %2485 = vmatpush2.bf16.msra.mxu0 0
    %2486 = vmatprep.subr.bf16.mxu0 0
    %2487 = vmatpush2.bf16.msra.mxu0 0
    %2488 = vmatprep.mubr.bf16.mxu0 0
    %2489 = vmatmul.mubr.bf16.gmra.mxu0 %v2451
    %v2490 = vpop.f32.mrf.mxu0
    %v2491 = vadd.f32 0.0, %v2490
    %v2492 = vpop.f32.mrf.mxu0
    %v2493 = vpop.f32.mrf.mxu0
    %v2494 = vadd.f32 0.0, %v2493
    %v2495 = vpop.f32.mrf.mxu0
    %2496 = vdwg.mxu0
    %v2498 = vsel %vm1982, %v2166, 0
    %v2501 = vsel %vm2170, %v1604, 0
    %2503 = vmatprep.subr.bf16.mxu0 0
    %2504 = vmatpush1.bf16.msra.mxu0 0
    %2505 = vmatprep.subr.bf16.mxu0 0
    %2506 = vmatpush1.bf16.msra.mxu0 0
    %2507 = vmatprep.subr.bf16.mxu0 0
    %2508 = vmatpush1.bf16.msra.mxu0 0
    %2509 = vmatprep.subr.bf16.mxu0 0
    %2510 = vmatpush1.bf16.msra.mxu0 0
    %2511 = vmatprep.subr.bf16.mxu0 0
    %2512 = vmatpush1.bf16.msra.mxu0 0
    %2513 = vmatprep.subr.bf16.mxu0 0
    %2514 = vmatpush1.bf16.msra.mxu0 0
    %2515 = vmatprep.subr.bf16.mxu0 0
    %2516 = vmatpush1.bf16.msra.mxu0 0
    %2517 = vmatprep.subr.bf16.mxu0 0
    %2518 = vmatpush1.bf16.msra.mxu0 %v2501
    %2519 = vmatprep.subr.bf16.mxu0 0
    %2520 = vmatpush2.bf16.msra.mxu0 0
    %2521 = vmatprep.subr.bf16.mxu0 0
    %2522 = vmatpush2.bf16.msra.mxu0 0
    %2523 = vmatprep.subr.bf16.mxu0 0
    %2524 = vmatpush2.bf16.msra.mxu0 0
    %2525 = vmatprep.subr.bf16.mxu0 0
    %2526 = vmatpush2.bf16.msra.mxu0 0
    %2527 = vmatprep.subr.bf16.mxu0 0
    %2528 = vmatpush2.bf16.msra.mxu0 0
    %2529 = vmatprep.subr.bf16.mxu0 0
    %2530 = vmatpush2.bf16.msra.mxu0 0
    %2531 = vmatprep.subr.bf16.mxu0 0
    %2532 = vmatpush2.bf16.msra.mxu0 0
    %2533 = vmatprep.subr.bf16.mxu0 0
    %2534 = vmatpush2.bf16.msra.mxu0 0
    %2535 = vmatprep.mubr.bf16.mxu0 0
    %2536 = vmatmul.mubr.bf16.gmra.mxu0 %v2498
    %v2537 = vpop.f32.mrf.mxu0
    %v2538 = vadd.f32 0.0, %v2537
    %v2539 = vpop.f32.mrf.mxu0
    %v2540 = vpop.f32.mrf.mxu0
    %v2541 = vadd.f32 0.0, %v2540
    %v2542 = vpop.f32.mrf.mxu0
    %2543 = vdwg.mxu0
    %v2544 = vcombine.low %v2209, %v2303
    %v2545 = vcombine.high %v2209, %v2303
    %v2547 = vunpack.c.l.s4 1983009808
    %v2548 = vunpack.c.0.s8 %v2547
    %v2549 = vlaneseq
    %v2550 = vshrl.u32 %v2549, 7
    %v2551 = vsub.s32 %v2548, %v2550
    %v2552 = vrot.slane %v2544, %v2551
    %v2554 = vunpack.c.l.s4 1983009808
    %v2555 = vunpack.c.0.s8 %v2554
    %v2556 = vlaneseq
    %v2557 = vshrl.u32 %v2556, 7
    %v2558 = vsub.s32 %v2555, %v2557
    %v2559 = vrot.slane %v2545, %v2558
    %v2560 = vcombine.low %v2256, %v2350
    %v2561 = vcombine.high %v2256, %v2350
    %v2563 = vunpack.c.l.s4 1983009808
    %v2564 = vunpack.c.0.s8 %v2563
    %v2565 = vlaneseq
    %v2566 = vshrl.u32 %v2565, 7
    %v2567 = vsub.s32 %v2564, %v2566
    %v2568 = vrot.slane %v2560, %v2567
    %v2570 = vunpack.c.l.s4 1983009808
    %v2571 = vunpack.c.0.s8 %v2570
    %v2572 = vlaneseq
    %v2573 = vshrl.u32 %v2572, 7
    %v2574 = vsub.s32 %v2571, %v2573
    %v2575 = vrot.slane %v2561, %v2574
    %v2576 = vcombine.low %v2552, %v2568
    %v2577 = vcombine.high %v2552, %v2568
    %v2579 = vunpack.c.l.s4 1934713408
    %v2580 = vunpack.c.0.s8 %v2579
    %v2581 = vlaneseq
    %v2582 = vshrl.u32 %v2581, 7
    %v2583 = vsub.s32 %v2580, %v2582
    %v2584 = vrot.slane %v2576, %v2583
    %v2586 = vunpack.c.l.s4 1934713408
    %v2587 = vunpack.c.0.s8 %v2586
    %v2588 = vlaneseq
    %v2589 = vshrl.u32 %v2588, 7
    %v2590 = vsub.s32 %v2587, %v2589
    %v2591 = vrot.slane %v2577, %v2590
    %v2592 = vcombine.low %v2559, %v2575
    %v2593 = vcombine.high %v2559, %v2575
    %v2595 = vunpack.c.l.s4 1934713408
    %v2596 = vunpack.c.0.s8 %v2595
    %v2597 = vlaneseq
    %v2598 = vshrl.u32 %v2597, 7
    %v2599 = vsub.s32 %v2596, %v2598
    %v2600 = vrot.slane %v2592, %v2599
    %v2602 = vunpack.c.l.s4 1934713408
    %v2603 = vunpack.c.0.s8 %v2602
    %v2604 = vlaneseq
    %v2605 = vshrl.u32 %v2604, 7
    %v2606 = vsub.s32 %v2603, %v2605
    %v2607 = vrot.slane %v2593, %v2606
    %v2608 = vcombine.high %v2584, 0.0
    %v2609 = vcombine.high %v2591, 0.0
    %v2610 = vcombine.high %v2600, 0.0
    %v2611 = vcombine.high %v2607, 0.0
    %v2612 = vcombine.low %v2212, %v2306
    %v2613 = vcombine.high %v2212, %v2306
    %v2615 = vunpack.c.l.s4 1983009808
    %v2616 = vunpack.c.0.s8 %v2615
    %v2617 = vlaneseq
    %v2618 = vshrl.u32 %v2617, 7
    %v2619 = vsub.s32 %v2616, %v2618
    %v2620 = vrot.slane %v2612, %v2619
    %v2622 = vunpack.c.l.s4 1983009808
    %v2623 = vunpack.c.0.s8 %v2622
    %v2624 = vlaneseq
    %v2625 = vshrl.u32 %v2624, 7
    %v2626 = vsub.s32 %v2623, %v2625
    %v2627 = vrot.slane %v2613, %v2626
    %v2628 = vcombine.low %v2259, %v2353
    %v2629 = vcombine.high %v2259, %v2353
    %v2631 = vunpack.c.l.s4 1983009808
    %v2632 = vunpack.c.0.s8 %v2631
    %v2633 = vlaneseq
    %v2634 = vshrl.u32 %v2633, 7
    %v2635 = vsub.s32 %v2632, %v2634
    %v2636 = vrot.slane %v2628, %v2635
    %v2638 = vunpack.c.l.s4 1983009808
    %v2639 = vunpack.c.0.s8 %v2638
    %v2640 = vlaneseq
    %v2641 = vshrl.u32 %v2640, 7
    %v2642 = vsub.s32 %v2639, %v2641
    %v2643 = vrot.slane %v2629, %v2642
    %v2644 = vcombine.low %v2620, %v2636
    %v2645 = vcombine.high %v2620, %v2636
    %v2647 = vunpack.c.l.s4 1934713408
    %v2648 = vunpack.c.0.s8 %v2647
    %v2649 = vlaneseq
    %v2650 = vshrl.u32 %v2649, 7
    %v2651 = vsub.s32 %v2648, %v2650
    %v2652 = vrot.slane %v2644, %v2651
    %v2654 = vunpack.c.l.s4 1934713408
    %v2655 = vunpack.c.0.s8 %v2654
    %v2656 = vlaneseq
    %v2657 = vshrl.u32 %v2656, 7
    %v2658 = vsub.s32 %v2655, %v2657
    %v2659 = vrot.slane %v2645, %v2658
    %v2660 = vcombine.low %v2627, %v2643
    %v2661 = vcombine.high %v2627, %v2643
    %v2663 = vunpack.c.l.s4 1934713408
    %v2664 = vunpack.c.0.s8 %v2663
    %v2665 = vlaneseq
    %v2666 = vshrl.u32 %v2665, 7
    %v2667 = vsub.s32 %v2664, %v2666
    %v2668 = vrot.slane %v2660, %v2667
    %v2670 = vunpack.c.l.s4 1934713408
    %v2671 = vunpack.c.0.s8 %v2670
    %v2672 = vlaneseq
    %v2673 = vshrl.u32 %v2672, 7
    %v2674 = vsub.s32 %v2671, %v2673
    %v2675 = vrot.slane %v2661, %v2674
    %v2676 = vcombine.high %v2652, 0.0
    %v2677 = vcombine.high %v2659, 0.0
    %v2678 = vcombine.high %v2668, 0.0
    %v2679 = vcombine.high %v2675, 0.0
    %v2680 = vcombine.low %v2397, %v2491
    %v2681 = vcombine.high %v2397, %v2491
    %v2683 = vunpack.c.l.s4 1983009808
    %v2684 = vunpack.c.0.s8 %v2683
    %v2685 = vlaneseq
    %v2686 = vshrl.u32 %v2685, 7
    %v2687 = vsub.s32 %v2684, %v2686
    %v2688 = vrot.slane %v2680, %v2687
    %v2690 = vunpack.c.l.s4 1983009808
    %v2691 = vunpack.c.0.s8 %v2690
    %v2692 = vlaneseq
    %v2693 = vshrl.u32 %v2692, 7
    %v2694 = vsub.s32 %v2691, %v2693
    %v2695 = vrot.slane %v2681, %v2694
    %v2696 = vcombine.low %v2444, %v2538
    %v2697 = vcombine.high %v2444, %v2538
    %v2699 = vunpack.c.l.s4 1983009808
    %v2700 = vunpack.c.0.s8 %v2699
    %v2701 = vlaneseq
    %v2702 = vshrl.u32 %v2701, 7
    %v2703 = vsub.s32 %v2700, %v2702
    %v2704 = vrot.slane %v2696, %v2703
    %v2706 = vunpack.c.l.s4 1983009808
    %v2707 = vunpack.c.0.s8 %v2706
    %v2708 = vlaneseq
    %v2709 = vshrl.u32 %v2708, 7
    %v2710 = vsub.s32 %v2707, %v2709
    %v2711 = vrot.slane %v2697, %v2710
    %v2712 = vcombine.low %v2688, %v2704
    %v2713 = vcombine.high %v2688, %v2704
    %v2715 = vunpack.c.l.s4 1934713408
    %v2716 = vunpack.c.0.s8 %v2715
    %v2717 = vlaneseq
    %v2718 = vshrl.u32 %v2717, 7
    %v2719 = vsub.s32 %v2716, %v2718
    %v2720 = vrot.slane %v2712, %v2719
    %v2722 = vunpack.c.l.s4 1934713408
    %v2723 = vunpack.c.0.s8 %v2722
    %v2724 = vlaneseq
    %v2725 = vshrl.u32 %v2724, 7
    %v2726 = vsub.s32 %v2723, %v2725
    %v2727 = vrot.slane %v2713, %v2726
    %v2728 = vcombine.low %v2695, %v2711
    %v2729 = vcombine.high %v2695, %v2711
    %v2731 = vunpack.c.l.s4 1934713408
    %v2732 = vunpack.c.0.s8 %v2731
    %v2733 = vlaneseq
    %v2734 = vshrl.u32 %v2733, 7
    %v2735 = vsub.s32 %v2732, %v2734
    %v2736 = vrot.slane %v2728, %v2735
    %v2738 = vunpack.c.l.s4 1934713408
    %v2739 = vunpack.c.0.s8 %v2738
    %v2740 = vlaneseq
    %v2741 = vshrl.u32 %v2740, 7
    %v2742 = vsub.s32 %v2739, %v2741
    %v2743 = vrot.slane %v2729, %v2742
    %v2744 = vcombine.high %v2720, 0.0
    %v2745 = vcombine.high %v2727, 0.0
    %v2746 = vcombine.high %v2736, 0.0
    %v2747 = vcombine.high %v2743, 0.0
    %v2748 = vcombine.low %v2400, %v2494
    %v2749 = vcombine.high %v2400, %v2494
    %v2751 = vunpack.c.l.s4 1983009808
    %v2752 = vunpack.c.0.s8 %v2751
    %v2753 = vlaneseq
    %v2754 = vshrl.u32 %v2753, 7
    %v2755 = vsub.s32 %v2752, %v2754
    %v2756 = vrot.slane %v2748, %v2755
    %v2758 = vunpack.c.l.s4 1983009808
    %v2759 = vunpack.c.0.s8 %v2758
    %v2760 = vlaneseq
    %v2761 = vshrl.u32 %v2760, 7
    %v2762 = vsub.s32 %v2759, %v2761
    %v2763 = vrot.slane %v2749, %v2762
    %v2764 = vcombine.low %v2447, %v2541
    %v2765 = vcombine.high %v2447, %v2541
    %v2767 = vunpack.c.l.s4 1983009808
    %v2768 = vunpack.c.0.s8 %v2767
    %v2769 = vlaneseq
    %v2770 = vshrl.u32 %v2769, 7
    %v2771 = vsub.s32 %v2768, %v2770
    %v2772 = vrot.slane %v2764, %v2771
    %v2774 = vunpack.c.l.s4 1983009808
    %v2775 = vunpack.c.0.s8 %v2774
    %v2776 = vlaneseq
    %v2777 = vshrl.u32 %v2776, 7
    %v2778 = vsub.s32 %v2775, %v2777
    %v2779 = vrot.slane %v2765, %v2778
    %v2780 = vcombine.low %v2756, %v2772
    %v2781 = vcombine.high %v2756, %v2772
    %v2783 = vunpack.c.l.s4 1934713408
    %v2784 = vunpack.c.0.s8 %v2783
    %v2785 = vlaneseq
    %v2786 = vshrl.u32 %v2785, 7
    %v2787 = vsub.s32 %v2784, %v2786
    %v2788 = vrot.slane %v2780, %v2787
    %v2790 = vunpack.c.l.s4 1934713408
    %v2791 = vunpack.c.0.s8 %v2790
    %v2792 = vlaneseq
    %v2793 = vshrl.u32 %v2792, 7
    %v2794 = vsub.s32 %v2791, %v2793
    %v2795 = vrot.slane %v2781, %v2794
    %v2796 = vcombine.low %v2763, %v2779
    %v2797 = vcombine.high %v2763, %v2779
    %v2799 = vunpack.c.l.s4 1934713408
    %v2800 = vunpack.c.0.s8 %v2799
    %v2801 = vlaneseq
    %v2802 = vshrl.u32 %v2801, 7
    %v2803 = vsub.s32 %v2800, %v2802
    %v2804 = vrot.slane %v2796, %v2803
    %v2806 = vunpack.c.l.s4 1934713408
    %v2807 = vunpack.c.0.s8 %v2806
    %v2808 = vlaneseq
    %v2809 = vshrl.u32 %v2808, 7
    %v2810 = vsub.s32 %v2807, %v2809
    %v2811 = vrot.slane %v2797, %v2810
    %v2812 = vcombine.high %v2788, 0.0
    %v2813 = vcombine.high %v2795, 0.0
    %v2814 = vcombine.high %v2804, 0.0
    %v2815 = vcombine.high %v2811, 0.0
    %v2816 = vcombine.low %v2584, %v2591
    %v2818 = vunpack.c.l.s4 1983009808
    %v2819 = vunpack.c.0.s8 %v2818
    %v2820 = vlaneseq
    %v2821 = vshrl.u32 %v2820, 7
    %v2822 = vsub.s32 %v2819, %v2821
    %v2823 = vrot.slane %v2816, %v2822
    %v2824 = vcombine.low %v2608, %v2609
    %v2826 = vunpack.c.l.s4 1983009808
    %v2827 = vunpack.c.0.s8 %v2826
    %v2828 = vlaneseq
    %v2829 = vshrl.u32 %v2828, 7
    %v2830 = vsub.s32 %v2827, %v2829
    %v2831 = vrot.slane %v2824, %v2830
    %v2832 = vcombine.low %v2600, %v2607
    %v2834 = vunpack.c.l.s4 1983009808
    %v2835 = vunpack.c.0.s8 %v2834
    %v2836 = vlaneseq
    %v2837 = vshrl.u32 %v2836, 7
    %v2838 = vsub.s32 %v2835, %v2837
    %v2839 = vrot.slane %v2832, %v2838
    %v2840 = vcombine.low %v2610, %v2611
    %v2842 = vunpack.c.l.s4 1983009808
    %v2843 = vunpack.c.0.s8 %v2842
    %v2844 = vlaneseq
    %v2845 = vshrl.u32 %v2844, 7
    %v2846 = vsub.s32 %v2843, %v2845
    %v2847 = vrot.slane %v2840, %v2846
    %v2848 = vcombine.low %v2823, %v2831
    %v2849 = vcombine.high %v2823, %v2831
    %v2851 = vunpack.c.l.s4 1934713408
    %v2852 = vunpack.c.0.s8 %v2851
    %v2853 = vlaneseq
    %v2854 = vshrl.u32 %v2853, 7
    %v2855 = vsub.s32 %v2852, %v2854
    %v2856 = vrot.slane %v2848, %v2855
    %v2858 = vunpack.c.l.s4 1934713408
    %v2859 = vunpack.c.0.s8 %v2858
    %v2860 = vlaneseq
    %v2861 = vshrl.u32 %v2860, 7
    %v2862 = vsub.s32 %v2859, %v2861
    %v2863 = vrot.slane %v2849, %v2862
    %v2864 = vcombine.low %v2839, %v2847
    %v2865 = vcombine.high %v2839, %v2847
    %v2867 = vunpack.c.l.s4 1934713408
    %v2868 = vunpack.c.0.s8 %v2867
    %v2869 = vlaneseq
    %v2870 = vshrl.u32 %v2869, 7
    %v2871 = vsub.s32 %v2868, %v2870
    %v2872 = vrot.slane %v2864, %v2871
    %v2874 = vunpack.c.l.s4 1934713408
    %v2875 = vunpack.c.0.s8 %v2874
    %v2876 = vlaneseq
    %v2877 = vshrl.u32 %v2876, 7
    %v2878 = vsub.s32 %v2875, %v2877
    %v2879 = vrot.slane %v2865, %v2878
    %v2880 = vcombine.low %v2856, %v2872
    %v2881 = vcombine.high %v2856, %v2872
    %v2882 = vcombine.low %v2863, %v2879
    %v2883 = vcombine.high %v2863, %v2879
    %v2884 = vcombine.low %v2652, %v2659
    %v2886 = vunpack.c.l.s4 1983009808
    %v2887 = vunpack.c.0.s8 %v2886
    %v2888 = vlaneseq
    %v2889 = vshrl.u32 %v2888, 7
    %v2890 = vsub.s32 %v2887, %v2889
    %v2891 = vrot.slane %v2884, %v2890
    %v2892 = vcombine.low %v2676, %v2677
    %v2894 = vunpack.c.l.s4 1983009808
    %v2895 = vunpack.c.0.s8 %v2894
    %v2896 = vlaneseq
    %v2897 = vshrl.u32 %v2896, 7
    %v2898 = vsub.s32 %v2895, %v2897
    %v2899 = vrot.slane %v2892, %v2898
    %v2900 = vcombine.low %v2668, %v2675
    %v2902 = vunpack.c.l.s4 1983009808
    %v2903 = vunpack.c.0.s8 %v2902
    %v2904 = vlaneseq
    %v2905 = vshrl.u32 %v2904, 7
    %v2906 = vsub.s32 %v2903, %v2905
    %v2907 = vrot.slane %v2900, %v2906
    %v2908 = vcombine.low %v2678, %v2679
    %v2910 = vunpack.c.l.s4 1983009808
    %v2911 = vunpack.c.0.s8 %v2910
    %v2912 = vlaneseq
    %v2913 = vshrl.u32 %v2912, 7
    %v2914 = vsub.s32 %v2911, %v2913
    %v2915 = vrot.slane %v2908, %v2914
    %v2916 = vcombine.low %v2891, %v2899
    %v2917 = vcombine.high %v2891, %v2899
    %v2919 = vunpack.c.l.s4 1934713408
    %v2920 = vunpack.c.0.s8 %v2919
    %v2921 = vlaneseq
    %v2922 = vshrl.u32 %v2921, 7
    %v2923 = vsub.s32 %v2920, %v2922
    %v2924 = vrot.slane %v2916, %v2923
    %v2926 = vunpack.c.l.s4 1934713408
    %v2927 = vunpack.c.0.s8 %v2926
    %v2928 = vlaneseq
    %v2929 = vshrl.u32 %v2928, 7
    %v2930 = vsub.s32 %v2927, %v2929
    %v2931 = vrot.slane %v2917, %v2930
    %v2932 = vcombine.low %v2907, %v2915
    %v2933 = vcombine.high %v2907, %v2915
    %v2935 = vunpack.c.l.s4 1934713408
    %v2936 = vunpack.c.0.s8 %v2935
    %v2937 = vlaneseq
    %v2938 = vshrl.u32 %v2937, 7
    %v2939 = vsub.s32 %v2936, %v2938
    %v2940 = vrot.slane %v2932, %v2939
    %v2942 = vunpack.c.l.s4 1934713408
    %v2943 = vunpack.c.0.s8 %v2942
    %v2944 = vlaneseq
    %v2945 = vshrl.u32 %v2944, 7
    %v2946 = vsub.s32 %v2943, %v2945
    %v2947 = vrot.slane %v2933, %v2946
    %v2948 = vcombine.low %v2924, %v2940
    %v2949 = vcombine.high %v2924, %v2940
    %v2950 = vcombine.low %v2931, %v2947
    %v2951 = vcombine.high %v2931, %v2947
    %v2952 = vcombine.low %v2720, %v2727
    %v2954 = vunpack.c.l.s4 1983009808
    %v2955 = vunpack.c.0.s8 %v2954
    %v2956 = vlaneseq
    %v2957 = vshrl.u32 %v2956, 7
    %v2958 = vsub.s32 %v2955, %v2957
    %v2959 = vrot.slane %v2952, %v2958
    %v2960 = vcombine.low %v2744, %v2745
    %v2962 = vunpack.c.l.s4 1983009808
    %v2963 = vunpack.c.0.s8 %v2962
    %v2964 = vlaneseq
    %v2965 = vshrl.u32 %v2964, 7
    %v2966 = vsub.s32 %v2963, %v2965
    %v2967 = vrot.slane %v2960, %v2966
    %v2968 = vcombine.low %v2736, %v2743
    %v2970 = vunpack.c.l.s4 1983009808
    %v2971 = vunpack.c.0.s8 %v2970
    %v2972 = vlaneseq
    %v2973 = vshrl.u32 %v2972, 7
    %v2974 = vsub.s32 %v2971, %v2973
    %v2975 = vrot.slane %v2968, %v2974
    %v2976 = vcombine.low %v2746, %v2747
    %v2978 = vunpack.c.l.s4 1983009808
    %v2979 = vunpack.c.0.s8 %v2978
    %v2980 = vlaneseq
    %v2981 = vshrl.u32 %v2980, 7
    %v2982 = vsub.s32 %v2979, %v2981
    %v2983 = vrot.slane %v2976, %v2982
    %v2984 = vcombine.low %v2959, %v2967
    %v2985 = vcombine.high %v2959, %v2967
    %v2987 = vunpack.c.l.s4 1934713408
    %v2988 = vunpack.c.0.s8 %v2987
    %v2989 = vlaneseq
    %v2990 = vshrl.u32 %v2989, 7
    %v2991 = vsub.s32 %v2988, %v2990
    %v2992 = vrot.slane %v2984, %v2991
    %v2994 = vunpack.c.l.s4 1934713408
    %v2995 = vunpack.c.0.s8 %v2994
    %v2996 = vlaneseq
    %v2997 = vshrl.u32 %v2996, 7
    %v2998 = vsub.s32 %v2995, %v2997
    %v2999 = vrot.slane %v2985, %v2998
    %v3000 = vcombine.low %v2975, %v2983
    %v3001 = vcombine.high %v2975, %v2983
    %v3003 = vunpack.c.l.s4 1934713408
    %v3004 = vunpack.c.0.s8 %v3003
    %v3005 = vlaneseq
    %v3006 = vshrl.u32 %v3005, 7
    %v3007 = vsub.s32 %v3004, %v3006
    %v3008 = vrot.slane %v3000, %v3007
    %v3010 = vunpack.c.l.s4 1934713408
    %v3011 = vunpack.c.0.s8 %v3010
    %v3012 = vlaneseq
    %v3013 = vshrl.u32 %v3012, 7
    %v3014 = vsub.s32 %v3011, %v3013
    %v3015 = vrot.slane %v3001, %v3014
    %v3016 = vcombine.low %v2992, %v3008
    %v3017 = vcombine.high %v2992, %v3008
    %v3018 = vcombine.low %v2999, %v3015
    %v3019 = vcombine.high %v2999, %v3015
    %v3020 = vcombine.low %v2788, %v2795
    %v3022 = vunpack.c.l.s4 1983009808
    %v3023 = vunpack.c.0.s8 %v3022
    %v3024 = vlaneseq
    %v3025 = vshrl.u32 %v3024, 7
    %v3026 = vsub.s32 %v3023, %v3025
    %v3027 = vrot.slane %v3020, %v3026
    %v3028 = vcombine.low %v2812, %v2813
    %v3030 = vunpack.c.l.s4 1983009808
    %v3031 = vunpack.c.0.s8 %v3030
    %v3032 = vlaneseq
    %v3033 = vshrl.u32 %v3032, 7
    %v3034 = vsub.s32 %v3031, %v3033
    %v3035 = vrot.slane %v3028, %v3034
    %v3036 = vcombine.low %v2804, %v2811
    %v3038 = vunpack.c.l.s4 1983009808
    %v3039 = vunpack.c.0.s8 %v3038
    %v3040 = vlaneseq
    %v3041 = vshrl.u32 %v3040, 7
    %v3042 = vsub.s32 %v3039, %v3041
    %v3043 = vrot.slane %v3036, %v3042
    %v3044 = vcombine.low %v2814, %v2815
    %v3046 = vunpack.c.l.s4 1983009808
    %v3047 = vunpack.c.0.s8 %v3046
    %v3048 = vlaneseq
    %v3049 = vshrl.u32 %v3048, 7
    %v3050 = vsub.s32 %v3047, %v3049
    %v3051 = vrot.slane %v3044, %v3050
    %v3052 = vcombine.low %v3027, %v3035
    %v3053 = vcombine.high %v3027, %v3035
    %v3055 = vunpack.c.l.s4 1934713408
    %v3056 = vunpack.c.0.s8 %v3055
    %v3057 = vlaneseq
    %v3058 = vshrl.u32 %v3057, 7
    %v3059 = vsub.s32 %v3056, %v3058
    %v3060 = vrot.slane %v3052, %v3059
    %v3062 = vunpack.c.l.s4 1934713408
    %v3063 = vunpack.c.0.s8 %v3062
    %v3064 = vlaneseq
    %v3065 = vshrl.u32 %v3064, 7
    %v3066 = vsub.s32 %v3063, %v3065
    %v3067 = vrot.slane %v3053, %v3066
    %v3068 = vcombine.low %v3043, %v3051
    %v3069 = vcombine.high %v3043, %v3051
    %v3071 = vunpack.c.l.s4 1934713408
    %v3072 = vunpack.c.0.s8 %v3071
    %v3073 = vlaneseq
    %v3074 = vshrl.u32 %v3073, 7
    %v3075 = vsub.s32 %v3072, %v3074
    %v3076 = vrot.slane %v3068, %v3075
    %v3078 = vunpack.c.l.s4 1934713408
    %v3079 = vunpack.c.0.s8 %v3078
    %v3080 = vlaneseq
    %v3081 = vshrl.u32 %v3080, 7
    %v3082 = vsub.s32 %v3079, %v3081
    %v3083 = vrot.slane %v3069, %v3082
    %v3084 = vcombine.low %v3060, %v3076
    %v3085 = vcombine.high %v3060, %v3076
    %v3086 = vcombine.low %v3067, %v3083
    %v3087 = vcombine.high %v3067, %v3083
    %3092 = vrot.lane.b32.xlu0 %v2881, 32
    %v3093 = vpop.permute.xlu0 %3092
    %3094 = vrot.lane.b32.xlu0 %v2949, 32
    %v3095 = vpop.permute.xlu0 %3094
    %3096 = vrot.lane.b32.xlu0 %v3017, 32
    %v3097 = vpop.permute.xlu0 %3096
    %3098 = vrot.lane.b32.xlu0 %v3085, 32
    %v3099 = vpop.permute.xlu0 %3098
    %3108 = vrot.lane.b32.xlu0 %v2882, 64
    %v3109 = vpop.permute.xlu0 %3108
    %3110 = vrot.lane.b32.xlu0 %v2950, 64
    %v3111 = vpop.permute.xlu0 %3110
    %3112 = vrot.lane.b32.xlu0 %v3018, 64
    %v3113 = vpop.permute.xlu0 %3112
    %3114 = vrot.lane.b32.xlu0 %v3086, 64
    %v3115 = vpop.permute.xlu0 %3114
    %3124 = vrot.lane.b32.xlu0 %v2883, 96
    %v3125 = vpop.permute.xlu0 %3124
    %3126 = vrot.lane.b32.xlu0 %v2951, 96
    %v3127 = vpop.permute.xlu0 %3126
    %3128 = vrot.lane.b32.xlu0 %v3019, 96
    %v3129 = vpop.permute.xlu0 %3128
    %3130 = vrot.lane.b32.xlu0 %v3087, 96
    %v3131 = vpop.permute.xlu0 %3130
    %v3136 = vsel %vm1605, %v2880, %v3093
    %v3137 = vsel %vm1605, %v2948, %v3095
    %v3138 = vsel %vm1605, %v3016, %v3097
    %v3139 = vsel %vm1605, %v3084, %v3099
    %vm3140 = vcmask 523264
    %v3141 = vsel %vm3140, %v3136, %v3109
    %v3142 = vsel %vm3140, %v3137, %v3111
    %v3143 = vsel %vm3140, %v3138, %v3113
    %v3144 = vsel %vm3140, %v3139, %v3115
    %vm3145 = vcmask 785408
    %v3146 = vsel %vm3145, %v3141, %v3125
    %v3147 = vsel %vm3145, %v3142, %v3127
    %v3148 = vsel %vm3145, %v3143, %v3129
    %v3149 = vsel %vm3145, %v3144, %v3131
    %v3150 = vpack.c.bf16 %v3147, %v3146
    %v3151 = vpack.c.bf16 %v3149, %v3148
    %v3152 = vld [vmem:[#allocation10] sm:$0xf]
    %v3153 = vld [vmem:[#allocation10 + $0x4] sm:$0xf]
    %v3154 = vld [vmem:[#allocation10 + $0x8] sm:$0xf]
    %v3155 = vld [vmem:[#allocation10 + $0xc] sm:$0xf]
    %v3156 = vld [vmem:[#allocation10 + $0x10] sm:$0xf]
    %v3157 = vld [vmem:[#allocation10 + $0x14] sm:$0xf]
    %v3158 = vld [vmem:[#allocation10 + $0x18] sm:$0xf]
    %v3159 = vld [vmem:[#allocation10 + $0x1c] sm:$0xf]
    %v3160 = vld [vmem:[#allocation10 + $0x20] sm:$0xf]
    %v3161 = vld [vmem:[#allocation10 + $0x24] sm:$0xf]
    %v3162 = vld [vmem:[#allocation10 + $0x28] sm:$0xf]
    %v3163 = vld [vmem:[#allocation10 + $0x2c] sm:$0xf]
    %v3164 = vld [vmem:[#allocation10 + $0x30] sm:$0xf]
    %v3165 = vld [vmem:[#allocation10 + $0x34] sm:$0xf]
    %v3166 = vld [vmem:[#allocation10 + $0x38] sm:$0xf]
    %v3167 = vld [vmem:[#allocation10 + $0x3c] sm:$0xf]
    %v3168 = vlaneseq
    %v3169 = vshrl.u32 %v3168, 7
    %v3170 = vsub.s32 1, %v3169
    %v3171 = vrot.slane %v147, %v3170
    %v3188 = vunpack.c.l.b16 %v3152
    %v3189 = vunpack.c.l.b16 %v3153
    %v3190 = vunpack.c.l.b16 %v3154
    %v3191 = vunpack.c.l.b16 %v3155
    %v3192 = vunpack.c.l.b16 %v3156
    %v3193 = vunpack.c.l.b16 %v3157
    %v3194 = vunpack.c.l.b16 %v3158
    %v3195 = vunpack.c.l.b16 %v3159
    %v3196 = vunpack.c.l.b16 %v3160
    %v3197 = vunpack.c.l.b16 %v3161
    %v3198 = vunpack.c.l.b16 %v3162
    %v3199 = vunpack.c.l.b16 %v3163
    %v3200 = vunpack.c.l.b16 %v3164
    %v3201 = vunpack.c.l.b16 %v3165
    %v3202 = vunpack.c.l.b16 %v3166
    %v3203 = vunpack.c.l.b16 %v3167
    %v3204 = vpack.c.b16 %v3189, %v3188
    %v3205 = vpack.c.b16 %v3191, %v3190
    %v3206 = vpack.c.b16 %v3193, %v3192
    %v3207 = vpack.c.b16 %v3195, %v3194
    %v3208 = vpack.c.b16 %v3197, %v3196
    %v3209 = vpack.c.b16 %v3199, %v3198
    %v3210 = vpack.c.b16 %v3201, %v3200
    %v3211 = vpack.c.b16 %v3203, %v3202
    %3220 = vmatprep.subr.bf16.mxu0 0
    %3221 = vmatpush1.bf16.msra.mxu0 %v3211
    %3222 = vmatprep.subr.bf16.mxu0 0
    %3223 = vmatpush1.bf16.msra.mxu0 %v3210
    %3224 = vmatprep.subr.bf16.mxu0 0
    %3225 = vmatpush1.bf16.msra.mxu0 %v3209
    %3226 = vmatprep.subr.bf16.mxu0 0
    %3227 = vmatpush1.bf16.msra.mxu0 %v3208
    %3228 = vmatprep.subr.bf16.mxu0 0
    %3229 = vmatpush1.bf16.msra.mxu0 %v3207
    %3230 = vmatprep.subr.bf16.mxu0 0
    %3231 = vmatpush1.bf16.msra.mxu0 %v3206
    %3232 = vmatprep.subr.bf16.mxu0 0
    %3233 = vmatpush1.bf16.msra.mxu0 %v3205
    %3234 = vmatprep.subr.bf16.mxu0 0
    %3235 = vmatpush1.bf16.msra.mxu0 %v3204
    %3236 = vmatprep.subr.bf16.mxu0 0
    %3237 = vmatpush2.bf16.msra.mxu0 0
    %3238 = vmatprep.subr.bf16.mxu0 0
    %3239 = vmatpush2.bf16.msra.mxu0 0
    %3240 = vmatprep.subr.bf16.mxu0 0
    %3241 = vmatpush2.bf16.msra.mxu0 0
    %3242 = vmatprep.subr.bf16.mxu0 0
    %3243 = vmatpush2.bf16.msra.mxu0 0
    %3244 = vmatprep.subr.bf16.mxu0 0
    %3245 = vmatpush2.bf16.msra.mxu0 0
    %3246 = vmatprep.subr.bf16.mxu0 0
    %3247 = vmatpush2.bf16.msra.mxu0 0
    %3248 = vmatprep.subr.bf16.mxu0 0
    %3249 = vmatpush2.bf16.msra.mxu0 0
    %3250 = vmatprep.subr.bf16.mxu0 0
    %3251 = vmatpush2.bf16.msra.mxu0 0
    %3252 = vmatprep.mubr.bf16.mxu0 0
    %3253 = vmatmul.mubr.bf16.gmra.mxu0 %v3150
    %v3254 = vpop.f32.mrf.mxu0
    %v3255 = vadd.f32 %v3171, %v3254
    %v3256 = vpop.f32.mrf.mxu0
    %v3257 = vpop.f32.mrf.mxu0
    %v3258 = vadd.f32 %v3171, %v3257
    %v3259 = vpop.f32.mrf.mxu0
    %3260 = vmatprep.mubr.bf16.mxu0 0
    %3261 = vmatmul.mubr.bf16.gmra.mxu0 %v3151
    %v3262 = vpop.f32.mrf.mxu0
    %v3263 = vadd.f32 %v3171, %v3262
    %v3264 = vpop.f32.mrf.mxu0
    %v3265 = vpop.f32.mrf.mxu0
    %v3266 = vadd.f32 %v3171, %v3265
    %v3267 = vpop.f32.mrf.mxu0
    %3268 = vdwg.mxu0
    %v3269 = vpack.c.bf16 %v3258, %v3255
    %v3270 = vpack.c.bf16 %v3266, %v3263
    %v3271 = vld [vmem:[#allocation11] sm:$0xff]
    %v3272 = vld [vmem:[#allocation11 + $0x8] sm:$0xff]
    %v3273 = vld [vmem:[#allocation11 + $0x10] sm:$0xff]
    %v3274 = vld [vmem:[#allocation11 + $0x18] sm:$0xff]
    %v3275 = vld [vmem:[#allocation11 + $0x20] sm:$0xff]
    %v3276 = vld [vmem:[#allocation11 + $0x28] sm:$0xff]
    %v3277 = vld [vmem:[#allocation11 + $0x30] sm:$0xff]
    %v3278 = vld [vmem:[#allocation11 + $0x38] sm:$0xff]
    %v3279 = vld [vmem:[#allocation11 + $0x40] sm:$0xff]
    %v3280 = vld [vmem:[#allocation11 + $0x48] sm:$0xff]
    %v3281 = vld [vmem:[#allocation11 + $0x50] sm:$0xff]
    %v3282 = vld [vmem:[#allocation11 + $0x58] sm:$0xff]
    %v3283 = vld [vmem:[#allocation11 + $0x60] sm:$0xff]
    %v3284 = vld [vmem:[#allocation11 + $0x68] sm:$0xff]
    %v3285 = vld [vmem:[#allocation11 + $0x70] sm:$0xff]
    %v3286 = vld [vmem:[#allocation11 + $0x78] sm:$0xff]
    %v3287 = vld [vmem:[#allocation11 + $0x80] sm:$0xff]
    %v3288 = vld [vmem:[#allocation11 + $0x88] sm:$0xff]
    %v3289 = vld [vmem:[#allocation11 + $0x90] sm:$0xff]
    %v3290 = vld [vmem:[#allocation11 + $0x98] sm:$0xff]
    %v3291 = vld [vmem:[#allocation11 + $0xa0] sm:$0xff]
    %v3292 = vld [vmem:[#allocation11 + $0xa8] sm:$0xff]
    %v3293 = vld [vmem:[#allocation11 + $0xb0] sm:$0xff]
    %v3294 = vld [vmem:[#allocation11 + $0xb8] sm:$0xff]
    %v3295 = vld [vmem:[#allocation11 + $0xc0] sm:$0xff]
    %v3296 = vld [vmem:[#allocation11 + $0xc8] sm:$0xff]
    %v3297 = vld [vmem:[#allocation11 + $0xd0] sm:$0xff]
    %v3298 = vld [vmem:[#allocation11 + $0xd8] sm:$0xff]
    %v3299 = vld [vmem:[#allocation11 + $0xe0] sm:$0xff]
    %v3300 = vld [vmem:[#allocation11 + $0xe8] sm:$0xff]
    %v3301 = vld [vmem:[#allocation11 + $0xf0] sm:$0xff]
    %v3302 = vld [vmem:[#allocation11 + $0xf8] sm:$0xff]
    %v3303 = vlaneseq
    %v3304 = vshrl.u32 %v3303, 7
    %v3305 = vsub.s32 3, %v3304
    %v3306 = vrot.slane %v147, %v3305
    %v3307 = vlaneseq
    %v3308 = vshrl.u32 %v3307, 7
    %v3309 = vsub.s32 3, %v3308
    %v3310 = vrot.slane %v148, %v3309
    %v3343 = vunpack.c.l.b16 %v3271
    %v3344 = vunpack.c.h.b16 %v3271
    %v3345 = vunpack.c.l.b16 %v3272
    %v3346 = vunpack.c.h.b16 %v3272
    %v3347 = vunpack.c.l.b16 %v3273
    %v3348 = vunpack.c.h.b16 %v3273
    %v3349 = vunpack.c.l.b16 %v3274
    %v3350 = vunpack.c.h.b16 %v3274
    %v3351 = vunpack.c.l.b16 %v3275
    %v3352 = vunpack.c.h.b16 %v3275
    %v3353 = vunpack.c.l.b16 %v3276
    %v3354 = vunpack.c.h.b16 %v3276
    %v3355 = vunpack.c.l.b16 %v3277
    %v3356 = vunpack.c.h.b16 %v3277
    %v3357 = vunpack.c.l.b16 %v3278
    %v3358 = vunpack.c.h.b16 %v3278
    %v3359 = vunpack.c.l.b16 %v3279
    %v3360 = vunpack.c.h.b16 %v3279
    %v3361 = vunpack.c.l.b16 %v3280
    %v3362 = vunpack.c.h.b16 %v3280
    %v3363 = vunpack.c.l.b16 %v3281
    %v3364 = vunpack.c.h.b16 %v3281
    %v3365 = vunpack.c.l.b16 %v3282
    %v3366 = vunpack.c.h.b16 %v3282
    %v3367 = vunpack.c.l.b16 %v3283
    %v3368 = vunpack.c.h.b16 %v3283
    %v3369 = vunpack.c.l.b16 %v3284
    %v3370 = vunpack.c.h.b16 %v3284
    %v3371 = vunpack.c.l.b16 %v3285
    %v3372 = vunpack.c.h.b16 %v3285
    %v3373 = vunpack.c.l.b16 %v3286
    %v3374 = vunpack.c.h.b16 %v3286
    %v3375 = vunpack.c.l.b16 %v3287
    %v3376 = vunpack.c.h.b16 %v3287
    %v3377 = vunpack.c.l.b16 %v3288
    %v3378 = vunpack.c.h.b16 %v3288
    %v3379 = vunpack.c.l.b16 %v3289
    %v3380 = vunpack.c.h.b16 %v3289
    %v3381 = vunpack.c.l.b16 %v3290
    %v3382 = vunpack.c.h.b16 %v3290
    %v3383 = vunpack.c.l.b16 %v3291
    %v3384 = vunpack.c.h.b16 %v3291
    %v3385 = vunpack.c.l.b16 %v3292
    %v3386 = vunpack.c.h.b16 %v3292
    %v3387 = vunpack.c.l.b16 %v3293
    %v3388 = vunpack.c.h.b16 %v3293
    %v3389 = vunpack.c.l.b16 %v3294
    %v3390 = vunpack.c.h.b16 %v3294
    %v3391 = vunpack.c.l.b16 %v3295
    %v3392 = vunpack.c.h.b16 %v3295
    %v3393 = vunpack.c.l.b16 %v3296
    %v3394 = vunpack.c.h.b16 %v3296
    %v3395 = vunpack.c.l.b16 %v3297
    %v3396 = vunpack.c.h.b16 %v3297
    %v3397 = vunpack.c.l.b16 %v3298
    %v3398 = vunpack.c.h.b16 %v3298
    %v3399 = vunpack.c.l.b16 %v3299
    %v3400 = vunpack.c.h.b16 %v3299
    %v3401 = vunpack.c.l.b16 %v3300
    %v3402 = vunpack.c.h.b16 %v3300
    %v3403 = vunpack.c.l.b16 %v3301
    %v3404 = vunpack.c.h.b16 %v3301
    %v3405 = vunpack.c.l.b16 %v3302
    %v3406 = vunpack.c.h.b16 %v3302
    %v3407 = vpack.c.b16 %v3345, %v3343
    %v3408 = vpack.c.b16 %v3346, %v3344
    %v3409 = vpack.c.b16 %v3349, %v3347
    %v3410 = vpack.c.b16 %v3350, %v3348
    %v3411 = vpack.c.b16 %v3353, %v3351
    %v3412 = vpack.c.b16 %v3354, %v3352
    %v3413 = vpack.c.b16 %v3357, %v3355
    %v3414 = vpack.c.b16 %v3358, %v3356
    %v3415 = vpack.c.b16 %v3361, %v3359
    %v3416 = vpack.c.b16 %v3362, %v3360
    %v3417 = vpack.c.b16 %v3365, %v3363
    %v3418 = vpack.c.b16 %v3366, %v3364
    %v3419 = vpack.c.b16 %v3369, %v3367
    %v3420 = vpack.c.b16 %v3370, %v3368
    %v3421 = vpack.c.b16 %v3373, %v3371
    %v3422 = vpack.c.b16 %v3374, %v3372
    %v3423 = vpack.c.b16 %v3377, %v3375
    %v3424 = vpack.c.b16 %v3378, %v3376
    %v3425 = vpack.c.b16 %v3381, %v3379
    %v3426 = vpack.c.b16 %v3382, %v3380
    %v3427 = vpack.c.b16 %v3385, %v3383
    %v3428 = vpack.c.b16 %v3386, %v3384
    %v3429 = vpack.c.b16 %v3389, %v3387
    %v3430 = vpack.c.b16 %v3390, %v3388
    %v3431 = vpack.c.b16 %v3393, %v3391
    %v3432 = vpack.c.b16 %v3394, %v3392
    %v3433 = vpack.c.b16 %v3397, %v3395
    %v3434 = vpack.c.b16 %v3398, %v3396
    %v3435 = vpack.c.b16 %v3401, %v3399
    %v3436 = vpack.c.b16 %v3402, %v3400
    %v3437 = vpack.c.b16 %v3405, %v3403
    %v3438 = vpack.c.b16 %v3406, %v3404
    %3471 = vmatprep.subr.bf16.mxu0 %v3422
    %3472 = vmatpush1.bf16.msra.mxu0 %v3421
    %3473 = vmatprep.subr.bf16.mxu0 %v3420
    %3474 = vmatpush1.bf16.msra.mxu0 %v3419
    %3475 = vmatprep.subr.bf16.mxu0 %v3418
    %3476 = vmatpush1.bf16.msra.mxu0 %v3417
    %3477 = vmatprep.subr.bf16.mxu0 %v3416
    %3478 = vmatpush1.bf16.msra.mxu0 %v3415
    %3479 = vmatprep.subr.bf16.mxu0 %v3414
    %3480 = vmatpush1.bf16.msra.mxu0 %v3413
    %3481 = vmatprep.subr.bf16.mxu0 %v3412
    %3482 = vmatpush1.bf16.msra.mxu0 %v3411
    %3483 = vmatprep.subr.bf16.mxu0 %v3410
    %3484 = vmatpush1.bf16.msra.mxu0 %v3409
    %3485 = vmatprep.subr.bf16.mxu0 %v3408
    %3486 = vmatpush1.bf16.msra.mxu0 %v3407
    %3487 = vmatprep.subr.bf16.mxu0 %v3438
    %3488 = vmatpush2.bf16.msra.mxu0 %v3437
    %3489 = vmatprep.subr.bf16.mxu0 %v3436
    %3490 = vmatpush2.bf16.msra.mxu0 %v3435
    %3491 = vmatprep.subr.bf16.mxu0 %v3434
    %3492 = vmatpush2.bf16.msra.mxu0 %v3433
    %3493 = vmatprep.subr.bf16.mxu0 %v3432
    %3494 = vmatpush2.bf16.msra.mxu0 %v3431
    %3495 = vmatprep.subr.bf16.mxu0 %v3430
    %3496 = vmatpush2.bf16.msra.mxu0 %v3429
    %3497 = vmatprep.subr.bf16.mxu0 %v3428
    %3498 = vmatpush2.bf16.msra.mxu0 %v3427
    %3499 = vmatprep.subr.bf16.mxu0 %v3426
    %3500 = vmatpush2.bf16.msra.mxu0 %v3425
    %3501 = vmatprep.subr.bf16.mxu0 %v3424
    %3502 = vmatpush2.bf16.msra.mxu0 %v3423
    %3503 = vmatprep.mubr.bf16.mxu0 %v3269
    %3504 = vmatmul.mubr.bf16.gmra.mxu0 %v144
    %v3505 = vpop.f32.mrf.mxu0
    %v3506 = vadd.f32 %v3306, %v3505
    %v3507 = vpop.f32.mrf.mxu0
    %v3508 = vadd.f32 %v3310, %v3507
    %v3509 = vpop.f32.mrf.mxu0
    %v3510 = vadd.f32 %v3306, %v3509
    %v3511 = vpop.f32.mrf.mxu0
    %v3512 = vadd.f32 %v3310, %v3511
    %3513 = vmatprep.mubr.bf16.mxu0 %v3270
    %3514 = vmatmul.mubr.bf16.gmra.mxu0 %v145
    %v3515 = vpop.f32.mrf.mxu0
    %v3516 = vadd.f32 %v3306, %v3515
    %v3517 = vpop.f32.mrf.mxu0
    %v3518 = vadd.f32 %v3310, %v3517
    %v3519 = vpop.f32.mrf.mxu0
    %v3520 = vadd.f32 %v3306, %v3519
    %v3521 = vpop.f32.mrf.mxu0
    %v3522 = vadd.f32 %v3310, %v3521
    %3523 = vdwg.mxu0
    %v3524 = vadd.f32 %v3506, %v3510
    %v3525 = vrot.slane %v3524, 4
    %v3526 = vadd.f32 %v3524, %v3525
    %v3527 = vrot.slane %v3526, 2
    %v3528 = vadd.f32 %v3526, %v3527
    %v3529 = vrot.slane %v3528, 1
    %v3530 = vadd.f32 %v3528, %v3529
    %v3531 = vadd.f32 %v3508, %v3512
    %v3532 = vrot.slane %v3531, 4
    %v3533 = vadd.f32 %v3531, %v3532
    %v3534 = vrot.slane %v3533, 2
    %v3535 = vadd.f32 %v3533, %v3534
    %v3536 = vrot.slane %v3535, 1
    %v3537 = vadd.f32 %v3535, %v3536
    %v3538 = vadd.f32 %v3516, %v3520
    %v3539 = vrot.slane %v3538, 4
    %v3540 = vadd.f32 %v3538, %v3539
    %v3541 = vrot.slane %v3540, 2
    %v3542 = vadd.f32 %v3540, %v3541
    %v3543 = vrot.slane %v3542, 1
    %v3544 = vadd.f32 %v3542, %v3543
    %v3545 = vadd.f32 %v3518, %v3522
    %v3546 = vrot.slane %v3545, 4
    %v3547 = vadd.f32 %v3545, %v3546
    %v3548 = vrot.slane %v3547, 2
    %v3549 = vadd.f32 %v3547, %v3548
    %v3550 = vrot.slane %v3549, 1
    %v3551 = vadd.f32 %v3549, %v3550
    %v3552 = vrcp.pop 16.0
    %v3553 = vmul.f32 %v3530, %v3552
    %v3554 = vmul.f32 %v3537, %v3552
    %v3555 = vmul.f32 %v3544, %v3552
    %v3556 = vmul.f32 %v3551, %v3552
    %v3557 = vsub.f32 %v3506, %v3553
    %v3558 = vsub.f32 %v3508, %v3554
    %v3559 = vsub.f32 %v3510, %v3553
    %v3560 = vsub.f32 %v3512, %v3554
    %v3561 = vsub.f32 %v3516, %v3555
    %v3562 = vsub.f32 %v3518, %v3556
    %v3563 = vsub.f32 %v3520, %v3555
    %v3564 = vsub.f32 %v3522, %v3556
    %v3565 = vmul.f32 %v3557, %v3557
    %v3566 = vmul.f32 %v3558, %v3558
    %v3567 = vmul.f32 %v3559, %v3559
    %v3568 = vmul.f32 %v3560, %v3560
    %v3569 = vmul.f32 %v3561, %v3561
    %v3570 = vmul.f32 %v3562, %v3562
    %v3571 = vmul.f32 %v3563, %v3563
    %v3572 = vmul.f32 %v3564, %v3564
    %v3573 = vadd.f32 %v3565, %v3567
    %v3574 = vrot.slane %v3573, 4
    %v3575 = vadd.f32 %v3573, %v3574
    %v3576 = vrot.slane %v3575, 2
    %v3577 = vadd.f32 %v3575, %v3576
    %v3578 = vrot.slane %v3577, 1
    %v3579 = vadd.f32 %v3577, %v3578
    %v3580 = vadd.f32 %v3566, %v3568
    %v3581 = vrot.slane %v3580, 4
    %v3582 = vadd.f32 %v3580, %v3581
    %v3583 = vrot.slane %v3582, 2
    %v3584 = vadd.f32 %v3582, %v3583
    %v3585 = vrot.slane %v3584, 1
    %v3586 = vadd.f32 %v3584, %v3585
    %v3587 = vadd.f32 %v3569, %v3571
    %v3588 = vrot.slane %v3587, 4
    %v3589 = vadd.f32 %v3587, %v3588
    %v3590 = vrot.slane %v3589, 2
    %v3591 = vadd.f32 %v3589, %v3590
    %v3592 = vrot.slane %v3591, 1
    %v3593 = vadd.f32 %v3591, %v3592
    %v3594 = vadd.f32 %v3570, %v3572
    %v3595 = vrot.slane %v3594, 4
    %v3596 = vadd.f32 %v3594, %v3595
    %v3597 = vrot.slane %v3596, 2
    %v3598 = vadd.f32 %v3596, %v3597
    %v3599 = vrot.slane %v3598, 1
    %v3600 = vadd.f32 %v3598, %v3599
    %v3601 = vmul.f32 %v3579, %v3552
    %v3602 = vmul.f32 %v3586, %v3552
    %v3603 = vmul.f32 %v3593, %v3552
    %v3604 = vmul.f32 %v3600, %v3552
    %v3605 = vadd.f32 %v3601, 1e-05
    %v3606 = vadd.f32 %v3602, 1e-05
    %v3607 = vadd.f32 %v3603, 1e-05
    %v3608 = vadd.f32 %v3604, 1e-05
    %v3609 = vrsqrt.pop %v3605
    %v3610 = vrsqrt.pop %v3606
    %v3611 = vrsqrt.pop %v3607
    %v3612 = vrsqrt.pop %v3608
    %v3613 = vmul.f32 %v3557, %v3609
    %v3614 = vmul.f32 %v3558, %v3610
    %v3615 = vmul.f32 %v3559, %v3609
    %v3616 = vmul.f32 %v3560, %v3610
    %v3617 = vmul.f32 %v3561, %v3611
    %v3618 = vmul.f32 %v3562, %v3612
    %v3619 = vmul.f32 %v3563, %v3611
    %v3620 = vmul.f32 %v3564, %v3612
    %v3621 = vmax.f32 %v3613, 0.0
    %v3622 = vmax.f32 %v3614, 0.0
    %v3623 = vmax.f32 %v3615, 0.0
    %v3624 = vmax.f32 %v3616, 0.0
    %v3625 = vmax.f32 %v3617, 0.0
    %v3626 = vmax.f32 %v3618, 0.0
    %v3627 = vmax.f32 %v3619, 0.0
    %v3628 = vmax.f32 %v3620, 0.0
    %v3629 = vpack.c.bf16 %v3623, %v3621
    %v3630 = vpack.c.bf16 %v3624, %v3622
    %v3631 = vpack.c.bf16 %v3627, %v3625
    %v3632 = vpack.c.bf16 %v3628, %v3626
    %v3633 = vld [vmem:[#allocation13] sm:$0xf]
    %v3634 = vld [vmem:[#allocation13 + $0x4] sm:$0xf]
    %v3635 = vld [vmem:[#allocation13 + $0x8] sm:$0xf]
    %v3636 = vld [vmem:[#allocation13 + $0xc] sm:$0xf]
    %v3637 = vld [vmem:[#allocation13 + $0x10] sm:$0xf]
    %v3638 = vld [vmem:[#allocation13 + $0x14] sm:$0xf]
    %v3639 = vld [vmem:[#allocation13 + $0x18] sm:$0xf]
    %v3640 = vld [vmem:[#allocation13 + $0x1c] sm:$0xf]
    %v3641 = vld [vmem:[#allocation13 + $0x20] sm:$0xf]
    %v3642 = vld [vmem:[#allocation13 + $0x24] sm:$0xf]
    %v3643 = vld [vmem:[#allocation13 + $0x28] sm:$0xf]
    %v3644 = vld [vmem:[#allocation13 + $0x2c] sm:$0xf]
    %v3645 = vld [vmem:[#allocation13 + $0x30] sm:$0xf]
    %v3646 = vld [vmem:[#allocation13 + $0x34] sm:$0xf]
    %v3647 = vld [vmem:[#allocation13 + $0x38] sm:$0xf]
    %v3648 = vld [vmem:[#allocation13 + $0x3c] sm:$0xf]
    %v3649 = vld [vmem:[#allocation13 + $0x40] sm:$0xf]
    %v3650 = vld [vmem:[#allocation13 + $0x44] sm:$0xf]
    %v3651 = vld [vmem:[#allocation13 + $0x48] sm:$0xf]
    %v3652 = vld [vmem:[#allocation13 + $0x4c] sm:$0xf]
    %v3653 = vld [vmem:[#allocation13 + $0x50] sm:$0xf]
    %v3654 = vld [vmem:[#allocation13 + $0x54] sm:$0xf]
    %v3655 = vld [vmem:[#allocation13 + $0x58] sm:$0xf]
    %v3656 = vld [vmem:[#allocation13 + $0x5c] sm:$0xf]
    %v3657 = vld [vmem:[#allocation13 + $0x60] sm:$0xf]
    %v3658 = vld [vmem:[#allocation13 + $0x64] sm:$0xf]
    %v3659 = vld [vmem:[#allocation13 + $0x68] sm:$0xf]
    %v3660 = vld [vmem:[#allocation13 + $0x6c] sm:$0xf]
    %v3661 = vld [vmem:[#allocation13 + $0x70] sm:$0xf]
    %v3662 = vld [vmem:[#allocation13 + $0x74] sm:$0xf]
    %v3663 = vld [vmem:[#allocation13 + $0x78] sm:$0xf]
    %v3664 = vld [vmem:[#allocation13 + $0x7c] sm:$0xf]
    %v3665 = vlaneseq
    %v3666 = vshrl.u32 %v3665, 7
    %v3667 = vsub.s32 2, %v3666
    %v3668 = vrot.slane %v147, %v3667
    %v3701 = vunpack.c.l.b16 %v3633
    %v3702 = vunpack.c.l.b16 %v3634
    %v3703 = vunpack.c.l.b16 %v3635
    %v3704 = vunpack.c.l.b16 %v3636
    %v3705 = vunpack.c.l.b16 %v3637
    %v3706 = vunpack.c.l.b16 %v3638
    %v3707 = vunpack.c.l.b16 %v3639
    %v3708 = vunpack.c.l.b16 %v3640
    %v3709 = vunpack.c.l.b16 %v3641
    %v3710 = vunpack.c.l.b16 %v3642
    %v3711 = vunpack.c.l.b16 %v3643
    %v3712 = vunpack.c.l.b16 %v3644
    %v3713 = vunpack.c.l.b16 %v3645
    %v3714 = vunpack.c.l.b16 %v3646
    %v3715 = vunpack.c.l.b16 %v3647
    %v3716 = vunpack.c.l.b16 %v3648
    %v3717 = vunpack.c.l.b16 %v3649
    %v3718 = vunpack.c.l.b16 %v3650
    %v3719 = vunpack.c.l.b16 %v3651
    %v3720 = vunpack.c.l.b16 %v3652
    %v3721 = vunpack.c.l.b16 %v3653
    %v3722 = vunpack.c.l.b16 %v3654
    %v3723 = vunpack.c.l.b16 %v3655
    %v3724 = vunpack.c.l.b16 %v3656
    %v3725 = vunpack.c.l.b16 %v3657
    %v3726 = vunpack.c.l.b16 %v3658
    %v3727 = vunpack.c.l.b16 %v3659
    %v3728 = vunpack.c.l.b16 %v3660
    %v3729 = vunpack.c.l.b16 %v3661
    %v3730 = vunpack.c.l.b16 %v3662
    %v3731 = vunpack.c.l.b16 %v3663
    %v3732 = vunpack.c.l.b16 %v3664
    %v3733 = vpack.c.b16 %v3702, %v3701
    %v3734 = vpack.c.b16 %v3704, %v3703
    %v3735 = vpack.c.b16 %v3706, %v3705
    %v3736 = vpack.c.b16 %v3708, %v3707
    %v3737 = vpack.c.b16 %v3710, %v3709
    %v3738 = vpack.c.b16 %v3712, %v3711
    %v3739 = vpack.c.b16 %v3714, %v3713
    %v3740 = vpack.c.b16 %v3716, %v3715
    %v3741 = vpack.c.b16 %v3718, %v3717
    %v3742 = vpack.c.b16 %v3720, %v3719
    %v3743 = vpack.c.b16 %v3722, %v3721
    %v3744 = vpack.c.b16 %v3724, %v3723
    %v3745 = vpack.c.b16 %v3726, %v3725
    %v3746 = vpack.c.b16 %v3728, %v3727
    %v3747 = vpack.c.b16 %v3730, %v3729
    %v3748 = vpack.c.b16 %v3732, %v3731
    %3765 = vmatprep.subr.bf16.mxu0 0
    %3766 = vmatpush1.bf16.msra.mxu0 %v3740
    %3767 = vmatprep.subr.bf16.mxu0 0
    %3768 = vmatpush1.bf16.msra.mxu0 %v3739
    %3769 = vmatprep.subr.bf16.mxu0 0
    %3770 = vmatpush1.bf16.msra.mxu0 %v3738
    %3771 = vmatprep.subr.bf16.mxu0 0
    %3772 = vmatpush1.bf16.msra.mxu0 %v3737
    %3773 = vmatprep.subr.bf16.mxu0 0
    %3774 = vmatpush1.bf16.msra.mxu0 %v3736
    %3775 = vmatprep.subr.bf16.mxu0 0
    %3776 = vmatpush1.bf16.msra.mxu0 %v3735
    %3777 = vmatprep.subr.bf16.mxu0 0
    %3778 = vmatpush1.bf16.msra.mxu0 %v3734
    %3779 = vmatprep.subr.bf16.mxu0 0
    %3780 = vmatpush1.bf16.msra.mxu0 %v3733
    %3781 = vmatprep.subr.bf16.mxu0 0
    %3782 = vmatpush2.bf16.msra.mxu0 %v3748
    %3783 = vmatprep.subr.bf16.mxu0 0
    %3784 = vmatpush2.bf16.msra.mxu0 %v3747
    %3785 = vmatprep.subr.bf16.mxu0 0
    %3786 = vmatpush2.bf16.msra.mxu0 %v3746
    %3787 = vmatprep.subr.bf16.mxu0 0
    %3788 = vmatpush2.bf16.msra.mxu0 %v3745
    %3789 = vmatprep.subr.bf16.mxu0 0
    %3790 = vmatpush2.bf16.msra.mxu0 %v3744
    %3791 = vmatprep.subr.bf16.mxu0 0
    %3792 = vmatpush2.bf16.msra.mxu0 %v3743
    %3793 = vmatprep.subr.bf16.mxu0 0
    %3794 = vmatpush2.bf16.msra.mxu0 %v3742
    %3795 = vmatprep.subr.bf16.mxu0 0
    %3796 = vmatpush2.bf16.msra.mxu0 %v3741
    %3797 = vmatprep.mubr.bf16.mxu0 %v3630
    %3798 = vmatmul.mubr.bf16.gmra.mxu0 %v3629
    %v3799 = vpop.f32.mrf.mxu0
    %v3800 = vadd.f32 %v3668, %v3799
    %v3801 = vpop.f32.mrf.mxu0
    %v3802 = vpop.f32.mrf.mxu0
    %v3803 = vadd.f32 %v3668, %v3802
    %v3804 = vpop.f32.mrf.mxu0
    %3805 = vmatprep.mubr.bf16.mxu0 %v3632
    %3806 = vmatmul.mubr.bf16.gmra.mxu0 %v3631
    %v3807 = vpop.f32.mrf.mxu0
    %v3808 = vadd.f32 %v3668, %v3807
    %v3809 = vpop.f32.mrf.mxu0
    %v3810 = vpop.f32.mrf.mxu0
    %v3811 = vadd.f32 %v3668, %v3810
    %v3812 = vpop.f32.mrf.mxu0
    %3813 = vdwg.mxu0
    %v3814 = vadd.f32 %v3800, %v138
    %v3815 = vadd.f32 %v3803, %v139
    %v3816 = vadd.f32 %v3808, %v140
    %v3817 = vadd.f32 %v3811, %v141
    %3818 = vst [vmem:[#allocation16] sm:$0xff] %v3814
    %3819 = vst [vmem:[#allocation16 + $0x8] sm:$0xff] %v3815
    %3820 = vst [vmem:[#allocation16 + $0x10] sm:$0xff] %v3816
    %3821 = vst [vmem:[#allocation16 + $0x18] sm:$0xff] %v3817
    // Predicated region
    $region66: #{tpu_custom_call.1} parent=1 // pred_check
      _
    $region67: #{tpu_custom_call.1} parent=1 // pred_check_branch
      %3823 = sbr.rel (0) target = $region69
    $region68: #{tpu_custom_call.1} parent=1 // pred_region
      %s3825 = ssub.s32 512, 512
      %3826 = vsyncadd [#allocation4], %s3825
      %s3827 = sshll.u32 [#allocation16], 4
      %s3828 = int_to_ptr.vmem [resolvable:$true] %s3827
      %3833 = dma.vmem_to_hbm [thread:$0]  %s3828, 512, %s8, [#allocation4], 128, 128, 8
    $region69: #{tpu_custom_call.1} parent=1 // pred_fallthru
      _
    // Predicated region
    $region70: #{tpu_custom_call.1} parent=1 // pred_check
      _
    $region71: #{tpu_custom_call.1} parent=1 // pred_check_branch
      %3835 = sbr.rel (0) target = $region73
    $region72: #{tpu_custom_call.1} parent=1 // pred_region
      %3836 = dma.done [#allocation4], 512
    $region73: #{tpu_custom_call.1} parent=1 // pred_fallthru
      _
    %3837 = vsyncpa [#allocation3], 1
    %3838 = vsyncpa [#allocation6], 1
    %3839 = vsyncpa [#allocation9], 1
    %3840 = vsyncpa [#allocation12], 1
    %3841 = vsyncpa [#allocation15], 1
    %3842 = vsyncpa [#allocation4], 1

</llo_original>
